<compile_context>
chip_gen: v5e
topology: v5e:2x2
jax: 0.10.0
libtpu: 0.0.40
codegen_flags: <defaults>
</compile_context>

<pallas_src>
import math
import functools

import jax
import jax.numpy as jnp
from jax.experimental import pallas as pl
from jax.experimental.pallas import tpu as pltpu

# ----------------------------- config ---------------------------------------
CONFIG = dict(
    vocab_size=100,
    d_model=32,
    decoder_layers=2,
    decoder_attention_heads=4,
    decoder_ffn_dim=64,
    max_position_embeddings=64,
    pad_token_id=1,
    scale_embedding=True,
    dropout=0.1,            # unused: training=False
    decoder_layerdrop=0.0,  # unused: training=False
    use_cache=False,
)
PRE_DECISION_RATIO = 2
_COMPUTE_DTYPE = jnp.bfloat16   # MXU operand dtype; accumulation is always f32


# ----------------------------- fused Pallas kernel ---------------------------
def _decoder_stack_kernel(h0_ref, enc_ref, pooled_ref, dmask_ref, emask_ref,
                          w_qkv_ref, b_qkv_ref, w_so_ref, b_so_ref,
                          w_cq_ref, b_cq_ref, w_ckv_ref, b_ckv_ref,
                          w_co_ref, b_co_ref, w_f1_ref, b_f1_ref,
                          w_f2_ref, b_f2_ref, ln_ref,
                          out_h_ref, out_p_ref,
                          *, Bc, T, S, Sp, D, H, L, scale):
    """Whole L-layer monotonic decoder stack for Bc batches (one grid step)."""
    f32 = jnp.float32
    cdt = _COMPUTE_DTYPE
    DH = D // H
    HB = H * Bc
    NEG = float(jnp.finfo(jnp.float32).min)

    # ---- additive masks: built once, where-combined (no -inf intermediates) --
    rows = jax.lax.broadcasted_iota(jnp.int32, (T, T), 0)
    cols = jax.lax.broadcasted_iota(jnp.int32, (T, T), 1)
    causal_ok = cols <= rows                                    # (T, T)
    dec_ok = dmask_ref[...] > 0.5                               # (Bc, 1, T) key validity
    self_ok = jnp.logical_and(causal_ok[None, :, :], dec_ok)    # (Bc, T, T)
    self_mask = jnp.where(self_ok, 0.0, NEG).astype(f32)
    self_mask = jnp.broadcast_to(self_mask[None], (H, Bc, T, T)).reshape(HB, T, T)
    enc_ok = emask_ref[...] > 0.5                               # (Bc, 1, S)
    cross_mask = jnp.where(enc_ok, 0.0, NEG).astype(f32)
    cross_mask = jnp.broadcast_to(cross_mask[None], (H, Bc, T, S)).reshape(HB, T, S)

    def split_heads(x, Lx):
        # (Bc*Lx, D) f32 -> (H*Bc, Lx, DH) compute-dtype, rows ordered (h, b)
        xc = x.astype(cdt)
        parts = [xc[:, hh * DH:(hh + 1) * DH].reshape(1, Bc, Lx, DH) for hh in range(H)]
        return jnp.concatenate(parts, axis=0).reshape(HB, Lx, DH)

    def merge_heads(x, Lq):
        # (H*Bc, Lq, DH) f32 -> (Bc*Lq, D) f32, head-major lanes
        x3 = x.reshape(H, Bc * Lq, DH)
        return jnp.concatenate([x3[hh] for hh in range(H)], axis=-1)

    def attend(qh, kh, vh, mask, Lq):
        # qh: (HB, Lq, DH), kh/vh: (HB, Lk, DH), mask: (HB, Lq, Lk) additive f32.
        # Single all-heads batched einsum + single softmax chain.
        s = jnp.einsum('bqd,bkd->bqk', qh, kh, preferred_element_type=f32) + mask
        s = s - jnp.max(s, axis=-1, keepdims=True)
        p = jnp.exp(s)
        p = p / jnp.sum(p, axis=-1, keepdims=True)        # exact division (parity)
        ctx = jnp.einsum('bqk,bkd->bqd', p.astype(cdt), vh, preferred_element_type=f32)
        return merge_heads(ctx, Lq)

    def layer_norm(x, g, b):
        mu = jnp.mean(x, axis=-1, keepdims=True)
        xc = x - mu
        var = jnp.mean(xc * xc, axis=-1, keepdims=True)
        return xc * jax.lax.rsqrt(var + 1e-5) * g + b

    h = h0_ref[...].astype(f32)                           # (Bc*T, D)

    # ---- layer-invariant cross K|V (+ pooled K) projections, hoisted ---------
    w_ckv = w_ckv_ref[...]                                # (D, L*2D) bf16
    b_ckv = b_ckv_ref[...]                                # (1, L*2D) f32
    ekv = jnp.dot(enc_ref[...].astype(cdt), w_ckv, preferred_element_type=f32) + b_ckv
    pkv = jnp.dot(pooled_ref[...].astype(cdt), w_ckv, preferred_element_type=f32) + b_ckv
    # ekv: (Bc*S, L*2D)   pkv: (Bc*Sp, L*2D)

    for l in range(L):                                    # static unroll over layers
        lnp = ln_ref[l]                                   # (6, D) f32
        base = l * 2 * D

        # ---- self attention (fused QKV matmul, all-heads batched) -----------
        residual = h
        qkv = jnp.dot(h.astype(cdt), w_qkv_ref[l], preferred_element_type=f32) + b_qkv_ref[l]
        q = qkv[:, 0:D] * scale                           # scale folded into Q once
        a = attend(split_heads(q, T),
                   split_heads(qkv[:, D:2 * D], T),
                   split_heads(qkv[:, 2 * D:3 * D], T),
                   self_mask, T)
        a = jnp.dot(a.astype(cdt), w_so_ref[l], preferred_element_type=f32) + b_so_ref[l]
        h = layer_norm(residual + a, lnp[0:1, :], lnp[1:2, :])

        # ---- cross attention + monotonic p_choose ----------------------------
        # TODO(synk): MarianDecoderLayer source not provided; p_choose head is
        # assumed to be sigmoid(scaled Q . K^T) over the avg-pooled encoder keys.
        residual = h
        qc = (jnp.dot(h.astype(cdt), w_cq_ref[l], preferred_element_type=f32)
              + b_cq_ref[l]) * scale
        qh = split_heads(qc, T)
        kh = split_heads(ekv[:, base:base + D], S)
        vh = split_heads(ekv[:, base + D:base + 2 * D], S)
        kp = split_heads(pkv[:, base:base + D], Sp)
        a = attend(qh, kh, vh, cross_mask, T)
        e = jnp.einsum('bqd,bkd->bqk', qh, kp, preferred_element_type=f32)   # (HB, T, Sp)
        pch = jax.nn.sigmoid(e).reshape(H, Bc, T, Sp).transpose(1, 0, 2, 3)  # leading-dim swap
        out_p_ref[l] = pch.reshape(Bc, H, T * Sp)          # one lane-dense store per layer
        a = jnp.dot(a.astype(cdt), w_co_ref[l], preferred_element_type=f32) + b_co_ref[l]
        h = layer_norm(residual + a, lnp[2:3, :], lnp[3:4, :])

        # ---- feed forward (fc1 + GELU + fc2 + residual + LN fused) -----------
        residual = h
        f = jax.nn.gelu(jnp.dot(h.astype(cdt), w_f1_ref[l],
                                preferred_element_type=f32) + b_f1_ref[l])
        f = jnp.dot(f.astype(cdt), w_f2_ref[l], preferred_element_type=f32) + b_f2_ref[l]
        h = layer_norm(residual + f, lnp[4:5, :], lnp[5:6, :])

    out_h_ref[...] = h.astype(out_h_ref.dtype)


# ----------------------------- glue (plain JAX) -------------------------------
def marian_sinusoidal_positions(n_pos, dim):
    pos = jnp.arange(n_pos, dtype=jnp.float32)[:, None]
    j = jnp.arange(dim, dtype=jnp.float32)
    angle = pos / jnp.power(10000.0, 2.0 * jnp.floor(j / 2.0) / dim)
    # Marian layout: first half = sin of even columns, second half = cos of odd columns
    return jnp.concatenate([jnp.sin(angle[:, 0::2]), jnp.cos(angle[:, 1::2])], axis=-1)


def init_params(key, cfg):
    D, F = cfg["d_model"], cfg["decoder_ffn_dim"]
    V, L = cfg["vocab_size"], cfg["decoder_layers"]
    keys = jax.random.split(key, 1 + L)
    bf16 = _COMPUTE_DTYPE

    def w(k, shape):
        return jax.random.normal(k, shape, jnp.float32) * 0.02

    emb = w(keys[0], (V, D)).at[cfg["pad_token_id"]].set(0.0)

    w_qkv, w_so, w_cq, w_ckv, w_co, w_f1, w_f2 = ([] for _ in range(7))
    for l in range(L):
        lk = jax.random.split(keys[1 + l], 10)
        w_qkv.append(jnp.concatenate(
            [w(lk[0], (D, D)), w(lk[1], (D, D)), w(lk[2], (D, D))], axis=1))
        w_so.append(w(lk[3], (D, D)))
        w_cq.append(w(lk[4], (D, D)))
        w_ckv.append(jnp.concatenate([w(lk[5], (D, D)), w(lk[6], (D, D))], axis=1))  # K|V
        w_co.append(w(lk[7], (D, D)))
        w_f1.append(w(lk[8], (D, F)))
        w_f2.append(w(lk[9], (F, D)))

    ln_layer = jnp.stack([jnp.ones(D), jnp.zeros(D),
                          jnp.ones(D), jnp.zeros(D),
                          jnp.ones(D), jnp.zeros(D)])         # (6, D)
    stacked = dict(
        # matmul weights in bf16 (MXU operands), biases / LN params in f32.
        w_qkv=jnp.stack(w_qkv).astype(bf16),      b_qkv=jnp.zeros((L, 1, 3 * D), jnp.float32),
        w_self_o=jnp.stack(w_so).astype(bf16),    b_self_o=jnp.zeros((L, 1, D), jnp.float32),
        w_cross_q=jnp.stack(w_cq).astype(bf16),   b_cross_q=jnp.zeros((L, 1, D), jnp.float32),
        # layer-invariant enc/pooled projections -> single (D, L*2D) operand.
        w_cross_kv=jnp.concatenate(w_ckv, axis=1).astype(bf16),
        b_cross_kv=jnp.zeros((1, L * 2 * D), jnp.float32),
        w_cross_o=jnp.stack(w_co).astype(bf16),   b_cross_o=jnp.zeros((L, 1, D), jnp.float32),
        w_fc1=jnp.stack(w_f1).astype(bf16),       b_fc1=jnp.zeros((L, 1, F), jnp.float32),
        w_fc2=jnp.stack(w_f2).astype(bf16),       b_fc2=jnp.zeros((L, 1, D), jnp.float32),
        ln=jnp.stack([ln_layer] * L),
    )
    return {
        "embed_tokens": emb,
        "pos_table": marian_sinusoidal_positions(cfg["max_position_embeddings"], D),
        "stacked": stacked,
    }


def _num_tensorcores_per_chip():
    """2 on v7x (two TensorCores per chip), 1 on v5e/v6e (and on failure)."""
    try:
        kind = jax.devices()[0].device_kind.lower()
    except Exception:
        return 1
    return 2 if ("v7" in kind or "7x" in kind) else 1


def monotonic_decoder_forward(params, input_ids, attention_mask,
                              encoder_hidden_states, encoder_attention_mask,
                              cfg=CONFIG):
    B, T = input_ids.shape
    D = cfg["d_model"]
    H = cfg["decoder_attention_heads"]
    L = cfg["decoder_layers"]
    S = encoder_hidden_states.shape[1]
    ratio = PRE_DECISION_RATIO

    # keys_pooling = AvgPool1d(kernel=2, stride=2, ceil_mode=True)  (XLA glue)
    s_full = (S // ratio) * ratio
    pooled = jnp.mean(
        encoder_hidden_states[:, :s_full].reshape(B, s_full // ratio, ratio, D), axis=2)
    if S % ratio:
        tail = jnp.mean(encoder_hidden_states[:, s_full:], axis=1, keepdims=True)
        pooled = jnp.concatenate([pooled, tail], axis=1)
    Sp = pooled.shape[1]

    # embeddings + sinusoidal positions (XLA glue; dropout(training=False) = id)
    embed_scale = math.sqrt(D) if cfg["scale_embedding"] else 1.0
    inputs_embeds = jnp.take(params["embed_tokens"], input_ids, axis=0) * embed_scale
    positions = params["pos_table"][:T]                    # past_kv_len = 0
    hidden0 = (inputs_embeds + positions[None]).reshape(B * T, D).astype(jnp.float32)

    if attention_mask is None:
        attention_mask = jnp.ones((B, T), jnp.float32)
    if encoder_attention_mask is None:
        encoder_attention_mask = jnp.ones((B, S), jnp.float32)

    # One grid step per TensorCore: batch sharded across the 2 TCs on v7x,
    # single step (== grid-less) on single-TC v5e/v6e.
    G = 1
    if _num_tensorcores_per_chip() >= 2 and B % 2 == 0:
        bc_try = B // 2
        if (bc_try * T) % 8 == 0 and (bc_try * S) % 8 == 0 and (bc_try * Sp) % 8 == 0:
            G = 2
    Bc = B // G

    st = params["stacked"]
    kern = functools.partial(
        _decoder_stack_kernel,
        Bc=Bc, T=T, S=S, Sp=Sp, D=D, H=H, L=L, scale=float((D // H) ** -0.5))

    weight_args = (st["w_qkv"], st["b_qkv"], st["w_self_o"], st["b_self_o"],
                   st["w_cross_q"], st["b_cross_q"], st["w_cross_kv"], st["b_cross_kv"],
                   st["w_cross_o"], st["b_cross_o"], st["w_fc1"], st["b_fc1"],
                   st["w_fc2"], st["b_fc2"], st["ln"])

    def rep(arr):
        # weights: full-array block, same (replicated) block for every grid step
        zeros = (0,) * arr.ndim
        return pl.BlockSpec(arr.shape, lambda i, _z=zeros: _z)

    in_specs = [
        pl.BlockSpec((Bc * T, D), lambda i: (i, 0)),        # hidden0 (batch-sliced)
        pl.BlockSpec((Bc * S, D), lambda i: (i, 0)),        # encoder states
        pl.BlockSpec((Bc * Sp, D), lambda i: (i, 0)),       # pooled encoder keys
        pl.BlockSpec((Bc, 1, T), lambda i: (i, 0, 0)),      # decoder padding mask
        pl.BlockSpec((Bc, 1, S), lambda i: (i, 0, 0)),      # encoder padding mask
    ] + [rep(a) for a in weight_args]

    out_specs = (
        pl.BlockSpec((Bc * T, D), lambda i: (i, 0)),
        pl.BlockSpec((L, Bc, H, T * Sp), lambda i: (0, i, 0, 0)),
    )

    out_h, out_p = pl.pallas_call(
        kern,
        grid=(G,),
        in_specs=in_specs,
        out_specs=out_specs,
        out_shape=(jax.ShapeDtypeStruct((B * T, D), jnp.float32),
                   jax.ShapeDtypeStruct((L, B, H, T * Sp), jnp.float32)),
        compiler_params=pltpu.CompilerParams(dimension_semantics=("parallel",)),
    )(hidden0,
      encoder_hidden_states.reshape(B * S, D).astype(jnp.float32),
      pooled.reshape(B * Sp, D).astype(jnp.float32),
      attention_mask.astype(jnp.float32).reshape(B, 1, T),
      encoder_attention_mask.astype(jnp.float32).reshape(B, 1, S),
      *weight_args)

    last_hidden = out_h.reshape(B, T, D)
    # kernel already wrote (l, b, h, t, :) order -> plain reshape, no transpose
    p_choose = out_p.reshape(L * B * H * T, Sp)
    return last_hidden, p_choose


# ----------------------------- main ------------------------------------------
if __name__ == "__main__":
    key = jax.random.PRNGKey(0)
    k_params, k_ids, k_enc = jax.random.split(key, 3)

    cfg = CONFIG
    B, T, S, D = 2, 8, 16, cfg["d_model"]

    params = init_params(k_params, cfg)
    input_ids = jax.random.randint(k_ids, (B, T), 0, cfg["vocab_size"], dtype=jnp.int32)
    attention_mask = jnp.ones((B, T), jnp.float32)
    encoder_hidden_states = jax.random.normal(k_enc, (B, S, D), jnp.float32)
    encoder_attention_mask = jnp.ones((B, S), jnp.float32)

    fwd = jax.jit(lambda ids, am, enc, eam: monotonic_decoder_forward(
        params, ids, am, enc, eam, cfg))

    last_hidden, p_choose = fwd(input_ids, attention_mask,
                                encoder_hidden_states, encoder_attention_mask)
    last_hidden = jax.block_until_ready(last_hidden)
    p_choose = jax.block_until_ready(p_choose)

    L, H = cfg["decoder_layers"], cfg["decoder_attention_heads"]
    Sp = -(-S // PRE_DECISION_RATIO)
    assert last_hidden.shape == (B, T, D)
    assert p_choose.shape == (L * B * H * T, Sp)
    assert bool(jnp.all(jnp.isfinite(last_hidden)))
    assert bool(jnp.all((p_choose >= 0.0) & (p_choose <= 1.0)))
    print("KERNEL_OK")
</pallas_src>

<mosaic_0001>
module attributes {stable_mosaic.version = 11 : i64} {
  func.func @_decoder_stack_kernel(%arg0: i32, %arg1: memref<16x32xf32, #tpu.memory_space<vmem>>, %arg2: memref<32x32xf32, #tpu.memory_space<vmem>>, %arg3: memref<16x32xf32, #tpu.memory_space<vmem>>, %arg4: memref<2x1x8xf32, #tpu.memory_space<vmem>>, %arg5: memref<2x1x16xf32, #tpu.memory_space<vmem>>, %arg6: memref<2x32x96xbf16, #tpu.memory_space<vmem>>, %arg7: memref<2x1x96xf32, #tpu.memory_space<vmem>>, %arg8: memref<2x32x32xbf16, #tpu.memory_space<vmem>>, %arg9: memref<2x1x32xf32, #tpu.memory_space<vmem>>, %arg10: memref<2x32x32xbf16, #tpu.memory_space<vmem>>, %arg11: memref<2x1x32xf32, #tpu.memory_space<vmem>>, %arg12: memref<32x128xbf16, #tpu.memory_space<vmem>>, %arg13: memref<1x128xf32, #tpu.memory_space<vmem>>, %arg14: memref<2x32x32xbf16, #tpu.memory_space<vmem>>, %arg15: memref<2x1x32xf32, #tpu.memory_space<vmem>>, %arg16: memref<2x32x64xbf16, #tpu.memory_space<vmem>>, %arg17: memref<2x1x64xf32, #tpu.memory_space<vmem>>, %arg18: memref<2x64x32xbf16, #tpu.memory_space<vmem>>, %arg19: memref<2x1x32xf32, #tpu.memory_space<vmem>>, %arg20: memref<2x6x32xf32, #tpu.memory_space<vmem>>, %arg21: memref<16x32xf32, #tpu.memory_space<vmem>>, %arg22: memref<2x2x4x64xf32, #tpu.memory_space<vmem>>) attributes {dimension_semantics = [#tpu.dimension_semantics<parallel>], iteration_bounds = array<i64: 1>, scalar_prefetch = 0 : i64, scratch_operands = 0 : i64, tpu.core_type = #tpu.core_type<tc>, window_params = [{transform_indices = @transform_0, window_bounds = array<i64: 16, 32>}, {transform_indices = @transform_1, window_bounds = array<i64: 32, 32>}, {transform_indices = @transform_2, window_bounds = array<i64: 16, 32>}, {transform_indices = @transform_3, window_bounds = array<i64: 2, 1, 8>}, {transform_indices = @transform_4, window_bounds = array<i64: 2, 1, 16>}, {pipeline_mode = #tpu.pipeline_mode<synchronous>, transform_indices = @transform_5, window_bounds = array<i64: 2, 32, 96>}, {pipeline_mode = #tpu.pipeline_mode<synchronous>, transform_indices = @transform_6, window_bounds = array<i64: 2, 1, 96>}, {pipeline_mode = #tpu.pipeline_mode<synchronous>, transform_indices = @transform_7, window_bounds = array<i64: 2, 32, 32>}, {pipeline_mode = #tpu.pipeline_mode<synchronous>, transform_indices = @transform_8, window_bounds = array<i64: 2, 1, 32>}, {pipeline_mode = #tpu.pipeline_mode<synchronous>, transform_indices = @transform_9, window_bounds = array<i64: 2, 32, 32>}, {pipeline_mode = #tpu.pipeline_mode<synchronous>, transform_indices = @transform_10, window_bounds = array<i64: 2, 1, 32>}, {pipeline_mode = #tpu.pipeline_mode<synchronous>, transform_indices = @transform_11, window_bounds = array<i64: 32, 128>}, {pipeline_mode = #tpu.pipeline_mode<synchronous>, transform_indices = @transform_12, window_bounds = array<i64: 1, 128>}, {pipeline_mode = #tpu.pipeline_mode<synchronous>, transform_indices = @transform_13, window_bounds = array<i64: 2, 32, 32>}, {pipeline_mode = #tpu.pipeline_mode<synchronous>, transform_indices = @transform_14, window_bounds = array<i64: 2, 1, 32>}, {pipeline_mode = #tpu.pipeline_mode<synchronous>, transform_indices = @transform_15, window_bounds = array<i64: 2, 32, 64>}, {pipeline_mode = #tpu.pipeline_mode<synchronous>, transform_indices = @transform_16, window_bounds = array<i64: 2, 1, 64>}, {pipeline_mode = #tpu.pipeline_mode<synchronous>, transform_indices = @transform_17, window_bounds = array<i64: 2, 64, 32>}, {pipeline_mode = #tpu.pipeline_mode<synchronous>, transform_indices = @transform_18, window_bounds = array<i64: 2, 1, 32>}, {pipeline_mode = #tpu.pipeline_mode<synchronous>, transform_indices = @transform_19, window_bounds = array<i64: 2, 6, 32>}, {transform_indices = @transform_20, window_bounds = array<i64: 16, 32>}, {transform_indices = @transform_21, window_bounds = array<i64: 2, 2, 4, 64>}]} {
    %0 = tpu.iota {dimensions = array<i32: 0>} : vector<8x8xi32>
    %1 = tpu.iota {dimensions = array<i32: 1>} : vector<8x8xi32>
    %2 = arith.cmpi sle, %1, %0 : vector<8x8xi32>
    %c0 = arith.constant 0 : index
    %c0_0 = arith.constant 0 : index
    %c0_1 = arith.constant 0 : index
    %3 = vector.load %arg4[%c0, %c0_0, %c0_1] : memref<2x1x8xf32, #tpu.memory_space<vmem>>, vector<2x1x8xf32>
    %cst = arith.constant 5.000000e-01 : f32
    %4 = vector.broadcast %cst : f32 to vector<2x1x8xf32>
    %5 = arith.cmpf ogt, %3, %4 : vector<2x1x8xf32>
    %6 = vector.shape_cast %2 : vector<8x8xi1> to vector<1x8x8xi1>
    %7 = vector.broadcast %6 : vector<1x8x8xi1> to vector<2x8x8xi1>
    %8 = vector.broadcast %5 : vector<2x1x8xi1> to vector<2x8x8xi1>
    %9 = arith.andi %7, %8 : vector<2x8x8xi1>
    %cst_2 = arith.constant 0.000000e+00 : f32
    %cst_3 = arith.constant -3.40282347E+38 : f32
    %10 = vector.broadcast %cst_2 : f32 to vector<2x8x8xf32>
    %11 = vector.broadcast %cst_3 : f32 to vector<2x8x8xf32>
    %12 = arith.select %9, %10, %11 : vector<2x8x8xi1>, vector<2x8x8xf32>
    %13 = vector.shape_cast %12 : vector<2x8x8xf32> to vector<1x2x8x8xf32>
    %14 = vector.shape_cast %13 : vector<1x2x8x8xf32> to vector<1x2x8x8xf32>
    %15 = vector.broadcast %14 : vector<1x2x8x8xf32> to vector<4x2x8x8xf32>
    %16 = vector.shape_cast %15 : vector<4x2x8x8xf32> to vector<8x8x8xf32>
    %c0_4 = arith.constant 0 : index
    %c0_5 = arith.constant 0 : index
    %c0_6 = arith.constant 0 : index
    %17 = vector.load %arg5[%c0_4, %c0_5, %c0_6] : memref<2x1x16xf32, #tpu.memory_space<vmem>>, vector<2x1x16xf32>
    %cst_7 = arith.constant 5.000000e-01 : f32
    %18 = vector.broadcast %cst_7 : f32 to vector<2x1x16xf32>
    %19 = arith.cmpf ogt, %17, %18 : vector<2x1x16xf32>
    %cst_8 = arith.constant 0.000000e+00 : f32
    %cst_9 = arith.constant -3.40282347E+38 : f32
    %20 = vector.broadcast %cst_8 : f32 to vector<2x1x16xf32>
    %21 = vector.broadcast %cst_9 : f32 to vector<2x1x16xf32>
    %22 = arith.select %19, %20, %21 : vector<2x1x16xi1>, vector<2x1x16xf32>
    %23 = vector.shape_cast %22 : vector<2x1x16xf32> to vector<1x2x1x16xf32>
    %24 = vector.shape_cast %23 : vector<1x2x1x16xf32> to vector<1x2x1x16xf32>
    %25 = vector.broadcast %24 : vector<1x2x1x16xf32> to vector<4x2x8x16xf32>
    %26 = vector.shape_cast %25 : vector<4x2x8x16xf32> to vector<8x8x16xf32>
    %c0_10 = arith.constant 0 : index
    %c0_11 = arith.constant 0 : index
    %27 = vector.load %arg1[%c0_10, %c0_11] : memref<16x32xf32, #tpu.memory_space<vmem>>, vector<16x32xf32>
    %c0_12 = arith.constant 0 : index
    %c0_13 = arith.constant 0 : index
    %28 = vector.load %arg12[%c0_12, %c0_13] : memref<32x128xbf16, #tpu.memory_space<vmem>>, vector<32x128xbf16>
    %c0_14 = arith.constant 0 : index
    %c0_15 = arith.constant 0 : index
    %29 = vector.load %arg13[%c0_14, %c0_15] : memref<1x128xf32, #tpu.memory_space<vmem>>, vector<1x128xf32>
    %c0_16 = arith.constant 0 : index
    %c0_17 = arith.constant 0 : index
    %30 = vector.load %arg2[%c0_16, %c0_17] : memref<32x32xf32, #tpu.memory_space<vmem>>, vector<32x32xf32>
    %31 = arith.truncf %30 : vector<32x32xf32> to vector<32x32xbf16>
    %cst_18 = arith.constant dense<0.000000e+00> : vector<32x128xf32>
    %32 = tpu.matmul %31, %28, %cst_18 {dimension_numbers = #tpu.dot_dimension_numbers<[1], [0], [0], [1], [0, 0, 1, 1], [], []>} : vector<32x32xbf16>, vector<32x128xbf16>, vector<32x128xf32> -> vector<32x128xf32>
    %33 = vector.broadcast %29 : vector<1x128xf32> to vector<32x128xf32>
    %34 = arith.addf %32, %33 : vector<32x128xf32>
    %c0_19 = arith.constant 0 : index
    %c0_20 = arith.constant 0 : index
    %35 = vector.load %arg3[%c0_19, %c0_20] : memref<16x32xf32, #tpu.memory_space<vmem>>, vector<16x32xf32>
    %36 = arith.truncf %35 : vector<16x32xf32> to vector<16x32xbf16>
    %cst_21 = arith.constant dense<0.000000e+00> : vector<16x128xf32>
    %37 = tpu.matmul %36, %28, %cst_21 {dimension_numbers = #tpu.dot_dimension_numbers<[1], [0], [0], [1], [0, 0, 1, 1], [], []>} : vector<16x32xbf16>, vector<32x128xbf16>, vector<16x128xf32> -> vector<16x128xf32>
    %38 = vector.broadcast %29 : vector<1x128xf32> to vector<16x128xf32>
    %39 = arith.addf %37, %38 : vector<16x128xf32>
    %c0_22 = arith.constant 0 : index
    %c0_23 = arith.constant 0 : index
    %c0_24 = arith.constant 0 : index
    %40 = vector.load %arg20[%c0_22, %c0_23, %c0_24] : memref<2x6x32xf32, #tpu.memory_space<vmem>>, vector<1x6x32xf32>
    %41 = vector.shape_cast %40 : vector<1x6x32xf32> to vector<6x32xf32>
    %42 = arith.truncf %27 : vector<16x32xf32> to vector<16x32xbf16>
    %c0_25 = arith.constant 0 : index
    %c0_26 = arith.constant 0 : index
    %c0_27 = arith.constant 0 : index
    %43 = vector.load %arg6[%c0_25, %c0_26, %c0_27] : memref<2x32x96xbf16, #tpu.memory_space<vmem>>, vector<1x32x96xbf16>
    %44 = vector.shape_cast %43 : vector<1x32x96xbf16> to vector<32x96xbf16>
    %cst_28 = arith.constant dense<0.000000e+00> : vector<16x96xf32>
    %45 = tpu.matmul %42, %44, %cst_28 {dimension_numbers = #tpu.dot_dimension_numbers<[1], [0], [0], [1], [0, 0, 1, 1], [], []>} : vector<16x32xbf16>, vector<32x96xbf16>, vector<16x96xf32> -> vector<16x96xf32>
    %c0_29 = arith.constant 0 : index
    %c0_30 = arith.constant 0 : index
    %c0_31 = arith.constant 0 : index
    %46 = vector.load %arg7[%c0_29, %c0_30, %c0_31] : memref<2x1x96xf32, #tpu.memory_space<vmem>>, vector<1x1x96xf32>
    %47 = vector.shape_cast %46 : vector<1x1x96xf32> to vector<1x96xf32>
    %48 = vector.broadcast %47 : vector<1x96xf32> to vector<16x96xf32>
    %49 = arith.addf %45, %48 : vector<16x96xf32>
    %50 = vector.extract_strided_slice %49 {offsets = [0, 0], sizes = [16, 32], strides = [1, 1]} : vector<16x96xf32> to vector<16x32xf32>
    %cst_32 = arith.constant 0.353553385 : f32
    %51 = vector.broadcast %cst_32 : f32 to vector<16x32xf32>
    %52 = arith.mulf %50, %51 : vector<16x32xf32>
    %53 = arith.truncf %52 : vector<16x32xf32> to vector<16x32xbf16>
    %54 = vector.extract_strided_slice %53 {offsets = [0, 0], sizes = [16, 8], strides = [1, 1]} : vector<16x32xbf16> to vector<16x8xbf16>
    %55 = vector.shape_cast %54 : vector<16x8xbf16> to vector<1x2x8x8xbf16>
    %56 = vector.extract_strided_slice %53 {offsets = [0, 8], sizes = [16, 8], strides = [1, 1]} : vector<16x32xbf16> to vector<16x8xbf16>
    %57 = vector.shape_cast %56 : vector<16x8xbf16> to vector<1x2x8x8xbf16>
    %58 = vector.extract_strided_slice %53 {offsets = [0, 16], sizes = [16, 8], strides = [1, 1]} : vector<16x32xbf16> to vector<16x8xbf16>
    %59 = vector.shape_cast %58 : vector<16x8xbf16> to vector<1x2x8x8xbf16>
    %60 = vector.extract_strided_slice %53 {offsets = [0, 24], sizes = [16, 8], strides = [1, 1]} : vector<16x32xbf16> to vector<16x8xbf16>
    %61 = vector.shape_cast %60 : vector<16x8xbf16> to vector<1x2x8x8xbf16>
    %62 = tpu.concatenate %55, %57, %59, %61 in 0 : vector<1x2x8x8xbf16>, vector<1x2x8x8xbf16>, vector<1x2x8x8xbf16>, vector<1x2x8x8xbf16> -> vector<4x2x8x8xbf16>
    %63 = vector.shape_cast %62 : vector<4x2x8x8xbf16> to vector<8x8x8xbf16>
    %64 = vector.extract_strided_slice %49 {offsets = [0, 32], sizes = [16, 32], strides = [1, 1]} : vector<16x96xf32> to vector<16x32xf32>
    %65 = arith.truncf %64 : vector<16x32xf32> to vector<16x32xbf16>
    %66 = vector.extract_strided_slice %65 {offsets = [0, 0], sizes = [16, 8], strides = [1, 1]} : vector<16x32xbf16> to vector<16x8xbf16>
    %67 = vector.shape_cast %66 : vector<16x8xbf16> to vector<1x2x8x8xbf16>
    %68 = vector.extract_strided_slice %65 {offsets = [0, 8], sizes = [16, 8], strides = [1, 1]} : vector<16x32xbf16> to vector<16x8xbf16>
    %69 = vector.shape_cast %68 : vector<16x8xbf16> to vector<1x2x8x8xbf16>
    %70 = vector.extract_strided_slice %65 {offsets = [0, 16], sizes = [16, 8], strides = [1, 1]} : vector<16x32xbf16> to vector<16x8xbf16>
    %71 = vector.shape_cast %70 : vector<16x8xbf16> to vector<1x2x8x8xbf16>
    %72 = vector.extract_strided_slice %65 {offsets = [0, 24], sizes = [16, 8], strides = [1, 1]} : vector<16x32xbf16> to vector<16x8xbf16>
    %73 = vector.shape_cast %72 : vector<16x8xbf16> to vector<1x2x8x8xbf16>
    %74 = tpu.concatenate %67, %69, %71, %73 in 0 : vector<1x2x8x8xbf16>, vector<1x2x8x8xbf16>, vector<1x2x8x8xbf16>, vector<1x2x8x8xbf16> -> vector<4x2x8x8xbf16>
    %75 = vector.shape_cast %74 : vector<4x2x8x8xbf16> to vector<8x8x8xbf16>
    %76 = vector.extract_strided_slice %49 {offsets = [0, 64], sizes = [16, 32], strides = [1, 1]} : vector<16x96xf32> to vector<16x32xf32>
    %77 = arith.truncf %76 : vector<16x32xf32> to vector<16x32xbf16>
    %78 = vector.extract_strided_slice %77 {offsets = [0, 0], sizes = [16, 8], strides = [1, 1]} : vector<16x32xbf16> to vector<16x8xbf16>
    %79 = vector.shape_cast %78 : vector<16x8xbf16> to vector<1x2x8x8xbf16>
    %80 = vector.extract_strided_slice %77 {offsets = [0, 8], sizes = [16, 8], strides = [1, 1]} : vector<16x32xbf16> to vector<16x8xbf16>
    %81 = vector.shape_cast %80 : vector<16x8xbf16> to vector<1x2x8x8xbf16>
    %82 = vector.extract_strided_slice %77 {offsets = [0, 16], sizes = [16, 8], strides = [1, 1]} : vector<16x32xbf16> to vector<16x8xbf16>
    %83 = vector.shape_cast %82 : vector<16x8xbf16> to vector<1x2x8x8xbf16>
    %84 = vector.extract_strided_slice %77 {offsets = [0, 24], sizes = [16, 8], strides = [1, 1]} : vector<16x32xbf16> to vector<16x8xbf16>
    %85 = vector.shape_cast %84 : vector<16x8xbf16> to vector<1x2x8x8xbf16>
    %86 = tpu.concatenate %79, %81, %83, %85 in 0 : vector<1x2x8x8xbf16>, vector<1x2x8x8xbf16>, vector<1x2x8x8xbf16>, vector<1x2x8x8xbf16> -> vector<4x2x8x8xbf16>
    %87 = vector.shape_cast %86 : vector<4x2x8x8xbf16> to vector<8x8x8xbf16>
    "tpu.trace_start"() <{level = 10 : i32, message = "bqd,bkd->bqk"}> : () -> ()
    %cst_33 = arith.constant dense<0.000000e+00> : vector<8x8x8xf32>
    %88 = tpu.matmul %63, %75, %cst_33 {dimension_numbers = #tpu.dot_dimension_numbers<[2], [2], [1], [1], [0, 0, 0, 1, 1, 1], [0], [0]>} : vector<8x8x8xbf16>, vector<8x8x8xbf16>, vector<8x8x8xf32> -> vector<8x8x8xf32>
    "tpu.trace_stop"() : () -> ()
    %89 = arith.addf %88, %16 : vector<8x8x8xf32>
    %cst_34 = arith.constant dense<0xFF800000> : vector<8x8xf32>
    %90 = vector.multi_reduction <maximumf>, %89, %cst_34 [2] : vector<8x8x8xf32> to vector<8x8xf32>
    %91 = vector.shape_cast %90 : vector<8x8xf32> to vector<8x8x1xf32>
    %92 = vector.broadcast %91 : vector<8x8x1xf32> to vector<8x8x8xf32>
    %93 = arith.subf %89, %92 : vector<8x8x8xf32>
    %94 = math.exp %93 : vector<8x8x8xf32>
    %cst_35 = arith.constant dense<0.000000e+00> : vector<8x8xf32>
    %95 = vector.multi_reduction <add>, %94, %cst_35 [2] : vector<8x8x8xf32> to vector<8x8xf32>
    %96 = vector.shape_cast %95 : vector<8x8xf32> to vector<8x8x1xf32>
    %97 = vector.broadcast %96 : vector<8x8x1xf32> to vector<8x8x8xf32>
    %98 = arith.divf %94, %97 : vector<8x8x8xf32>
    %99 = arith.truncf %98 : vector<8x8x8xf32> to vector<8x8x8xbf16>
    "tpu.trace_start"() <{level = 10 : i32, message = "bqk,bkd->bqd"}> : () -> ()
    %cst_36 = arith.constant dense<0.000000e+00> : vector<8x8x8xf32>
    %100 = tpu.matmul %99, %87, %cst_36 {dimension_numbers = #tpu.dot_dimension_numbers<[2], [1], [1], [2], [0, 0, 0, 1, 1, 2], [0], [0]>} : vector<8x8x8xbf16>, vector<8x8x8xbf16>, vector<8x8x8xf32> -> vector<8x8x8xf32>
    "tpu.trace_stop"() : () -> ()
    %101 = vector.shape_cast %100 : vector<8x8x8xf32> to vector<4x16x8xf32>
    %102 = vector.extract_strided_slice %101 {offsets = [0, 0, 0], sizes = [1, 16, 8], strides = [1, 1, 1]} : vector<4x16x8xf32> to vector<1x16x8xf32>
    %103 = vector.shape_cast %102 : vector<1x16x8xf32> to vector<16x8xf32>
    %104 = vector.extract_strided_slice %101 {offsets = [1, 0, 0], sizes = [1, 16, 8], strides = [1, 1, 1]} : vector<4x16x8xf32> to vector<1x16x8xf32>
    %105 = vector.shape_cast %104 : vector<1x16x8xf32> to vector<16x8xf32>
    %106 = vector.extract_strided_slice %101 {offsets = [2, 0, 0], sizes = [1, 16, 8], strides = [1, 1, 1]} : vector<4x16x8xf32> to vector<1x16x8xf32>
    %107 = vector.shape_cast %106 : vector<1x16x8xf32> to vector<16x8xf32>
    %108 = vector.extract_strided_slice %101 {offsets = [3, 0, 0], sizes = [1, 16, 8], strides = [1, 1, 1]} : vector<4x16x8xf32> to vector<1x16x8xf32>
    %109 = vector.shape_cast %108 : vector<1x16x8xf32> to vector<16x8xf32>
    %110 = tpu.concatenate %103, %105, %107, %109 in 1 : vector<16x8xf32>, vector<16x8xf32>, vector<16x8xf32>, vector<16x8xf32> -> vector<16x32xf32>
    %111 = arith.truncf %110 : vector<16x32xf32> to vector<16x32xbf16>
    %c0_37 = arith.constant 0 : index
    %c0_38 = arith.constant 0 : index
    %c0_39 = arith.constant 0 : index
    %112 = vector.load %arg8[%c0_37, %c0_38, %c0_39] : memref<2x32x32xbf16, #tpu.memory_space<vmem>>, vector<1x32x32xbf16>
    %113 = vector.shape_cast %112 : vector<1x32x32xbf16> to vector<32x32xbf16>
    %cst_40 = arith.constant dense<0.000000e+00> : vector<16x32xf32>
    %114 = tpu.matmul %111, %113, %cst_40 {dimension_numbers = #tpu.dot_dimension_numbers<[1], [0], [0], [1], [0, 0, 1, 1], [], []>} : vector<16x32xbf16>, vector<32x32xbf16>, vector<16x32xf32> -> vector<16x32xf32>
    %c0_41 = arith.constant 0 : index
    %c0_42 = arith.constant 0 : index
    %c0_43 = arith.constant 0 : index
    %115 = vector.load %arg9[%c0_41, %c0_42, %c0_43] : memref<2x1x32xf32, #tpu.memory_space<vmem>>, vector<1x1x32xf32>
    %116 = vector.shape_cast %115 : vector<1x1x32xf32> to vector<1x32xf32>
    %117 = vector.broadcast %116 : vector<1x32xf32> to vector<16x32xf32>
    %118 = arith.addf %114, %117 : vector<16x32xf32>
    %119 = arith.addf %27, %118 : vector<16x32xf32>
    %120 = vector.extract_strided_slice %41 {offsets = [0, 0], sizes = [1, 32], strides = [1, 1]} : vector<6x32xf32> to vector<1x32xf32>
    %121 = vector.extract_strided_slice %41 {offsets = [1, 0], sizes = [1, 32], strides = [1, 1]} : vector<6x32xf32> to vector<1x32xf32>
    %cst_44 = arith.constant dense<0.000000e+00> : vector<16xf32>
    %122 = vector.multi_reduction <add>, %119, %cst_44 [1] : vector<16x32xf32> to vector<16xf32>
    %123 = vector.shape_cast %122 : vector<16xf32> to vector<16x1xf32>
    %cst_45 = arith.constant 3.200000e+01 : f32
    %124 = vector.broadcast %cst_45 : f32 to vector<16x1xf32>
    %125 = arith.divf %123, %124 : vector<16x1xf32>
    %126 = vector.broadcast %125 : vector<16x1xf32> to vector<16x32xf32>
    %127 = arith.subf %119, %126 : vector<16x32xf32>
    %128 = arith.mulf %127, %127 : vector<16x32xf32>
    %cst_46 = arith.constant dense<0.000000e+00> : vector<16xf32>
    %129 = vector.multi_reduction <add>, %128, %cst_46 [1] : vector<16x32xf32> to vector<16xf32>
    %130 = vector.shape_cast %129 : vector<16xf32> to vector<16x1xf32>
    %cst_47 = arith.constant 3.200000e+01 : f32
    %131 = vector.broadcast %cst_47 : f32 to vector<16x1xf32>
    %132 = arith.divf %130, %131 : vector<16x1xf32>
    %cst_48 = arith.constant 9.99999974E-6 : f32
    %133 = vector.broadcast %cst_48 : f32 to vector<16x1xf32>
    %134 = arith.addf %132, %133 : vector<16x1xf32>
    %135 = math.rsqrt %134 : vector<16x1xf32>
    %136 = vector.broadcast %135 : vector<16x1xf32> to vector<16x32xf32>
    %137 = arith.mulf %127, %136 : vector<16x32xf32>
    %138 = vector.broadcast %120 : vector<1x32xf32> to vector<16x32xf32>
    %139 = arith.mulf %137, %138 : vector<16x32xf32>
    %140 = vector.broadcast %121 : vector<1x32xf32> to vector<16x32xf32>
    %141 = arith.addf %139, %140 : vector<16x32xf32>
    %142 = arith.truncf %141 : vector<16x32xf32> to vector<16x32xbf16>
    %c0_49 = arith.constant 0 : index
    %c0_50 = arith.constant 0 : index
    %c0_51 = arith.constant 0 : index
    %143 = vector.load %arg10[%c0_49, %c0_50, %c0_51] : memref<2x32x32xbf16, #tpu.memory_space<vmem>>, vector<1x32x32xbf16>
    %144 = vector.shape_cast %143 : vector<1x32x32xbf16> to vector<32x32xbf16>
    %cst_52 = arith.constant dense<0.000000e+00> : vector<16x32xf32>
    %145 = tpu.matmul %142, %144, %cst_52 {dimension_numbers = #tpu.dot_dimension_numbers<[1], [0], [0], [1], [0, 0, 1, 1], [], []>} : vector<16x32xbf16>, vector<32x32xbf16>, vector<16x32xf32> -> vector<16x32xf32>
    %c0_53 = arith.constant 0 : index
    %c0_54 = arith.constant 0 : index
    %c0_55 = arith.constant 0 : index
    %146 = vector.load %arg11[%c0_53, %c0_54, %c0_55] : memref<2x1x32xf32, #tpu.memory_space<vmem>>, vector<1x1x32xf32>
    %147 = vector.shape_cast %146 : vector<1x1x32xf32> to vector<1x32xf32>
    %148 = vector.broadcast %147 : vector<1x32xf32> to vector<16x32xf32>
    %149 = arith.addf %145, %148 : vector<16x32xf32>
    %cst_56 = arith.constant 0.353553385 : f32
    %150 = vector.broadcast %cst_56 : f32 to vector<16x32xf32>
    %151 = arith.mulf %149, %150 : vector<16x32xf32>
    %152 = arith.truncf %151 : vector<16x32xf32> to vector<16x32xbf16>
    %153 = vector.extract_strided_slice %152 {offsets = [0, 0], sizes = [16, 8], strides = [1, 1]} : vector<16x32xbf16> to vector<16x8xbf16>
    %154 = vector.shape_cast %153 : vector<16x8xbf16> to vector<1x2x8x8xbf16>
    %155 = vector.extract_strided_slice %152 {offsets = [0, 8], sizes = [16, 8], strides = [1, 1]} : vector<16x32xbf16> to vector<16x8xbf16>
    %156 = vector.shape_cast %155 : vector<16x8xbf16> to vector<1x2x8x8xbf16>
    %157 = vector.extract_strided_slice %152 {offsets = [0, 16], sizes = [16, 8], strides = [1, 1]} : vector<16x32xbf16> to vector<16x8xbf16>
    %158 = vector.shape_cast %157 : vector<16x8xbf16> to vector<1x2x8x8xbf16>
    %159 = vector.extract_strided_slice %152 {offsets = [0, 24], sizes = [16, 8], strides = [1, 1]} : vector<16x32xbf16> to vector<16x8xbf16>
    %160 = vector.shape_cast %159 : vector<16x8xbf16> to vector<1x2x8x8xbf16>
    %161 = tpu.concatenate %154, %156, %158, %160 in 0 : vector<1x2x8x8xbf16>, vector<1x2x8x8xbf16>, vector<1x2x8x8xbf16>, vector<1x2x8x8xbf16> -> vector<4x2x8x8xbf16>
    %162 = vector.shape_cast %161 : vector<4x2x8x8xbf16> to vector<8x8x8xbf16>
    %163 = vector.extract_strided_slice %34 {offsets = [0, 0], sizes = [32, 32], strides = [1, 1]} : vector<32x128xf32> to vector<32x32xf32>
    %164 = arith.truncf %163 : vector<32x32xf32> to vector<32x32xbf16>
    %165 = vector.extract_strided_slice %164 {offsets = [0, 0], sizes = [32, 8], strides = [1, 1]} : vector<32x32xbf16> to vector<32x8xbf16>
    %166 = vector.shape_cast %165 : vector<32x8xbf16> to vector<1x2x16x8xbf16>
    %167 = vector.extract_strided_slice %164 {offsets = [0, 8], sizes = [32, 8], strides = [1, 1]} : vector<32x32xbf16> to vector<32x8xbf16>
    %168 = vector.shape_cast %167 : vector<32x8xbf16> to vector<1x2x16x8xbf16>
    %169 = vector.extract_strided_slice %164 {offsets = [0, 16], sizes = [32, 8], strides = [1, 1]} : vector<32x32xbf16> to vector<32x8xbf16>
    %170 = vector.shape_cast %169 : vector<32x8xbf16> to vector<1x2x16x8xbf16>
    %171 = vector.extract_strided_slice %164 {offsets = [0, 24], sizes = [32, 8], strides = [1, 1]} : vector<32x32xbf16> to vector<32x8xbf16>
    %172 = vector.shape_cast %171 : vector<32x8xbf16> to vector<1x2x16x8xbf16>
    %173 = tpu.concatenate %166, %168, %170, %172 in 0 : vector<1x2x16x8xbf16>, vector<1x2x16x8xbf16>, vector<1x2x16x8xbf16>, vector<1x2x16x8xbf16> -> vector<4x2x16x8xbf16>
    %174 = vector.shape_cast %173 : vector<4x2x16x8xbf16> to vector<8x16x8xbf16>
    %175 = vector.extract_strided_slice %34 {offsets = [0, 32], sizes = [32, 32], strides = [1, 1]} : vector<32x128xf32> to vector<32x32xf32>
    %176 = arith.truncf %175 : vector<32x32xf32> to vector<32x32xbf16>
    %177 = vector.extract_strided_slice %176 {offsets = [0, 0], sizes = [32, 8], strides = [1, 1]} : vector<32x32xbf16> to vector<32x8xbf16>
    %178 = vector.shape_cast %177 : vector<32x8xbf16> to vector<1x2x16x8xbf16>
    %179 = vector.extract_strided_slice %176 {offsets = [0, 8], sizes = [32, 8], strides = [1, 1]} : vector<32x32xbf16> to vector<32x8xbf16>
    %180 = vector.shape_cast %179 : vector<32x8xbf16> to vector<1x2x16x8xbf16>
    %181 = vector.extract_strided_slice %176 {offsets = [0, 16], sizes = [32, 8], strides = [1, 1]} : vector<32x32xbf16> to vector<32x8xbf16>
    %182 = vector.shape_cast %181 : vector<32x8xbf16> to vector<1x2x16x8xbf16>
    %183 = vector.extract_strided_slice %176 {offsets = [0, 24], sizes = [32, 8], strides = [1, 1]} : vector<32x32xbf16> to vector<32x8xbf16>
    %184 = vector.shape_cast %183 : vector<32x8xbf16> to vector<1x2x16x8xbf16>
    %185 = tpu.concatenate %178, %180, %182, %184 in 0 : vector<1x2x16x8xbf16>, vector<1x2x16x8xbf16>, vector<1x2x16x8xbf16>, vector<1x2x16x8xbf16> -> vector<4x2x16x8xbf16>
    %186 = vector.shape_cast %185 : vector<4x2x16x8xbf16> to vector<8x16x8xbf16>
    %187 = vector.extract_strided_slice %39 {offsets = [0, 0], sizes = [16, 32], strides = [1, 1]} : vector<16x128xf32> to vector<16x32xf32>
    %188 = arith.truncf %187 : vector<16x32xf32> to vector<16x32xbf16>
    %189 = vector.extract_strided_slice %188 {offsets = [0, 0], sizes = [16, 8], strides = [1, 1]} : vector<16x32xbf16> to vector<16x8xbf16>
    %190 = vector.shape_cast %189 : vector<16x8xbf16> to vector<1x2x8x8xbf16>
    %191 = vector.extract_strided_slice %188 {offsets = [0, 8], sizes = [16, 8], strides = [1, 1]} : vector<16x32xbf16> to vector<16x8xbf16>
    %192 = vector.shape_cast %191 : vector<16x8xbf16> to vector<1x2x8x8xbf16>
    %193 = vector.extract_strided_slice %188 {offsets = [0, 16], sizes = [16, 8], strides = [1, 1]} : vector<16x32xbf16> to vector<16x8xbf16>
    %194 = vector.shape_cast %193 : vector<16x8xbf16> to vector<1x2x8x8xbf16>
    %195 = vector.extract_strided_slice %188 {offsets = [0, 24], sizes = [16, 8], strides = [1, 1]} : vector<16x32xbf16> to vector<16x8xbf16>
    %196 = vector.shape_cast %195 : vector<16x8xbf16> to vector<1x2x8x8xbf16>
    %197 = tpu.concatenate %190, %192, %194, %196 in 0 : vector<1x2x8x8xbf16>, vector<1x2x8x8xbf16>, vector<1x2x8x8xbf16>, vector<1x2x8x8xbf16> -> vector<4x2x8x8xbf16>
    %198 = vector.shape_cast %197 : vector<4x2x8x8xbf16> to vector<8x8x8xbf16>
    "tpu.trace_start"() <{level = 10 : i32, message = "bqd,bkd->bqk"}> : () -> ()
    %cst_57 = arith.constant dense<0.000000e+00> : vector<8x8x16xf32>
    %199 = tpu.matmul %162, %174, %cst_57 {dimension_numbers = #tpu.dot_dimension_numbers<[2], [2], [1], [1], [0, 0, 0, 1, 1, 1], [0], [0]>} : vector<8x8x8xbf16>, vector<8x16x8xbf16>, vector<8x8x16xf32> -> vector<8x8x16xf32>
    "tpu.trace_stop"() : () -> ()
    %200 = arith.addf %199, %26 : vector<8x8x16xf32>
    %cst_58 = arith.constant dense<0xFF800000> : vector<8x8xf32>
    %201 = vector.multi_reduction <maximumf>, %200, %cst_58 [2] : vector<8x8x16xf32> to vector<8x8xf32>
    %202 = vector.shape_cast %201 : vector<8x8xf32> to vector<8x8x1xf32>
    %203 = vector.broadcast %202 : vector<8x8x1xf32> to vector<8x8x16xf32>
    %204 = arith.subf %200, %203 : vector<8x8x16xf32>
    %205 = math.exp %204 : vector<8x8x16xf32>
    %cst_59 = arith.constant dense<0.000000e+00> : vector<8x8xf32>
    %206 = vector.multi_reduction <add>, %205, %cst_59 [2] : vector<8x8x16xf32> to vector<8x8xf32>
    %207 = vector.shape_cast %206 : vector<8x8xf32> to vector<8x8x1xf32>
    %208 = vector.broadcast %207 : vector<8x8x1xf32> to vector<8x8x16xf32>
    %209 = arith.divf %205, %208 : vector<8x8x16xf32>
    %210 = arith.truncf %209 : vector<8x8x16xf32> to vector<8x8x16xbf16>
    "tpu.trace_start"() <{level = 10 : i32, message = "bqk,bkd->bqd"}> : () -> ()
    %cst_60 = arith.constant dense<0.000000e+00> : vector<8x8x8xf32>
    %211 = tpu.matmul %210, %186, %cst_60 {dimension_numbers = #tpu.dot_dimension_numbers<[2], [1], [1], [2], [0, 0, 0, 1, 1, 2], [0], [0]>} : vector<8x8x16xbf16>, vector<8x16x8xbf16>, vector<8x8x8xf32> -> vector<8x8x8xf32>
    "tpu.trace_stop"() : () -> ()
    %212 = vector.shape_cast %211 : vector<8x8x8xf32> to vector<4x16x8xf32>
    %213 = vector.extract_strided_slice %212 {offsets = [0, 0, 0], sizes = [1, 16, 8], strides = [1, 1, 1]} : vector<4x16x8xf32> to vector<1x16x8xf32>
    %214 = vector.shape_cast %213 : vector<1x16x8xf32> to vector<16x8xf32>
    %215 = vector.extract_strided_slice %212 {offsets = [1, 0, 0], sizes = [1, 16, 8], strides = [1, 1, 1]} : vector<4x16x8xf32> to vector<1x16x8xf32>
    %216 = vector.shape_cast %215 : vector<1x16x8xf32> to vector<16x8xf32>
    %217 = vector.extract_strided_slice %212 {offsets = [2, 0, 0], sizes = [1, 16, 8], strides = [1, 1, 1]} : vector<4x16x8xf32> to vector<1x16x8xf32>
    %218 = vector.shape_cast %217 : vector<1x16x8xf32> to vector<16x8xf32>
    %219 = vector.extract_strided_slice %212 {offsets = [3, 0, 0], sizes = [1, 16, 8], strides = [1, 1, 1]} : vector<4x16x8xf32> to vector<1x16x8xf32>
    %220 = vector.shape_cast %219 : vector<1x16x8xf32> to vector<16x8xf32>
    %221 = tpu.concatenate %214, %216, %218, %220 in 1 : vector<16x8xf32>, vector<16x8xf32>, vector<16x8xf32>, vector<16x8xf32> -> vector<16x32xf32>
    "tpu.trace_start"() <{level = 10 : i32, message = "bqd,bkd->bqk"}> : () -> ()
    %cst_61 = arith.constant dense<0.000000e+00> : vector<8x8x8xf32>
    %222 = tpu.matmul %162, %198, %cst_61 {dimension_numbers = #tpu.dot_dimension_numbers<[2], [2], [1], [1], [0, 0, 0, 1, 1, 1], [0], [0]>} : vector<8x8x8xbf16>, vector<8x8x8xbf16>, vector<8x8x8xf32> -> vector<8x8x8xf32>
    "tpu.trace_stop"() : () -> ()
    %223 = arith.negf %222 : vector<8x8x8xf32>
    %224 = math.exp %223 : vector<8x8x8xf32>
    %cst_62 = arith.constant 1.000000e+00 : f32
    %225 = vector.broadcast %cst_62 : f32 to vector<8x8x8xf32>
    %226 = arith.addf %225, %224 : vector<8x8x8xf32>
    %227 = arith.divf %225, %226 : vector<8x8x8xf32>
    %228 = vector.shape_cast %227 : vector<8x8x8xf32> to vector<4x2x8x8xf32>
    %229 = tpu.transpose %228, [1, 0, 2, 3] : vector<4x2x8x8xf32> -> vector<2x4x8x8xf32>
    %230 = vector.shape_cast %229 : vector<2x4x8x8xf32> to vector<2x4x64xf32>
    %c0_63 = arith.constant 0 : index
    %c0_64 = arith.constant 0 : index
    %c0_65 = arith.constant 0 : index
    %c0_66 = arith.constant 0 : index
    %231 = vector.load %arg22[%c0_63, %c0_64, %c0_65, %c0_66] : memref<2x2x4x64xf32, #tpu.memory_space<vmem>>, vector<1x2x4x64xf32>
    %232 = vector.shape_cast %231 : vector<1x2x4x64xf32> to vector<2x4x64xf32>
    %233 = vector.shape_cast %230 : vector<2x4x64xf32> to vector<1x2x4x64xf32>
    tpu.vector_store %arg22[%c0_63, %c0_64, %c0_65, %c0_66], %233 {strides = array<i32>} : memref<2x2x4x64xf32, #tpu.memory_space<vmem>>, vector<1x2x4x64xf32>,
    %234 = arith.truncf %221 : vector<16x32xf32> to vector<16x32xbf16>
    %c0_67 = arith.constant 0 : index
    %c0_68 = arith.constant 0 : index
    %c0_69 = arith.constant 0 : index
    %235 = vector.load %arg14[%c0_67, %c0_68, %c0_69] : memref<2x32x32xbf16, #tpu.memory_space<vmem>>, vector<1x32x32xbf16>
    %236 = vector.shape_cast %235 : vector<1x32x32xbf16> to vector<32x32xbf16>
    %cst_70 = arith.constant dense<0.000000e+00> : vector<16x32xf32>
    %237 = tpu.matmul %234, %236, %cst_70 {dimension_numbers = #tpu.dot_dimension_numbers<[1], [0], [0], [1], [0, 0, 1, 1], [], []>} : vector<16x32xbf16>, vector<32x32xbf16>, vector<16x32xf32> -> vector<16x32xf32>
    %c0_71 = arith.constant 0 : index
    %c0_72 = arith.constant 0 : index
    %c0_73 = arith.constant 0 : index
    %238 = vector.load %arg15[%c0_71, %c0_72, %c0_73] : memref<2x1x32xf32, #tpu.memory_space<vmem>>, vector<1x1x32xf32>
    %239 = vector.shape_cast %238 : vector<1x1x32xf32> to vector<1x32xf32>
    %240 = vector.broadcast %239 : vector<1x32xf32> to vector<16x32xf32>
    %241 = arith.addf %237, %240 : vector<16x32xf32>
    %242 = arith.addf %141, %241 : vector<16x32xf32>
    %243 = vector.extract_strided_slice %41 {offsets = [2, 0], sizes = [1, 32], strides = [1, 1]} : vector<6x32xf32> to vector<1x32xf32>
    %244 = vector.extract_strided_slice %41 {offsets = [3, 0], sizes = [1, 32], strides = [1, 1]} : vector<6x32xf32> to vector<1x32xf32>
    %cst_74 = arith.constant dense<0.000000e+00> : vector<16xf32>
    %245 = vector.multi_reduction <add>, %242, %cst_74 [1] : vector<16x32xf32> to vector<16xf32>
    %246 = vector.shape_cast %245 : vector<16xf32> to vector<16x1xf32>
    %cst_75 = arith.constant 3.200000e+01 : f32
    %247 = vector.broadcast %cst_75 : f32 to vector<16x1xf32>
    %248 = arith.divf %246, %247 : vector<16x1xf32>
    %249 = vector.broadcast %248 : vector<16x1xf32> to vector<16x32xf32>
    %250 = arith.subf %242, %249 : vector<16x32xf32>
    %251 = arith.mulf %250, %250 : vector<16x32xf32>
    %cst_76 = arith.constant dense<0.000000e+00> : vector<16xf32>
    %252 = vector.multi_reduction <add>, %251, %cst_76 [1] : vector<16x32xf32> to vector<16xf32>
    %253 = vector.shape_cast %252 : vector<16xf32> to vector<16x1xf32>
    %cst_77 = arith.constant 3.200000e+01 : f32
    %254 = vector.broadcast %cst_77 : f32 to vector<16x1xf32>
    %255 = arith.divf %253, %254 : vector<16x1xf32>
    %cst_78 = arith.constant 9.99999974E-6 : f32
    %256 = vector.broadcast %cst_78 : f32 to vector<16x1xf32>
    %257 = arith.addf %255, %256 : vector<16x1xf32>
    %258 = math.rsqrt %257 : vector<16x1xf32>
    %259 = vector.broadcast %258 : vector<16x1xf32> to vector<16x32xf32>
    %260 = arith.mulf %250, %259 : vector<16x32xf32>
    %261 = vector.broadcast %243 : vector<1x32xf32> to vector<16x32xf32>
    %262 = arith.mulf %260, %261 : vector<16x32xf32>
    %263 = vector.broadcast %244 : vector<1x32xf32> to vector<16x32xf32>
    %264 = arith.addf %262, %263 : vector<16x32xf32>
    %265 = arith.truncf %264 : vector<16x32xf32> to vector<16x32xbf16>
    %c0_79 = arith.constant 0 : index
    %c0_80 = arith.constant 0 : index
    %c0_81 = arith.constant 0 : index
    %266 = vector.load %arg16[%c0_79, %c0_80, %c0_81] : memref<2x32x64xbf16, #tpu.memory_space<vmem>>, vector<1x32x64xbf16>
    %267 = vector.shape_cast %266 : vector<1x32x64xbf16> to vector<32x64xbf16>
    %cst_82 = arith.constant dense<0.000000e+00> : vector<16x64xf32>
    %268 = tpu.matmul %265, %267, %cst_82 {dimension_numbers = #tpu.dot_dimension_numbers<[1], [0], [0], [1], [0, 0, 1, 1], [], []>} : vector<16x32xbf16>, vector<32x64xbf16>, vector<16x64xf32> -> vector<16x64xf32>
    %c0_83 = arith.constant 0 : index
    %c0_84 = arith.constant 0 : index
    %c0_85 = arith.constant 0 : index
    %269 = vector.load %arg17[%c0_83, %c0_84, %c0_85] : memref<2x1x64xf32, #tpu.memory_space<vmem>>, vector<1x1x64xf32>
    %270 = vector.shape_cast %269 : vector<1x1x64xf32> to vector<1x64xf32>
    %271 = vector.broadcast %270 : vector<1x64xf32> to vector<16x64xf32>
    %272 = arith.addf %268, %271 : vector<16x64xf32>
    %273 = arith.mulf %272, %272 : vector<16x64xf32>
    %274 = arith.mulf %272, %273 : vector<16x64xf32>
    %cst_86 = arith.constant 4.471500e-02 : f32
    %275 = vector.broadcast %cst_86 : f32 to vector<16x64xf32>
    %276 = arith.mulf %275, %274 : vector<16x64xf32>
    %277 = arith.addf %272, %276 : vector<16x64xf32>
    %cst_87 = arith.constant 0.797884583 : f32
    %278 = vector.broadcast %cst_87 : f32 to vector<16x64xf32>
    %279 = arith.mulf %278, %277 : vector<16x64xf32>
    %280 = math.tanh %279 : vector<16x64xf32>
    %cst_88 = arith.constant 1.000000e+00 : f32
    %281 = vector.broadcast %cst_88 : f32 to vector<16x64xf32>
    %282 = arith.addf %281, %280 : vector<16x64xf32>
    %cst_89 = arith.constant 5.000000e-01 : f32
    %283 = vector.broadcast %cst_89 : f32 to vector<16x64xf32>
    %284 = arith.mulf %283, %282 : vector<16x64xf32>
    %285 = arith.mulf %272, %284 : vector<16x64xf32>
    %286 = arith.truncf %285 : vector<16x64xf32> to vector<16x64xbf16>
    %c0_90 = arith.constant 0 : index
    %c0_91 = arith.constant 0 : index
    %c0_92 = arith.constant 0 : index
    %287 = vector.load %arg18[%c0_90, %c0_91, %c0_92] : memref<2x64x32xbf16, #tpu.memory_space<vmem>>, vector<1x64x32xbf16>
    %288 = vector.shape_cast %287 : vector<1x64x32xbf16> to vector<64x32xbf16>
    %cst_93 = arith.constant dense<0.000000e+00> : vector<16x32xf32>
    %289 = tpu.matmul %286, %288, %cst_93 {dimension_numbers = #tpu.dot_dimension_numbers<[1], [0], [0], [1], [0, 0, 1, 1], [], []>} : vector<16x64xbf16>, vector<64x32xbf16>, vector<16x32xf32> -> vector<16x32xf32>
    %c0_94 = arith.constant 0 : index
    %c0_95 = arith.constant 0 : index
    %c0_96 = arith.constant 0 : index
    %290 = vector.load %arg19[%c0_94, %c0_95, %c0_96] : memref<2x1x32xf32, #tpu.memory_space<vmem>>, vector<1x1x32xf32>
    %291 = vector.shape_cast %290 : vector<1x1x32xf32> to vector<1x32xf32>
    %292 = vector.broadcast %291 : vector<1x32xf32> to vector<16x32xf32>
    %293 = arith.addf %289, %292 : vector<16x32xf32>
    %294 = arith.addf %264, %293 : vector<16x32xf32>
    %295 = vector.extract_strided_slice %41 {offsets = [4, 0], sizes = [1, 32], strides = [1, 1]} : vector<6x32xf32> to vector<1x32xf32>
    %296 = vector.extract_strided_slice %41 {offsets = [5, 0], sizes = [1, 32], strides = [1, 1]} : vector<6x32xf32> to vector<1x32xf32>
    %cst_97 = arith.constant dense<0.000000e+00> : vector<16xf32>
    %297 = vector.multi_reduction <add>, %294, %cst_97 [1] : vector<16x32xf32> to vector<16xf32>
    %298 = vector.shape_cast %297 : vector<16xf32> to vector<16x1xf32>
    %cst_98 = arith.constant 3.200000e+01 : f32
    %299 = vector.broadcast %cst_98 : f32 to vector<16x1xf32>
    %300 = arith.divf %298, %299 : vector<16x1xf32>
    %301 = vector.broadcast %300 : vector<16x1xf32> to vector<16x32xf32>
    %302 = arith.subf %294, %301 : vector<16x32xf32>
    %303 = arith.mulf %302, %302 : vector<16x32xf32>
    %cst_99 = arith.constant dense<0.000000e+00> : vector<16xf32>
    %304 = vector.multi_reduction <add>, %303, %cst_99 [1] : vector<16x32xf32> to vector<16xf32>
    %305 = vector.shape_cast %304 : vector<16xf32> to vector<16x1xf32>
    %cst_100 = arith.constant 3.200000e+01 : f32
    %306 = vector.broadcast %cst_100 : f32 to vector<16x1xf32>
    %307 = arith.divf %305, %306 : vector<16x1xf32>
    %cst_101 = arith.constant 9.99999974E-6 : f32
    %308 = vector.broadcast %cst_101 : f32 to vector<16x1xf32>
    %309 = arith.addf %307, %308 : vector<16x1xf32>
    %310 = math.rsqrt %309 : vector<16x1xf32>
    %311 = vector.broadcast %310 : vector<16x1xf32> to vector<16x32xf32>
    %312 = arith.mulf %302, %311 : vector<16x32xf32>
    %313 = vector.broadcast %295 : vector<1x32xf32> to vector<16x32xf32>
    %314 = arith.mulf %312, %313 : vector<16x32xf32>
    %315 = vector.broadcast %296 : vector<1x32xf32> to vector<16x32xf32>
    %316 = arith.addf %314, %315 : vector<16x32xf32>
    %c1 = arith.constant 1 : index
    %c0_102 = arith.constant 0 : index
    %c0_103 = arith.constant 0 : index
    %317 = vector.load %arg20[%c1, %c0_102, %c0_103] : memref<2x6x32xf32, #tpu.memory_space<vmem>>, vector<1x6x32xf32>
    %318 = vector.shape_cast %317 : vector<1x6x32xf32> to vector<6x32xf32>
    %319 = arith.truncf %316 : vector<16x32xf32> to vector<16x32xbf16>
    %c1_104 = arith.constant 1 : index
    %c0_105 = arith.constant 0 : index
    %c0_106 = arith.constant 0 : index
    %320 = vector.load %arg6[%c1_104, %c0_105, %c0_106] : memref<2x32x96xbf16, #tpu.memory_space<vmem>>, vector<1x32x96xbf16>
    %321 = vector.shape_cast %320 : vector<1x32x96xbf16> to vector<32x96xbf16>
    %cst_107 = arith.constant dense<0.000000e+00> : vector<16x96xf32>
    %322 = tpu.matmul %319, %321, %cst_107 {dimension_numbers = #tpu.dot_dimension_numbers<[1], [0], [0], [1], [0, 0, 1, 1], [], []>} : vector<16x32xbf16>, vector<32x96xbf16>, vector<16x96xf32> -> vector<16x96xf32>
    %c1_108 = arith.constant 1 : index
    %c0_109 = arith.constant 0 : index
    %c0_110 = arith.constant 0 : index
    %323 = vector.load %arg7[%c1_108, %c0_109, %c0_110] : memref<2x1x96xf32, #tpu.memory_space<vmem>>, vector<1x1x96xf32>
    %324 = vector.shape_cast %323 : vector<1x1x96xf32> to vector<1x96xf32>
    %325 = vector.broadcast %324 : vector<1x96xf32> to vector<16x96xf32>
    %326 = arith.addf %322, %325 : vector<16x96xf32>
    %327 = vector.extract_strided_slice %326 {offsets = [0, 0], sizes = [16, 32], strides = [1, 1]} : vector<16x96xf32> to vector<16x32xf32>
    %cst_111 = arith.constant 0.353553385 : f32
    %328 = vector.broadcast %cst_111 : f32 to vector<16x32xf32>
    %329 = arith.mulf %327, %328 : vector<16x32xf32>
    %330 = arith.truncf %329 : vector<16x32xf32> to vector<16x32xbf16>
    %331 = vector.extract_strided_slice %330 {offsets = [0, 0], sizes = [16, 8], strides = [1, 1]} : vector<16x32xbf16> to vector<16x8xbf16>
    %332 = vector.shape_cast %331 : vector<16x8xbf16> to vector<1x2x8x8xbf16>
    %333 = vector.extract_strided_slice %330 {offsets = [0, 8], sizes = [16, 8], strides = [1, 1]} : vector<16x32xbf16> to vector<16x8xbf16>
    %334 = vector.shape_cast %333 : vector<16x8xbf16> to vector<1x2x8x8xbf16>
    %335 = vector.extract_strided_slice %330 {offsets = [0, 16], sizes = [16, 8], strides = [1, 1]} : vector<16x32xbf16> to vector<16x8xbf16>
    %336 = vector.shape_cast %335 : vector<16x8xbf16> to vector<1x2x8x8xbf16>
    %337 = vector.extract_strided_slice %330 {offsets = [0, 24], sizes = [16, 8], strides = [1, 1]} : vector<16x32xbf16> to vector<16x8xbf16>
    %338 = vector.shape_cast %337 : vector<16x8xbf16> to vector<1x2x8x8xbf16>
    %339 = tpu.concatenate %332, %334, %336, %338 in 0 : vector<1x2x8x8xbf16>, vector<1x2x8x8xbf16>, vector<1x2x8x8xbf16>, vector<1x2x8x8xbf16> -> vector<4x2x8x8xbf16>
    %340 = vector.shape_cast %339 : vector<4x2x8x8xbf16> to vector<8x8x8xbf16>
    %341 = vector.extract_strided_slice %326 {offsets = [0, 32], sizes = [16, 32], strides = [1, 1]} : vector<16x96xf32> to vector<16x32xf32>
    %342 = arith.truncf %341 : vector<16x32xf32> to vector<16x32xbf16>
    %343 = vector.extract_strided_slice %342 {offsets = [0, 0], sizes = [16, 8], strides = [1, 1]} : vector<16x32xbf16> to vector<16x8xbf16>
    %344 = vector.shape_cast %343 : vector<16x8xbf16> to vector<1x2x8x8xbf16>
    %345 = vector.extract_strided_slice %342 {offsets = [0, 8], sizes = [16, 8], strides = [1, 1]} : vector<16x32xbf16> to vector<16x8xbf16>
    %346 = vector.shape_cast %345 : vector<16x8xbf16> to vector<1x2x8x8xbf16>
    %347 = vector.extract_strided_slice %342 {offsets = [0, 16], sizes = [16, 8], strides = [1, 1]} : vector<16x32xbf16> to vector<16x8xbf16>
    %348 = vector.shape_cast %347 : vector<16x8xbf16> to vector<1x2x8x8xbf16>
    %349 = vector.extract_strided_slice %342 {offsets = [0, 24], sizes = [16, 8], strides = [1, 1]} : vector<16x32xbf16> to vector<16x8xbf16>
    %350 = vector.shape_cast %349 : vector<16x8xbf16> to vector<1x2x8x8xbf16>
    %351 = tpu.concatenate %344, %346, %348, %350 in 0 : vector<1x2x8x8xbf16>, vector<1x2x8x8xbf16>, vector<1x2x8x8xbf16>, vector<1x2x8x8xbf16> -> vector<4x2x8x8xbf16>
    %352 = vector.shape_cast %351 : vector<4x2x8x8xbf16> to vector<8x8x8xbf16>
    %353 = vector.extract_strided_slice %326 {offsets = [0, 64], sizes = [16, 32], strides = [1, 1]} : vector<16x96xf32> to vector<16x32xf32>
    %354 = arith.truncf %353 : vector<16x32xf32> to vector<16x32xbf16>
    %355 = vector.extract_strided_slice %354 {offsets = [0, 0], sizes = [16, 8], strides = [1, 1]} : vector<16x32xbf16> to vector<16x8xbf16>
    %356 = vector.shape_cast %355 : vector<16x8xbf16> to vector<1x2x8x8xbf16>
    %357 = vector.extract_strided_slice %354 {offsets = [0, 8], sizes = [16, 8], strides = [1, 1]} : vector<16x32xbf16> to vector<16x8xbf16>
    %358 = vector.shape_cast %357 : vector<16x8xbf16> to vector<1x2x8x8xbf16>
    %359 = vector.extract_strided_slice %354 {offsets = [0, 16], sizes = [16, 8], strides = [1, 1]} : vector<16x32xbf16> to vector<16x8xbf16>
    %360 = vector.shape_cast %359 : vector<16x8xbf16> to vector<1x2x8x8xbf16>
    %361 = vector.extract_strided_slice %354 {offsets = [0, 24], sizes = [16, 8], strides = [1, 1]} : vector<16x32xbf16> to vector<16x8xbf16>
    %362 = vector.shape_cast %361 : vector<16x8xbf16> to vector<1x2x8x8xbf16>
    %363 = tpu.concatenate %356, %358, %360, %362 in 0 : vector<1x2x8x8xbf16>, vector<1x2x8x8xbf16>, vector<1x2x8x8xbf16>, vector<1x2x8x8xbf16> -> vector<4x2x8x8xbf16>
    %364 = vector.shape_cast %363 : vector<4x2x8x8xbf16> to vector<8x8x8xbf16>
    "tpu.trace_start"() <{level = 10 : i32, message = "bqd,bkd->bqk"}> : () -> ()
    %cst_112 = arith.constant dense<0.000000e+00> : vector<8x8x8xf32>
    %365 = tpu.matmul %340, %352, %cst_112 {dimension_numbers = #tpu.dot_dimension_numbers<[2], [2], [1], [1], [0, 0, 0, 1, 1, 1], [0], [0]>} : vector<8x8x8xbf16>, vector<8x8x8xbf16>, vector<8x8x8xf32> -> vector<8x8x8xf32>
    "tpu.trace_stop"() : () -> ()
    %366 = arith.addf %365, %16 : vector<8x8x8xf32>
    %cst_113 = arith.constant dense<0xFF800000> : vector<8x8xf32>
    %367 = vector.multi_reduction <maximumf>, %366, %cst_113 [2] : vector<8x8x8xf32> to vector<8x8xf32>
    %368 = vector.shape_cast %367 : vector<8x8xf32> to vector<8x8x1xf32>
    %369 = vector.broadcast %368 : vector<8x8x1xf32> to vector<8x8x8xf32>
    %370 = arith.subf %366, %369 : vector<8x8x8xf32>
    %371 = math.exp %370 : vector<8x8x8xf32>
    %cst_114 = arith.constant dense<0.000000e+00> : vector<8x8xf32>
    %372 = vector.multi_reduction <add>, %371, %cst_114 [2] : vector<8x8x8xf32> to vector<8x8xf32>
    %373 = vector.shape_cast %372 : vector<8x8xf32> to vector<8x8x1xf32>
    %374 = vector.broadcast %373 : vector<8x8x1xf32> to vector<8x8x8xf32>
    %375 = arith.divf %371, %374 : vector<8x8x8xf32>
    %376 = arith.truncf %375 : vector<8x8x8xf32> to vector<8x8x8xbf16>
    "tpu.trace_start"() <{level = 10 : i32, message = "bqk,bkd->bqd"}> : () -> ()
    %cst_115 = arith.constant dense<0.000000e+00> : vector<8x8x8xf32>
    %377 = tpu.matmul %376, %364, %cst_115 {dimension_numbers = #tpu.dot_dimension_numbers<[2], [1], [1], [2], [0, 0, 0, 1, 1, 2], [0], [0]>} : vector<8x8x8xbf16>, vector<8x8x8xbf16>, vector<8x8x8xf32> -> vector<8x8x8xf32>
    "tpu.trace_stop"() : () -> ()
    %378 = vector.shape_cast %377 : vector<8x8x8xf32> to vector<4x16x8xf32>
    %379 = vector.extract_strided_slice %378 {offsets = [0, 0, 0], sizes = [1, 16, 8], strides = [1, 1, 1]} : vector<4x16x8xf32> to vector<1x16x8xf32>
    %380 = vector.shape_cast %379 : vector<1x16x8xf32> to vector<16x8xf32>
    %381 = vector.extract_strided_slice %378 {offsets = [1, 0, 0], sizes = [1, 16, 8], strides = [1, 1, 1]} : vector<4x16x8xf32> to vector<1x16x8xf32>
    %382 = vector.shape_cast %381 : vector<1x16x8xf32> to vector<16x8xf32>
    %383 = vector.extract_strided_slice %378 {offsets = [2, 0, 0], sizes = [1, 16, 8], strides = [1, 1, 1]} : vector<4x16x8xf32> to vector<1x16x8xf32>
    %384 = vector.shape_cast %383 : vector<1x16x8xf32> to vector<16x8xf32>
    %385 = vector.extract_strided_slice %378 {offsets = [3, 0, 0], sizes = [1, 16, 8], strides = [1, 1, 1]} : vector<4x16x8xf32> to vector<1x16x8xf32>
    %386 = vector.shape_cast %385 : vector<1x16x8xf32> to vector<16x8xf32>
    %387 = tpu.concatenate %380, %382, %384, %386 in 1 : vector<16x8xf32>, vector<16x8xf32>, vector<16x8xf32>, vector<16x8xf32> -> vector<16x32xf32>
    %388 = arith.truncf %387 : vector<16x32xf32> to vector<16x32xbf16>
    %c1_116 = arith.constant 1 : index
    %c0_117 = arith.constant 0 : index
    %c0_118 = arith.constant 0 : index
    %389 = vector.load %arg8[%c1_116, %c0_117, %c0_118] : memref<2x32x32xbf16, #tpu.memory_space<vmem>>, vector<1x32x32xbf16>
    %390 = vector.shape_cast %389 : vector<1x32x32xbf16> to vector<32x32xbf16>
    %cst_119 = arith.constant dense<0.000000e+00> : vector<16x32xf32>
    %391 = tpu.matmul %388, %390, %cst_119 {dimension_numbers = #tpu.dot_dimension_numbers<[1], [0], [0], [1], [0, 0, 1, 1], [], []>} : vector<16x32xbf16>, vector<32x32xbf16>, vector<16x32xf32> -> vector<16x32xf32>
    %c1_120 = arith.constant 1 : index
    %c0_121 = arith.constant 0 : index
    %c0_122 = arith.constant 0 : index
    %392 = vector.load %arg9[%c1_120, %c0_121, %c0_122] : memref<2x1x32xf32, #tpu.memory_space<vmem>>, vector<1x1x32xf32>
    %393 = vector.shape_cast %392 : vector<1x1x32xf32> to vector<1x32xf32>
    %394 = vector.broadcast %393 : vector<1x32xf32> to vector<16x32xf32>
    %395 = arith.addf %391, %394 : vector<16x32xf32>
    %396 = arith.addf %316, %395 : vector<16x32xf32>
    %397 = vector.extract_strided_slice %318 {offsets = [0, 0], sizes = [1, 32], strides = [1, 1]} : vector<6x32xf32> to vector<1x32xf32>
    %398 = vector.extract_strided_slice %318 {offsets = [1, 0], sizes = [1, 32], strides = [1, 1]} : vector<6x32xf32> to vector<1x32xf32>
    %cst_123 = arith.constant dense<0.000000e+00> : vector<16xf32>
    %399 = vector.multi_reduction <add>, %396, %cst_123 [1] : vector<16x32xf32> to vector<16xf32>
    %400 = vector.shape_cast %399 : vector<16xf32> to vector<16x1xf32>
    %cst_124 = arith.constant 3.200000e+01 : f32
    %401 = vector.broadcast %cst_124 : f32 to vector<16x1xf32>
    %402 = arith.divf %400, %401 : vector<16x1xf32>
    %403 = vector.broadcast %402 : vector<16x1xf32> to vector<16x32xf32>
    %404 = arith.subf %396, %403 : vector<16x32xf32>
    %405 = arith.mulf %404, %404 : vector<16x32xf32>
    %cst_125 = arith.constant dense<0.000000e+00> : vector<16xf32>
    %406 = vector.multi_reduction <add>, %405, %cst_125 [1] : vector<16x32xf32> to vector<16xf32>
    %407 = vector.shape_cast %406 : vector<16xf32> to vector<16x1xf32>
    %cst_126 = arith.constant 3.200000e+01 : f32
    %408 = vector.broadcast %cst_126 : f32 to vector<16x1xf32>
    %409 = arith.divf %407, %408 : vector<16x1xf32>
    %cst_127 = arith.constant 9.99999974E-6 : f32
    %410 = vector.broadcast %cst_127 : f32 to vector<16x1xf32>
    %411 = arith.addf %409, %410 : vector<16x1xf32>
    %412 = math.rsqrt %411 : vector<16x1xf32>
    %413 = vector.broadcast %412 : vector<16x1xf32> to vector<16x32xf32>
    %414 = arith.mulf %404, %413 : vector<16x32xf32>
    %415 = vector.broadcast %397 : vector<1x32xf32> to vector<16x32xf32>
    %416 = arith.mulf %414, %415 : vector<16x32xf32>
    %417 = vector.broadcast %398 : vector<1x32xf32> to vector<16x32xf32>
    %418 = arith.addf %416, %417 : vector<16x32xf32>
    %419 = arith.truncf %418 : vector<16x32xf32> to vector<16x32xbf16>
    %c1_128 = arith.constant 1 : index
    %c0_129 = arith.constant 0 : index
    %c0_130 = arith.constant 0 : index
    %420 = vector.load %arg10[%c1_128, %c0_129, %c0_130] : memref<2x32x32xbf16, #tpu.memory_space<vmem>>, vector<1x32x32xbf16>
    %421 = vector.shape_cast %420 : vector<1x32x32xbf16> to vector<32x32xbf16>
    %cst_131 = arith.constant dense<0.000000e+00> : vector<16x32xf32>
    %422 = tpu.matmul %419, %421, %cst_131 {dimension_numbers = #tpu.dot_dimension_numbers<[1], [0], [0], [1], [0, 0, 1, 1], [], []>} : vector<16x32xbf16>, vector<32x32xbf16>, vector<16x32xf32> -> vector<16x32xf32>
    %c1_132 = arith.constant 1 : index
    %c0_133 = arith.constant 0 : index
    %c0_134 = arith.constant 0 : index
    %423 = vector.load %arg11[%c1_132, %c0_133, %c0_134] : memref<2x1x32xf32, #tpu.memory_space<vmem>>, vector<1x1x32xf32>
    %424 = vector.shape_cast %423 : vector<1x1x32xf32> to vector<1x32xf32>
    %425 = vector.broadcast %424 : vector<1x32xf32> to vector<16x32xf32>
    %426 = arith.addf %422, %425 : vector<16x32xf32>
    %cst_135 = arith.constant 0.353553385 : f32
    %427 = vector.broadcast %cst_135 : f32 to vector<16x32xf32>
    %428 = arith.mulf %426, %427 : vector<16x32xf32>
    %429 = arith.truncf %428 : vector<16x32xf32> to vector<16x32xbf16>
    %430 = vector.extract_strided_slice %429 {offsets = [0, 0], sizes = [16, 8], strides = [1, 1]} : vector<16x32xbf16> to vector<16x8xbf16>
    %431 = vector.shape_cast %430 : vector<16x8xbf16> to vector<1x2x8x8xbf16>
    %432 = vector.extract_strided_slice %429 {offsets = [0, 8], sizes = [16, 8], strides = [1, 1]} : vector<16x32xbf16> to vector<16x8xbf16>
    %433 = vector.shape_cast %432 : vector<16x8xbf16> to vector<1x2x8x8xbf16>
    %434 = vector.extract_strided_slice %429 {offsets = [0, 16], sizes = [16, 8], strides = [1, 1]} : vector<16x32xbf16> to vector<16x8xbf16>
    %435 = vector.shape_cast %434 : vector<16x8xbf16> to vector<1x2x8x8xbf16>
    %436 = vector.extract_strided_slice %429 {offsets = [0, 24], sizes = [16, 8], strides = [1, 1]} : vector<16x32xbf16> to vector<16x8xbf16>
    %437 = vector.shape_cast %436 : vector<16x8xbf16> to vector<1x2x8x8xbf16>
    %438 = tpu.concatenate %431, %433, %435, %437 in 0 : vector<1x2x8x8xbf16>, vector<1x2x8x8xbf16>, vector<1x2x8x8xbf16>, vector<1x2x8x8xbf16> -> vector<4x2x8x8xbf16>
    %439 = vector.shape_cast %438 : vector<4x2x8x8xbf16> to vector<8x8x8xbf16>
    %440 = vector.extract_strided_slice %34 {offsets = [0, 64], sizes = [32, 32], strides = [1, 1]} : vector<32x128xf32> to vector<32x32xf32>
    %441 = arith.truncf %440 : vector<32x32xf32> to vector<32x32xbf16>
    %442 = vector.extract_strided_slice %441 {offsets = [0, 0], sizes = [32, 8], strides = [1, 1]} : vector<32x32xbf16> to vector<32x8xbf16>
    %443 = vector.shape_cast %442 : vector<32x8xbf16> to vector<1x2x16x8xbf16>
    %444 = vector.extract_strided_slice %441 {offsets = [0, 8], sizes = [32, 8], strides = [1, 1]} : vector<32x32xbf16> to vector<32x8xbf16>
    %445 = vector.shape_cast %444 : vector<32x8xbf16> to vector<1x2x16x8xbf16>
    %446 = vector.extract_strided_slice %441 {offsets = [0, 16], sizes = [32, 8], strides = [1, 1]} : vector<32x32xbf16> to vector<32x8xbf16>
    %447 = vector.shape_cast %446 : vector<32x8xbf16> to vector<1x2x16x8xbf16>
    %448 = vector.extract_strided_slice %441 {offsets = [0, 24], sizes = [32, 8], strides = [1, 1]} : vector<32x32xbf16> to vector<32x8xbf16>
    %449 = vector.shape_cast %448 : vector<32x8xbf16> to vector<1x2x16x8xbf16>
    %450 = tpu.concatenate %443, %445, %447, %449 in 0 : vector<1x2x16x8xbf16>, vector<1x2x16x8xbf16>, vector<1x2x16x8xbf16>, vector<1x2x16x8xbf16> -> vector<4x2x16x8xbf16>
    %451 = vector.shape_cast %450 : vector<4x2x16x8xbf16> to vector<8x16x8xbf16>
    %452 = vector.extract_strided_slice %34 {offsets = [0, 96], sizes = [32, 32], strides = [1, 1]} : vector<32x128xf32> to vector<32x32xf32>
    %453 = arith.truncf %452 : vector<32x32xf32> to vector<32x32xbf16>
    %454 = vector.extract_strided_slice %453 {offsets = [0, 0], sizes = [32, 8], strides = [1, 1]} : vector<32x32xbf16> to vector<32x8xbf16>
    %455 = vector.shape_cast %454 : vector<32x8xbf16> to vector<1x2x16x8xbf16>
    %456 = vector.extract_strided_slice %453 {offsets = [0, 8], sizes = [32, 8], strides = [1, 1]} : vector<32x32xbf16> to vector<32x8xbf16>
    %457 = vector.shape_cast %456 : vector<32x8xbf16> to vector<1x2x16x8xbf16>
    %458 = vector.extract_strided_slice %453 {offsets = [0, 16], sizes = [32, 8], strides = [1, 1]} : vector<32x32xbf16> to vector<32x8xbf16>
    %459 = vector.shape_cast %458 : vector<32x8xbf16> to vector<1x2x16x8xbf16>
    %460 = vector.extract_strided_slice %453 {offsets = [0, 24], sizes = [32, 8], strides = [1, 1]} : vector<32x32xbf16> to vector<32x8xbf16>
    %461 = vector.shape_cast %460 : vector<32x8xbf16> to vector<1x2x16x8xbf16>
    %462 = tpu.concatenate %455, %457, %459, %461 in 0 : vector<1x2x16x8xbf16>, vector<1x2x16x8xbf16>, vector<1x2x16x8xbf16>, vector<1x2x16x8xbf16> -> vector<4x2x16x8xbf16>
    %463 = vector.shape_cast %462 : vector<4x2x16x8xbf16> to vector<8x16x8xbf16>
    %464 = vector.extract_strided_slice %39 {offsets = [0, 64], sizes = [16, 32], strides = [1, 1]} : vector<16x128xf32> to vector<16x32xf32>
    %465 = arith.truncf %464 : vector<16x32xf32> to vector<16x32xbf16>
    %466 = vector.extract_strided_slice %465 {offsets = [0, 0], sizes = [16, 8], strides = [1, 1]} : vector<16x32xbf16> to vector<16x8xbf16>
    %467 = vector.shape_cast %466 : vector<16x8xbf16> to vector<1x2x8x8xbf16>
    %468 = vector.extract_strided_slice %465 {offsets = [0, 8], sizes = [16, 8], strides = [1, 1]} : vector<16x32xbf16> to vector<16x8xbf16>
    %469 = vector.shape_cast %468 : vector<16x8xbf16> to vector<1x2x8x8xbf16>
    %470 = vector.extract_strided_slice %465 {offsets = [0, 16], sizes = [16, 8], strides = [1, 1]} : vector<16x32xbf16> to vector<16x8xbf16>
    %471 = vector.shape_cast %470 : vector<16x8xbf16> to vector<1x2x8x8xbf16>
    %472 = vector.extract_strided_slice %465 {offsets = [0, 24], sizes = [16, 8], strides = [1, 1]} : vector<16x32xbf16> to vector<16x8xbf16>
    %473 = vector.shape_cast %472 : vector<16x8xbf16> to vector<1x2x8x8xbf16>
    %474 = tpu.concatenate %467, %469, %471, %473 in 0 : vector<1x2x8x8xbf16>, vector<1x2x8x8xbf16>, vector<1x2x8x8xbf16>, vector<1x2x8x8xbf16> -> vector<4x2x8x8xbf16>
    %475 = vector.shape_cast %474 : vector<4x2x8x8xbf16> to vector<8x8x8xbf16>
    "tpu.trace_start"() <{level = 10 : i32, message = "bqd,bkd->bqk"}> : () -> ()
    %cst_136 = arith.constant dense<0.000000e+00> : vector<8x8x16xf32>
    %476 = tpu.matmul %439, %451, %cst_136 {dimension_numbers = #tpu.dot_dimension_numbers<[2], [2], [1], [1], [0, 0, 0, 1, 1, 1], [0], [0]>} : vector<8x8x8xbf16>, vector<8x16x8xbf16>, vector<8x8x16xf32> -> vector<8x8x16xf32>
    "tpu.trace_stop"() : () -> ()
    %477 = arith.addf %476, %26 : vector<8x8x16xf32>
    %cst_137 = arith.constant dense<0xFF800000> : vector<8x8xf32>
    %478 = vector.multi_reduction <maximumf>, %477, %cst_137 [2] : vector<8x8x16xf32> to vector<8x8xf32>
    %479 = vector.shape_cast %478 : vector<8x8xf32> to vector<8x8x1xf32>
    %480 = vector.broadcast %479 : vector<8x8x1xf32> to vector<8x8x16xf32>
    %481 = arith.subf %477, %480 : vector<8x8x16xf32>
    %482 = math.exp %481 : vector<8x8x16xf32>
    %cst_138 = arith.constant dense<0.000000e+00> : vector<8x8xf32>
    %483 = vector.multi_reduction <add>, %482, %cst_138 [2] : vector<8x8x16xf32> to vector<8x8xf32>
    %484 = vector.shape_cast %483 : vector<8x8xf32> to vector<8x8x1xf32>
    %485 = vector.broadcast %484 : vector<8x8x1xf32> to vector<8x8x16xf32>
    %486 = arith.divf %482, %485 : vector<8x8x16xf32>
    %487 = arith.truncf %486 : vector<8x8x16xf32> to vector<8x8x16xbf16>
    "tpu.trace_start"() <{level = 10 : i32, message = "bqk,bkd->bqd"}> : () -> ()
    %cst_139 = arith.constant dense<0.000000e+00> : vector<8x8x8xf32>
    %488 = tpu.matmul %487, %463, %cst_139 {dimension_numbers = #tpu.dot_dimension_numbers<[2], [1], [1], [2], [0, 0, 0, 1, 1, 2], [0], [0]>} : vector<8x8x16xbf16>, vector<8x16x8xbf16>, vector<8x8x8xf32> -> vector<8x8x8xf32>
    "tpu.trace_stop"() : () -> ()
    %489 = vector.shape_cast %488 : vector<8x8x8xf32> to vector<4x16x8xf32>
    %490 = vector.extract_strided_slice %489 {offsets = [0, 0, 0], sizes = [1, 16, 8], strides = [1, 1, 1]} : vector<4x16x8xf32> to vector<1x16x8xf32>
    %491 = vector.shape_cast %490 : vector<1x16x8xf32> to vector<16x8xf32>
    %492 = vector.extract_strided_slice %489 {offsets = [1, 0, 0], sizes = [1, 16, 8], strides = [1, 1, 1]} : vector<4x16x8xf32> to vector<1x16x8xf32>
    %493 = vector.shape_cast %492 : vector<1x16x8xf32> to vector<16x8xf32>
    %494 = vector.extract_strided_slice %489 {offsets = [2, 0, 0], sizes = [1, 16, 8], strides = [1, 1, 1]} : vector<4x16x8xf32> to vector<1x16x8xf32>
    %495 = vector.shape_cast %494 : vector<1x16x8xf32> to vector<16x8xf32>
    %496 = vector.extract_strided_slice %489 {offsets = [3, 0, 0], sizes = [1, 16, 8], strides = [1, 1, 1]} : vector<4x16x8xf32> to vector<1x16x8xf32>
    %497 = vector.shape_cast %496 : vector<1x16x8xf32> to vector<16x8xf32>
    %498 = tpu.concatenate %491, %493, %495, %497 in 1 : vector<16x8xf32>, vector<16x8xf32>, vector<16x8xf32>, vector<16x8xf32> -> vector<16x32xf32>
    "tpu.trace_start"() <{level = 10 : i32, message = "bqd,bkd->bqk"}> : () -> ()
    %cst_140 = arith.constant dense<0.000000e+00> : vector<8x8x8xf32>
    %499 = tpu.matmul %439, %475, %cst_140 {dimension_numbers = #tpu.dot_dimension_numbers<[2], [2], [1], [1], [0, 0, 0, 1, 1, 1], [0], [0]>} : vector<8x8x8xbf16>, vector<8x8x8xbf16>, vector<8x8x8xf32> -> vector<8x8x8xf32>
    "tpu.trace_stop"() : () -> ()
    %500 = arith.negf %499 : vector<8x8x8xf32>
    %501 = math.exp %500 : vector<8x8x8xf32>
    %cst_141 = arith.constant 1.000000e+00 : f32
    %502 = vector.broadcast %cst_141 : f32 to vector<8x8x8xf32>
    %503 = arith.addf %502, %501 : vector<8x8x8xf32>
    %504 = arith.divf %502, %503 : vector<8x8x8xf32>
    %505 = vector.shape_cast %504 : vector<8x8x8xf32> to vector<4x2x8x8xf32>
    %506 = tpu.transpose %505, [1, 0, 2, 3] : vector<4x2x8x8xf32> -> vector<2x4x8x8xf32>
    %507 = vector.shape_cast %506 : vector<2x4x8x8xf32> to vector<2x4x64xf32>
    %c1_142 = arith.constant 1 : index
    %c0_143 = arith.constant 0 : index
    %c0_144 = arith.constant 0 : index
    %c0_145 = arith.constant 0 : index
    %508 = vector.load %arg22[%c1_142, %c0_143, %c0_144, %c0_145] : memref<2x2x4x64xf32, #tpu.memory_space<vmem>>, vector<1x2x4x64xf32>
    %509 = vector.shape_cast %508 : vector<1x2x4x64xf32> to vector<2x4x64xf32>
    %510 = vector.shape_cast %507 : vector<2x4x64xf32> to vector<1x2x4x64xf32>
    tpu.vector_store %arg22[%c1_142, %c0_143, %c0_144, %c0_145], %510 {strides = array<i32>} : memref<2x2x4x64xf32, #tpu.memory_space<vmem>>, vector<1x2x4x64xf32>,
    %511 = arith.truncf %498 : vector<16x32xf32> to vector<16x32xbf16>
    %c1_146 = arith.constant 1 : index
    %c0_147 = arith.constant 0 : index
    %c0_148 = arith.constant 0 : index
    %512 = vector.load %arg14[%c1_146, %c0_147, %c0_148] : memref<2x32x32xbf16, #tpu.memory_space<vmem>>, vector<1x32x32xbf16>
    %513 = vector.shape_cast %512 : vector<1x32x32xbf16> to vector<32x32xbf16>
    %cst_149 = arith.constant dense<0.000000e+00> : vector<16x32xf32>
    %514 = tpu.matmul %511, %513, %cst_149 {dimension_numbers = #tpu.dot_dimension_numbers<[1], [0], [0], [1], [0, 0, 1, 1], [], []>} : vector<16x32xbf16>, vector<32x32xbf16>, vector<16x32xf32> -> vector<16x32xf32>
    %c1_150 = arith.constant 1 : index
    %c0_151 = arith.constant 0 : index
    %c0_152 = arith.constant 0 : index
    %515 = vector.load %arg15[%c1_150, %c0_151, %c0_152] : memref<2x1x32xf32, #tpu.memory_space<vmem>>, vector<1x1x32xf32>
    %516 = vector.shape_cast %515 : vector<1x1x32xf32> to vector<1x32xf32>
    %517 = vector.broadcast %516 : vector<1x32xf32> to vector<16x32xf32>
    %518 = arith.addf %514, %517 : vector<16x32xf32>
    %519 = arith.addf %418, %518 : vector<16x32xf32>
    %520 = vector.extract_strided_slice %318 {offsets = [2, 0], sizes = [1, 32], strides = [1, 1]} : vector<6x32xf32> to vector<1x32xf32>
    %521 = vector.extract_strided_slice %318 {offsets = [3, 0], sizes = [1, 32], strides = [1, 1]} : vector<6x32xf32> to vector<1x32xf32>
    %cst_153 = arith.constant dense<0.000000e+00> : vector<16xf32>
    %522 = vector.multi_reduction <add>, %519, %cst_153 [1] : vector<16x32xf32> to vector<16xf32>
    %523 = vector.shape_cast %522 : vector<16xf32> to vector<16x1xf32>
    %cst_154 = arith.constant 3.200000e+01 : f32
    %524 = vector.broadcast %cst_154 : f32 to vector<16x1xf32>
    %525 = arith.divf %523, %524 : vector<16x1xf32>
    %526 = vector.broadcast %525 : vector<16x1xf32> to vector<16x32xf32>
    %527 = arith.subf %519, %526 : vector<16x32xf32>
    %528 = arith.mulf %527, %527 : vector<16x32xf32>
    %cst_155 = arith.constant dense<0.000000e+00> : vector<16xf32>
    %529 = vector.multi_reduction <add>, %528, %cst_155 [1] : vector<16x32xf32> to vector<16xf32>
    %530 = vector.shape_cast %529 : vector<16xf32> to vector<16x1xf32>
    %cst_156 = arith.constant 3.200000e+01 : f32
    %531 = vector.broadcast %cst_156 : f32 to vector<16x1xf32>
    %532 = arith.divf %530, %531 : vector<16x1xf32>
    %cst_157 = arith.constant 9.99999974E-6 : f32
    %533 = vector.broadcast %cst_157 : f32 to vector<16x1xf32>
    %534 = arith.addf %532, %533 : vector<16x1xf32>
    %535 = math.rsqrt %534 : vector<16x1xf32>
    %536 = vector.broadcast %535 : vector<16x1xf32> to vector<16x32xf32>
    %537 = arith.mulf %527, %536 : vector<16x32xf32>
    %538 = vector.broadcast %520 : vector<1x32xf32> to vector<16x32xf32>
    %539 = arith.mulf %537, %538 : vector<16x32xf32>
    %540 = vector.broadcast %521 : vector<1x32xf32> to vector<16x32xf32>
    %541 = arith.addf %539, %540 : vector<16x32xf32>
    %542 = arith.truncf %541 : vector<16x32xf32> to vector<16x32xbf16>
    %c1_158 = arith.constant 1 : index
    %c0_159 = arith.constant 0 : index
    %c0_160 = arith.constant 0 : index
    %543 = vector.load %arg16[%c1_158, %c0_159, %c0_160] : memref<2x32x64xbf16, #tpu.memory_space<vmem>>, vector<1x32x64xbf16>
    %544 = vector.shape_cast %543 : vector<1x32x64xbf16> to vector<32x64xbf16>
    %cst_161 = arith.constant dense<0.000000e+00> : vector<16x64xf32>
    %545 = tpu.matmul %542, %544, %cst_161 {dimension_numbers = #tpu.dot_dimension_numbers<[1], [0], [0], [1], [0, 0, 1, 1], [], []>} : vector<16x32xbf16>, vector<32x64xbf16>, vector<16x64xf32> -> vector<16x64xf32>
    %c1_162 = arith.constant 1 : index
    %c0_163 = arith.constant 0 : index
    %c0_164 = arith.constant 0 : index
    %546 = vector.load %arg17[%c1_162, %c0_163, %c0_164] : memref<2x1x64xf32, #tpu.memory_space<vmem>>, vector<1x1x64xf32>
    %547 = vector.shape_cast %546 : vector<1x1x64xf32> to vector<1x64xf32>
    %548 = vector.broadcast %547 : vector<1x64xf32> to vector<16x64xf32>
    %549 = arith.addf %545, %548 : vector<16x64xf32>
    %550 = arith.mulf %549, %549 : vector<16x64xf32>
    %551 = arith.mulf %549, %550 : vector<16x64xf32>
    %cst_165 = arith.constant 4.471500e-02 : f32
    %552 = vector.broadcast %cst_165 : f32 to vector<16x64xf32>
    %553 = arith.mulf %552, %551 : vector<16x64xf32>
    %554 = arith.addf %549, %553 : vector<16x64xf32>
    %cst_166 = arith.constant 0.797884583 : f32
    %555 = vector.broadcast %cst_166 : f32 to vector<16x64xf32>
    %556 = arith.mulf %555, %554 : vector<16x64xf32>
    %557 = math.tanh %556 : vector<16x64xf32>
    %cst_167 = arith.constant 1.000000e+00 : f32
    %558 = vector.broadcast %cst_167 : f32 to vector<16x64xf32>
    %559 = arith.addf %558, %557 : vector<16x64xf32>
    %cst_168 = arith.constant 5.000000e-01 : f32
    %560 = vector.broadcast %cst_168 : f32 to vector<16x64xf32>
    %561 = arith.mulf %560, %559 : vector<16x64xf32>
    %562 = arith.mulf %549, %561 : vector<16x64xf32>
    %563 = arith.truncf %562 : vector<16x64xf32> to vector<16x64xbf16>
    %c1_169 = arith.constant 1 : index
    %c0_170 = arith.constant 0 : index
    %c0_171 = arith.constant 0 : index
    %564 = vector.load %arg18[%c1_169, %c0_170, %c0_171] : memref<2x64x32xbf16, #tpu.memory_space<vmem>>, vector<1x64x32xbf16>
    %565 = vector.shape_cast %564 : vector<1x64x32xbf16> to vector<64x32xbf16>
    %cst_172 = arith.constant dense<0.000000e+00> : vector<16x32xf32>
    %566 = tpu.matmul %563, %565, %cst_172 {dimension_numbers = #tpu.dot_dimension_numbers<[1], [0], [0], [1], [0, 0, 1, 1], [], []>} : vector<16x64xbf16>, vector<64x32xbf16>, vector<16x32xf32> -> vector<16x32xf32>
    %c1_173 = arith.constant 1 : index
    %c0_174 = arith.constant 0 : index
    %c0_175 = arith.constant 0 : index
    %567 = vector.load %arg19[%c1_173, %c0_174, %c0_175] : memref<2x1x32xf32, #tpu.memory_space<vmem>>, vector<1x1x32xf32>
    %568 = vector.shape_cast %567 : vector<1x1x32xf32> to vector<1x32xf32>
    %569 = vector.broadcast %568 : vector<1x32xf32> to vector<16x32xf32>
    %570 = arith.addf %566, %569 : vector<16x32xf32>
    %571 = arith.addf %541, %570 : vector<16x32xf32>
    %572 = vector.extract_strided_slice %318 {offsets = [4, 0], sizes = [1, 32], strides = [1, 1]} : vector<6x32xf32> to vector<1x32xf32>
    %573 = vector.extract_strided_slice %318 {offsets = [5, 0], sizes = [1, 32], strides = [1, 1]} : vector<6x32xf32> to vector<1x32xf32>
    %cst_176 = arith.constant dense<0.000000e+00> : vector<16xf32>
    %574 = vector.multi_reduction <add>, %571, %cst_176 [1] : vector<16x32xf32> to vector<16xf32>
    %575 = vector.shape_cast %574 : vector<16xf32> to vector<16x1xf32>
    %cst_177 = arith.constant 3.200000e+01 : f32
    %576 = vector.broadcast %cst_177 : f32 to vector<16x1xf32>
    %577 = arith.divf %575, %576 : vector<16x1xf32>
    %578 = vector.broadcast %577 : vector<16x1xf32> to vector<16x32xf32>
    %579 = arith.subf %571, %578 : vector<16x32xf32>
    %580 = arith.mulf %579, %579 : vector<16x32xf32>
    %cst_178 = arith.constant dense<0.000000e+00> : vector<16xf32>
    %581 = vector.multi_reduction <add>, %580, %cst_178 [1] : vector<16x32xf32> to vector<16xf32>
    %582 = vector.shape_cast %581 : vector<16xf32> to vector<16x1xf32>
    %cst_179 = arith.constant 3.200000e+01 : f32
    %583 = vector.broadcast %cst_179 : f32 to vector<16x1xf32>
    %584 = arith.divf %582, %583 : vector<16x1xf32>
    %cst_180 = arith.constant 9.99999974E-6 : f32
    %585 = vector.broadcast %cst_180 : f32 to vector<16x1xf32>
    %586 = arith.addf %584, %585 : vector<16x1xf32>
    %587 = math.rsqrt %586 : vector<16x1xf32>
    %588 = vector.broadcast %587 : vector<16x1xf32> to vector<16x32xf32>
    %589 = arith.mulf %579, %588 : vector<16x32xf32>
    %590 = vector.broadcast %572 : vector<1x32xf32> to vector<16x32xf32>
    %591 = arith.mulf %589, %590 : vector<16x32xf32>
    %592 = vector.broadcast %573 : vector<1x32xf32> to vector<16x32xf32>
    %593 = arith.addf %591, %592 : vector<16x32xf32>
    %c0_181 = arith.constant 0 : index
    %c0_182 = arith.constant 0 : index
    %594 = vector.load %arg21[%c0_181, %c0_182] : memref<16x32xf32, #tpu.memory_space<vmem>>, vector<16x32xf32>
    tpu.vector_store %arg21[%c0_181, %c0_182], %593 {strides = array<i32>} : memref<16x32xf32, #tpu.memory_space<vmem>>, vector<16x32xf32>,
    return
  }
  func.func @transform_0(%arg0: i32) -> (i32, i32) {
    %c0_i32 = arith.constant 0 : i32
    %c0_i32_0 = arith.constant 0 : i32
    return %arg0, %c0_i32 : i32, i32
  }
  func.func @transform_1(%arg0: i32) -> (i32, i32) {
    %c0_i32 = arith.constant 0 : i32
    %c0_i32_0 = arith.constant 0 : i32
    return %arg0, %c0_i32 : i32, i32
  }
  func.func @transform_2(%arg0: i32) -> (i32, i32) {
    %c0_i32 = arith.constant 0 : i32
    %c0_i32_0 = arith.constant 0 : i32
    return %arg0, %c0_i32 : i32, i32
  }
  func.func @transform_3(%arg0: i32) -> (i32, i32, i32) {
    %c0_i32 = arith.constant 0 : i32
    %c0_i32_0 = arith.constant 0 : i32
    %c0_i32_1 = arith.constant 0 : i32
    return %arg0, %c0_i32, %c0_i32_0 : i32, i32, i32
  }
  func.func @transform_4(%arg0: i32) -> (i32, i32, i32) {
    %c0_i32 = arith.constant 0 : i32
    %c0_i32_0 = arith.constant 0 : i32
    %c0_i32_1 = arith.constant 0 : i32
    return %arg0, %c0_i32, %c0_i32_0 : i32, i32, i32
  }
  func.func @transform_5(%arg0: i32) -> (i32, i32, i32) {
    %c0_i32 = arith.constant 0 : i32
    %c0_i32_0 = arith.constant 0 : i32
    %c0_i32_1 = arith.constant 0 : i32
    %c0_i32_2 = arith.constant 0 : i32
    return %c0_i32, %c0_i32_0, %c0_i32_1 : i32, i32, i32
  }
  func.func @transform_6(%arg0: i32) -> (i32, i32, i32) {
    %c0_i32 = arith.constant 0 : i32
    %c0_i32_0 = arith.constant 0 : i32
    %c0_i32_1 = arith.constant 0 : i32
    %c0_i32_2 = arith.constant 0 : i32
    return %c0_i32, %c0_i32_0, %c0_i32_1 : i32, i32, i32
  }
  func.func @transform_7(%arg0: i32) -> (i32, i32, i32) {
    %c0_i32 = arith.constant 0 : i32
    %c0_i32_0 = arith.constant 0 : i32
    %c0_i32_1 = arith.constant 0 : i32
    %c0_i32_2 = arith.constant 0 : i32
    return %c0_i32, %c0_i32_0, %c0_i32_1 : i32, i32, i32
  }
  func.func @transform_8(%arg0: i32) -> (i32, i32, i32) {
    %c0_i32 = arith.constant 0 : i32
    %c0_i32_0 = arith.constant 0 : i32
    %c0_i32_1 = arith.constant 0 : i32
    %c0_i32_2 = arith.constant 0 : i32
    return %c0_i32, %c0_i32_0, %c0_i32_1 : i32, i32, i32
  }
  func.func @transform_9(%arg0: i32) -> (i32, i32, i32) {
    %c0_i32 = arith.constant 0 : i32
    %c0_i32_0 = arith.constant 0 : i32
    %c0_i32_1 = arith.constant 0 : i32
    %c0_i32_2 = arith.constant 0 : i32
    return %c0_i32, %c0_i32_0, %c0_i32_1 : i32, i32, i32
  }
  func.func @transform_10(%arg0: i32) -> (i32, i32, i32) {
    %c0_i32 = arith.constant 0 : i32
    %c0_i32_0 = arith.constant 0 : i32
    %c0_i32_1 = arith.constant 0 : i32
    %c0_i32_2 = arith.constant 0 : i32
    return %c0_i32, %c0_i32_0, %c0_i32_1 : i32, i32, i32
  }
  func.func @transform_11(%arg0: i32) -> (i32, i32) {
    %c0_i32 = arith.constant 0 : i32
    %c0_i32_0 = arith.constant 0 : i32
    %c0_i32_1 = arith.constant 0 : i32
    return %c0_i32, %c0_i32_0 : i32, i32
  }
  func.func @transform_12(%arg0: i32) -> (i32, i32) {
    %c0_i32 = arith.constant 0 : i32
    %c0_i32_0 = arith.constant 0 : i32
    %c0_i32_1 = arith.constant 0 : i32
    return %c0_i32, %c0_i32_0 : i32, i32
  }
  func.func @transform_13(%arg0: i32) -> (i32, i32, i32) {
    %c0_i32 = arith.constant 0 : i32
    %c0_i32_0 = arith.constant 0 : i32
    %c0_i32_1 = arith.constant 0 : i32
    %c0_i32_2 = arith.constant 0 : i32
    return %c0_i32, %c0_i32_0, %c0_i32_1 : i32, i32, i32
  }
  func.func @transform_14(%arg0: i32) -> (i32, i32, i32) {
    %c0_i32 = arith.constant 0 : i32
    %c0_i32_0 = arith.constant 0 : i32
    %c0_i32_1 = arith.constant 0 : i32
    %c0_i32_2 = arith.constant 0 : i32
    return %c0_i32, %c0_i32_0, %c0_i32_1 : i32, i32, i32
  }
  func.func @transform_15(%arg0: i32) -> (i32, i32, i32) {
    %c0_i32 = arith.constant 0 : i32
    %c0_i32_0 = arith.constant 0 : i32
    %c0_i32_1 = arith.constant 0 : i32
    %c0_i32_2 = arith.constant 0 : i32
    return %c0_i32, %c0_i32_0, %c0_i32_1 : i32, i32, i32
  }
  func.func @transform_16(%arg0: i32) -> (i32, i32, i32) {
    %c0_i32 = arith.constant 0 : i32
    %c0_i32_0 = arith.constant 0 : i32
    %c0_i32_1 = arith.constant 0 : i32
    %c0_i32_2 = arith.constant 0 : i32
    return %c0_i32, %c0_i32_0, %c0_i32_1 : i32, i32, i32
  }
  func.func @transform_17(%arg0: i32) -> (i32, i32, i32) {
    %c0_i32 = arith.constant 0 : i32
    %c0_i32_0 = arith.constant 0 : i32
    %c0_i32_1 = arith.constant 0 : i32
    %c0_i32_2 = arith.constant 0 : i32
    return %c0_i32, %c0_i32_0, %c0_i32_1 : i32, i32, i32
  }
  func.func @transform_18(%arg0: i32) -> (i32, i32, i32) {
    %c0_i32 = arith.constant 0 : i32
    %c0_i32_0 = arith.constant 0 : i32
    %c0_i32_1 = arith.constant 0 : i32
    %c0_i32_2 = arith.constant 0 : i32
    return %c0_i32, %c0_i32_0, %c0_i32_1 : i32, i32, i32
  }
  func.func @transform_19(%arg0: i32) -> (i32, i32, i32) {
    %c0_i32 = arith.constant 0 : i32
    %c0_i32_0 = arith.constant 0 : i32
    %c0_i32_1 = arith.constant 0 : i32
    %c0_i32_2 = arith.constant 0 : i32
    return %c0_i32, %c0_i32_0, %c0_i32_1 : i32, i32, i32
  }
  func.func @transform_20(%arg0: i32) -> (i32, i32) {
    %c0_i32 = arith.constant 0 : i32
    %c0_i32_0 = arith.constant 0 : i32
    return %arg0, %c0_i32 : i32, i32
  }
  func.func @transform_21(%arg0: i32) -> (i32, i32, i32, i32) {
    %c0_i32 = arith.constant 0 : i32
    %c0_i32_0 = arith.constant 0 : i32
    %c0_i32_1 = arith.constant 0 : i32
    %c0_i32_2 = arith.constant 0 : i32
    return %c0_i32, %arg0, %c0_i32_0, %c0_i32_1 : i32, i32, i32, i32
  }
}

</mosaic_0001>

<llo_original>
// kernel: _lambda_.1
$region0: #{_lambda_.1}
  #allocation0 [shape = 'u32[]', space=smem, size = 0x4, offset = 0x4, fixed_abs, tag = 'smem constant byte address 0x4 - core index']
  #allocation1 [shape = 'u32[72,128]{1,0:T(1,128)}', space=vmem, size = 0x9000, scoped, tag = 'internal scratch']
  %s0 = inlined_call_operand.vmem [shape: f32[16,32], index: 0, kind: input, shape index: {}]
  %s1 = inlined_call_operand.vmem [shape: f32[32,32], index: 1, kind: input, shape index: {}]
  %s2 = inlined_call_operand.vmem [shape: f32[16,32], index: 2, kind: input, shape index: {}]
  %s3 = inlined_call_operand.vmem [shape: f32[2,1,8], index: 3, kind: input, shape index: {}]
  %s4 = inlined_call_operand.vmem [shape: f32[2,1,16], index: 4, kind: input, shape index: {}]
  %s5 = inlined_call_operand.vmem [shape: bf16[2,32,96], index: 5, kind: input, shape index: {}]
  %s6 = inlined_call_operand.vmem [shape: f32[2,1,96], index: 6, kind: input, shape index: {}]
  %s7 = inlined_call_operand.vmem [shape: bf16[2,32,32], index: 7, kind: input, shape index: {}]
  %s8 = inlined_call_operand.vmem [shape: f32[2,1,32], index: 8, kind: input, shape index: {}, may-alias: {8,10,14,18}]
  %s9 = inlined_call_operand.vmem [shape: bf16[2,32,32], index: 9, kind: input, shape index: {}]
  %s10 = inlined_call_operand.vmem [shape: f32[2,1,32], index: 10, kind: input, shape index: {}, may-alias: {8,10,14,18}]
  %s11 = inlined_call_operand.vmem [shape: bf16[32,128], index: 11, kind: input, shape index: {}]
  %s12 = inlined_call_operand.vmem [shape: f32[1,128], index: 12, kind: input, shape index: {}]
  %s13 = inlined_call_operand.vmem [shape: bf16[2,32,32], index: 13, kind: input, shape index: {}]
  %s14 = inlined_call_operand.vmem [shape: f32[2,1,32], index: 14, kind: input, shape index: {}, may-alias: {8,10,14,18}]
  %s15 = inlined_call_operand.vmem [shape: bf16[2,32,64], index: 15, kind: input, shape index: {}]
  %s16 = inlined_call_operand.vmem [shape: f32[2,1,64], index: 16, kind: input, shape index: {}]
  %s17 = inlined_call_operand.vmem [shape: bf16[2,64,32], index: 17, kind: input, shape index: {}]
  %s18 = inlined_call_operand.vmem [shape: f32[2,1,32], index: 18, kind: input, shape index: {}, may-alias: {8,10,14,18}]
  %s19 = inlined_call_operand.vmem [shape: f32[2,6,32], index: 19, kind: input, shape index: {}]
  %s20 = inlined_call_operand.hbm [shape: f32[16,32], index: 20, kind: output, shape index: {0}]
  %s21 = inlined_call_operand.vmem [shape: f32[2,2,4,64], index: 21, kind: output, shape index: {1}]
  %22 = xla_tuple %s20, %s21
  %s23 = sld [smem:[#allocation0]]
  $region98: #{_lambda_.1} parent=0
    _
  %s25 = ssub.s32 1, %s23
  %s26 = scalar_select 0, %s25, %s23
  $region1: #{_lambda_.1} parent=0
    #allocation2 [shape = 'u8[8192]{0}', space=vmem, size = 0x2000, scoped, tag = 'output window, operand 0, single buffered']
    #allocation3 [shape = 's32[1]{0}', space=sflag, size = 0x4, scoped, tag = 'scoped memory for _lambda_.1']
    %27 = vsyncpa [#allocation3], 0
    // Predicated region
    $region2: #{_lambda_.1} parent=1 // pred_check
      _
    $region3: #{_lambda_.1} parent=1 // pred_check_branch
      %29 = sbr.rel (0) target = $region5
    $region4: #{_lambda_.1} parent=1 // pred_region
      _
    $region5: #{_lambda_.1} parent=1 // pred_fallthru
      _
    // Predicated region
    $region6: #{_lambda_.1} parent=1 // pred_check
      _
    $region7: #{_lambda_.1} parent=1 // pred_check_branch
      %31 = sbr.rel (0) target = $region9
    $region8: #{_lambda_.1} parent=1 // pred_region
      _
    $region9: #{_lambda_.1} parent=1 // pred_fallthru
      _
    // Predicated region
    $region10: #{_lambda_.1} parent=1 // pred_check
      _
    $region11: #{_lambda_.1} parent=1 // pred_check_branch
      %33 = sbr.rel (0) target = $region13
    $region12: #{_lambda_.1} parent=1 // pred_region
      _
    $region13: #{_lambda_.1} parent=1 // pred_fallthru
      _
    // Predicated region
    $region14: #{_lambda_.1} parent=1 // pred_check
      _
    $region15: #{_lambda_.1} parent=1 // pred_check_branch
      %35 = sbr.rel (0) target = $region17
    $region16: #{_lambda_.1} parent=1 // pred_region
      _
    $region17: #{_lambda_.1} parent=1 // pred_fallthru
      _
    // Predicated region
    $region18: #{_lambda_.1} parent=1 // pred_check
      _
    $region19: #{_lambda_.1} parent=1 // pred_check_branch
      %37 = sbr.rel (0) target = $region21
    $region20: #{_lambda_.1} parent=1 // pred_region
      _
    $region21: #{_lambda_.1} parent=1 // pred_fallthru
      _
    // Predicated region
    $region22: #{_lambda_.1} parent=1 // pred_check
      _
    $region23: #{_lambda_.1} parent=1 // pred_check_branch
      %39 = sbr.rel (0) target = $region25
    $region24: #{_lambda_.1} parent=1 // pred_region
      _
    $region25: #{_lambda_.1} parent=1 // pred_fallthru
      _
    // Predicated region
    $region26: #{_lambda_.1} parent=1 // pred_check
      _
    $region27: #{_lambda_.1} parent=1 // pred_check_branch
      %41 = sbr.rel (0) target = $region29
    $region28: #{_lambda_.1} parent=1 // pred_region
      _
    $region29: #{_lambda_.1} parent=1 // pred_fallthru
      _
    // Predicated region
    $region30: #{_lambda_.1} parent=1 // pred_check
      _
    $region31: #{_lambda_.1} parent=1 // pred_check_branch
      %43 = sbr.rel (0) target = $region33
    $region32: #{_lambda_.1} parent=1 // pred_region
      _
    $region33: #{_lambda_.1} parent=1 // pred_fallthru
      _
    // Predicated region
    $region34: #{_lambda_.1} parent=1 // pred_check
      _
    $region35: #{_lambda_.1} parent=1 // pred_check_branch
      %45 = sbr.rel (0) target = $region37
    $region36: #{_lambda_.1} parent=1 // pred_region
      _
    $region37: #{_lambda_.1} parent=1 // pred_fallthru
      _
    // Predicated region
    $region38: #{_lambda_.1} parent=1 // pred_check
      _
    $region39: #{_lambda_.1} parent=1 // pred_check_branch
      %47 = sbr.rel (0) target = $region41
    $region40: #{_lambda_.1} parent=1 // pred_region
      _
    $region41: #{_lambda_.1} parent=1 // pred_fallthru
      _
    // Predicated region
    $region42: #{_lambda_.1} parent=1 // pred_check
      _
    $region43: #{_lambda_.1} parent=1 // pred_check_branch
      %49 = sbr.rel (0) target = $region45
    $region44: #{_lambda_.1} parent=1 // pred_region
      _
    $region45: #{_lambda_.1} parent=1 // pred_fallthru
      _
    // Predicated region
    $region46: #{_lambda_.1} parent=1 // pred_check
      _
    $region47: #{_lambda_.1} parent=1 // pred_check_branch
      %51 = sbr.rel (0) target = $region49
    $region48: #{_lambda_.1} parent=1 // pred_region
      _
    $region49: #{_lambda_.1} parent=1 // pred_fallthru
      _
    // Predicated region
    $region50: #{_lambda_.1} parent=1 // pred_check
      _
    $region51: #{_lambda_.1} parent=1 // pred_check_branch
      %53 = sbr.rel (0) target = $region53
    $region52: #{_lambda_.1} parent=1 // pred_region
      _
    $region53: #{_lambda_.1} parent=1 // pred_fallthru
      _
    // Predicated region
    $region54: #{_lambda_.1} parent=1 // pred_check
      _
    $region55: #{_lambda_.1} parent=1 // pred_check_branch
      %55 = sbr.rel (0) target = $region57
    $region56: #{_lambda_.1} parent=1 // pred_region
      _
    $region57: #{_lambda_.1} parent=1 // pred_fallthru
      _
    // Predicated region
    $region58: #{_lambda_.1} parent=1 // pred_check
      _
    $region59: #{_lambda_.1} parent=1 // pred_check_branch
      %57 = sbr.rel (0) target = $region61
    $region60: #{_lambda_.1} parent=1 // pred_region
      _
    $region61: #{_lambda_.1} parent=1 // pred_fallthru
      _
    // Predicated region
    $region62: #{_lambda_.1} parent=1 // pred_check
      _
    $region63: #{_lambda_.1} parent=1 // pred_check_branch
      %59 = sbr.rel (0) target = $region65
    $region64: #{_lambda_.1} parent=1 // pred_region
      _
    $region65: #{_lambda_.1} parent=1 // pred_fallthru
      _
    // Predicated region
    $region66: #{_lambda_.1} parent=1 // pred_check
      _
    $region67: #{_lambda_.1} parent=1 // pred_check_branch
      %61 = sbr.rel (0) target = $region69
    $region68: #{_lambda_.1} parent=1 // pred_region
      _
    $region69: #{_lambda_.1} parent=1 // pred_fallthru
      _
    // Predicated region
    $region70: #{_lambda_.1} parent=1 // pred_check
      _
    $region71: #{_lambda_.1} parent=1 // pred_check_branch
      %63 = sbr.rel (0) target = $region73
    $region72: #{_lambda_.1} parent=1 // pred_region
      _
    $region73: #{_lambda_.1} parent=1 // pred_fallthru
      _
    // Predicated region
    $region74: #{_lambda_.1} parent=1 // pred_check
      _
    $region75: #{_lambda_.1} parent=1 // pred_check_branch
      %65 = sbr.rel (0) target = $region77
    $region76: #{_lambda_.1} parent=1 // pred_region
      _
    $region77: #{_lambda_.1} parent=1 // pred_fallthru
      _
    // Predicated region
    $region78: #{_lambda_.1} parent=1 // pred_check
      _
    $region79: #{_lambda_.1} parent=1 // pred_check_branch
      %67 = sbr.rel (0) target = $region81
    $region80: #{_lambda_.1} parent=1 // pred_region
      _
    $region81: #{_lambda_.1} parent=1 // pred_fallthru
      _
    %v69 = vlaneseq
    %v70 = vshrl.u32 %v69, 7
    %v71 = vlaneseq
    %v72 = vand.u32 %v71, 127
    %vm73 = vcmp.le.s32.totalorder %v72, %v70
    %v74 = vld [vmem:[%s3] sm:$0x1]
    %v75 = vld [vmem:[%s3 + $0x1] sm:$0x1]
    %vm76 = vcmp.gt.f32.partialorder %v74, 0.5
    %vm77 = vcmp.gt.f32.partialorder %v75, 0.5
    %v78 = vsel %vm73, 1, 0
    %vm79 = vcmp.eq.s32.totalorder %v78, 1
    %v80 = vsel %vm76, 1, 0
    %v81 = vsel %vm77, 1, 0
    %v82 = vperm.slane %v80, 0
    %v83 = vperm.slane %v81, 0
    %vm84 = vcmp.eq.s32.totalorder %v82, 1
    %vm85 = vcmp.eq.s32.totalorder %v83, 1
    %vm86 = vmand %vm79, %vm84
    %vm87 = vmand %vm79, %vm85
    %v88 = vsel %vm86, 0.0, -3.4028235e+38
    %v89 = vsel %vm87, 0.0, -3.4028235e+38
    %v90 = vld [vmem:[%s4] sm:$0x1]
    %v91 = vld [vmem:[%s4 + $0x1] sm:$0x1]
    %vm92 = vcmp.gt.f32.partialorder %v90, 0.5
    %vm93 = vcmp.gt.f32.partialorder %v91, 0.5
    %v94 = vsel %vm92, 0.0, -3.4028235e+38
    %v95 = vsel %vm93, 0.0, -3.4028235e+38
    %v98 = vperm.slane %v94, 0
    %v99 = vperm.slane %v95, 0
    %v102 = vld [vmem:[%s0] sm:$0xff]
    %v103 = vld [vmem:[%s0 + $0x8] sm:$0xff]
    %v104 = vld [vmem:[%s11] sm:$0xf]
    %v105 = vld [vmem:[%s11 + $0x4] sm:$0xf]
    %v106 = vld [vmem:[%s11 + $0x8] sm:$0xf]
    %v107 = vld [vmem:[%s11 + $0xc] sm:$0xf]
    %v108 = vld [vmem:[%s12] sm:$0x1]
    %v109 = vld [vmem:[%s1] sm:$0xff]
    %v110 = vld [vmem:[%s1 + $0x8] sm:$0xff]
    %v111 = vld [vmem:[%s1 + $0x10] sm:$0xff]
    %v112 = vld [vmem:[%s1 + $0x18] sm:$0xff]
    %v113 = vpack.c.bf16 %v110, %v109
    %v114 = vpack.c.bf16 %v112, %v111
    %v116 = vperm.slane %v108, 0
    %v122 = vunpack.c.l.b16 %v104
    %v123 = vunpack.c.l.b16 %v105
    %v124 = vunpack.c.l.b16 %v106
    %v125 = vunpack.c.l.b16 %v107
    %v126 = vpack.c.b16 %v123, %v122
    %v127 = vpack.c.b16 %v125, %v124
    %vm130 = vcmask 261120
    %v132 = vsel %vm130, %v113, 0
    %v135 = vsel %vm130, %v114, 0
    %137 = vmatpush.bf16.msra.mxu0 0
    %138 = vmatpush.bf16.msra.mxu0 0
    %139 = vmatpush.bf16.msra.mxu0 0
    %140 = vmatpush.bf16.msra.mxu0 0
    %141 = vmatpush.bf16.msra.mxu0 0
    %142 = vmatpush.bf16.msra.mxu0 0
    %143 = vmatpush.bf16.msra.mxu0 %v127
    %144 = vmatpush.bf16.msra.mxu0 %v126
    %145 = vmatmul.bf16.gmra.mxu0 %v132
    %v146 = vpop.f32.mrf.mxu0
    %v147 = vadd.f32 %v116, %v146
    %v148 = vpop.f32.mrf.mxu0
    %v149 = vadd.f32 %v116, %v148
    %150 = vmatmul.bf16.gmra.mxu0 %v135
    %v151 = vpop.f32.mrf.mxu0
    %v152 = vadd.f32 %v116, %v151
    %v153 = vpop.f32.mrf.mxu0
    %v154 = vadd.f32 %v116, %v153
    %155 = vdwg.mxu0
    %v156 = vld [vmem:[%s2] sm:$0xff]
    %v157 = vld [vmem:[%s2 + $0x8] sm:$0xff]
    %v158 = vpack.c.bf16 %v157, %v156
    %v160 = vsel %vm130, %v158, 0
    %162 = vmatpush.bf16.msra.mxu0 0
    %163 = vmatpush.bf16.msra.mxu0 0
    %164 = vmatpush.bf16.msra.mxu0 0
    %165 = vmatpush.bf16.msra.mxu0 0
    %166 = vmatpush.bf16.msra.mxu0 0
    %167 = vmatpush.bf16.msra.mxu0 0
    %168 = vmatpush.bf16.msra.mxu0 %v127
    %169 = vmatpush.bf16.msra.mxu0 %v126
    %170 = vmatmul.bf16.gmra.mxu0 %v160
    %v171 = vpop.f32.mrf.mxu0
    %v172 = vadd.f32 %v116, %v171
    %v173 = vpop.f32.mrf.mxu0
    %v174 = vadd.f32 %v116, %v173
    %175 = vdwg.mxu0
    %v176 = vld [vmem:[%s19] sm:$0x3f]
    %v177 = vpack.c.bf16 %v103, %v102
    %v178 = vld [vmem:[%s5] sm:$0xf]
    %v179 = vld [vmem:[%s5 + $0x4] sm:$0xf]
    %v180 = vld [vmem:[%s5 + $0x8] sm:$0xf]
    %v181 = vld [vmem:[%s5 + $0xc] sm:$0xf]
    %v182 = vld [vmem:[%s6] sm:$0x1]
    %v184 = vperm.slane %v182, 0
    %v190 = vunpack.c.l.b16 %v178
    %v191 = vunpack.c.l.b16 %v179
    %v192 = vunpack.c.l.b16 %v180
    %v193 = vunpack.c.l.b16 %v181
    %v194 = vpack.c.b16 %v191, %v190
    %v195 = vpack.c.b16 %v193, %v192
    %v199 = vsel %vm130, %v177, 0
    %201 = vmatpush.bf16.msra.mxu0 0
    %202 = vmatpush.bf16.msra.mxu0 0
    %203 = vmatpush.bf16.msra.mxu0 0
    %204 = vmatpush.bf16.msra.mxu0 0
    %205 = vmatpush.bf16.msra.mxu0 0
    %206 = vmatpush.bf16.msra.mxu0 0
    %207 = vmatpush.bf16.msra.mxu0 %v195
    %208 = vmatpush.bf16.msra.mxu0 %v194
    %209 = vmatmul.bf16.gmra.mxu0 %v199
    %v210 = vpop.f32.mrf.mxu0
    %v211 = vadd.f32 %v184, %v210
    %v212 = vpop.f32.mrf.mxu0
    %v213 = vadd.f32 %v184, %v212
    %214 = vdwg.mxu0
    %v215 = vmul.f32 %v211, 0.35355338
    %v216 = vmul.f32 %v213, 0.35355338
    %v217 = vpack.c.bf16 %v215, %v215
    %v218 = vpack.c.bf16 %v216, %v216
    %221 = vrot.lane.b32.xlu0 %v217, 120
    %v222 = vpop.permute.xlu0 %221
    %223 = vrot.lane.b32.xlu0 %v218, 120
    %v224 = vpop.permute.xlu0 %223
    %225 = vrot.lane.b32.xlu0 %v217, 112
    %v226 = vpop.permute.xlu0 %225
    %227 = vrot.lane.b32.xlu0 %v218, 112
    %v228 = vpop.permute.xlu0 %227
    %229 = vrot.lane.b32.xlu0 %v217, 104
    %v230 = vpop.permute.xlu0 %229
    %231 = vrot.lane.b32.xlu0 %v218, 104
    %v232 = vpop.permute.xlu0 %231
    %v233 = vpack.c.bf16 %v211, %v211
    %v234 = vpack.c.bf16 %v213, %v213
    %237 = vrot.lane.b32.xlu0 %v233, 120
    %v238 = vpop.permute.xlu0 %237
    %239 = vrot.lane.b32.xlu0 %v234, 120
    %v240 = vpop.permute.xlu0 %239
    %241 = vrot.lane.b32.xlu0 %v233, 112
    %v242 = vpop.permute.xlu0 %241
    %243 = vrot.lane.b32.xlu0 %v234, 112
    %v244 = vpop.permute.xlu0 %243
    %245 = vrot.lane.b32.xlu0 %v233, 104
    %v246 = vpop.permute.xlu0 %245
    %247 = vrot.lane.b32.xlu0 %v234, 104
    %v248 = vpop.permute.xlu0 %247
    %v249 = vunpack.c.l.b16 %v233
    %v250 = vpack.c.b16 %v249, %v249
    %251 = vrot.lane.b32.xlu0 %v250, 96
    %v252 = vpop.permute.xlu0 %251
    %vm253 = vcmask 64512
    %v255 = vsel %vm253, %v217, 0
    %v258 = vsel %vm253, %v252, 0
    %260 = vmatpush.bf16.xpose.msra.mxu0 0
    %261 = vmatpush.bf16.xpose.msra.mxu0 0
    %262 = vmatpush.bf16.xpose.msra.mxu0 0
    %263 = vmatpush.bf16.xpose.msra.mxu0 0
    %264 = vmatpush.bf16.xpose.msra.mxu0 0
    %265 = vmatpush.bf16.xpose.msra.mxu0 0
    %266 = vmatpush.bf16.xpose.msra.mxu0 0
    %267 = vmatpush.bf16.xpose.msra.mxu0 %v258
    %268 = vmatmul.bf16.gmra.mxu0 %v255
    %v269 = vpop.f32.mrf.mxu0
    %v270 = vadd.f32 %v88, %v269
    %v271 = vpop.f32.mrf.mxu0
    %272 = vdwg.mxu0
    %v273 = vunpack.c.l.b16 %v234
    %v274 = vpack.c.b16 %v273, %v273
    %275 = vrot.lane.b32.xlu0 %v274, 96
    %v276 = vpop.permute.xlu0 %275
    %v278 = vsel %vm253, %v218, 0
    %v281 = vsel %vm253, %v276, 0
    %283 = vmatpush.bf16.xpose.msra.mxu0 0
    %284 = vmatpush.bf16.xpose.msra.mxu0 0
    %285 = vmatpush.bf16.xpose.msra.mxu0 0
    %286 = vmatpush.bf16.xpose.msra.mxu0 0
    %287 = vmatpush.bf16.xpose.msra.mxu0 0
    %288 = vmatpush.bf16.xpose.msra.mxu0 0
    %289 = vmatpush.bf16.xpose.msra.mxu0 0
    %290 = vmatpush.bf16.xpose.msra.mxu0 %v281
    %291 = vmatmul.bf16.gmra.mxu0 %v278
    %v292 = vpop.f32.mrf.mxu0
    %v293 = vadd.f32 %v89, %v292
    %v294 = vpop.f32.mrf.mxu0
    %295 = vdwg.mxu0
    %v296 = vunpack.c.l.b16 %v238
    %v297 = vpack.c.b16 %v296, %v296
    %298 = vrot.lane.b32.xlu0 %v297, 96
    %v299 = vpop.permute.xlu0 %298
    %v301 = vsel %vm253, %v222, 0
    %v304 = vsel %vm253, %v299, 0
    %306 = vmatpush.bf16.xpose.msra.mxu0 0
    %307 = vmatpush.bf16.xpose.msra.mxu0 0
    %308 = vmatpush.bf16.xpose.msra.mxu0 0
    %309 = vmatpush.bf16.xpose.msra.mxu0 0
    %310 = vmatpush.bf16.xpose.msra.mxu0 0
    %311 = vmatpush.bf16.xpose.msra.mxu0 0
    %312 = vmatpush.bf16.xpose.msra.mxu0 0
    %313 = vmatpush.bf16.xpose.msra.mxu0 %v304
    %314 = vmatmul.bf16.gmra.mxu0 %v301
    %v315 = vpop.f32.mrf.mxu0
    %v316 = vadd.f32 %v88, %v315
    %v317 = vpop.f32.mrf.mxu0
    %318 = vdwg.mxu0
    %v319 = vunpack.c.l.b16 %v240
    %v320 = vpack.c.b16 %v319, %v319
    %321 = vrot.lane.b32.xlu0 %v320, 96
    %v322 = vpop.permute.xlu0 %321
    %v324 = vsel %vm253, %v224, 0
    %v327 = vsel %vm253, %v322, 0
    %329 = vmatpush.bf16.xpose.msra.mxu0 0
    %330 = vmatpush.bf16.xpose.msra.mxu0 0
    %331 = vmatpush.bf16.xpose.msra.mxu0 0
    %332 = vmatpush.bf16.xpose.msra.mxu0 0
    %333 = vmatpush.bf16.xpose.msra.mxu0 0
    %334 = vmatpush.bf16.xpose.msra.mxu0 0
    %335 = vmatpush.bf16.xpose.msra.mxu0 0
    %336 = vmatpush.bf16.xpose.msra.mxu0 %v327
    %337 = vmatmul.bf16.gmra.mxu0 %v324
    %v338 = vpop.f32.mrf.mxu0
    %v339 = vadd.f32 %v89, %v338
    %v340 = vpop.f32.mrf.mxu0
    %341 = vdwg.mxu0
    %v342 = vunpack.c.l.b16 %v242
    %v343 = vpack.c.b16 %v342, %v342
    %344 = vrot.lane.b32.xlu0 %v343, 96
    %v345 = vpop.permute.xlu0 %344
    %v347 = vsel %vm253, %v226, 0
    %v350 = vsel %vm253, %v345, 0
    %352 = vmatpush.bf16.xpose.msra.mxu0 0
    %353 = vmatpush.bf16.xpose.msra.mxu0 0
    %354 = vmatpush.bf16.xpose.msra.mxu0 0
    %355 = vmatpush.bf16.xpose.msra.mxu0 0
    %356 = vmatpush.bf16.xpose.msra.mxu0 0
    %357 = vmatpush.bf16.xpose.msra.mxu0 0
    %358 = vmatpush.bf16.xpose.msra.mxu0 0
    %359 = vmatpush.bf16.xpose.msra.mxu0 %v350
    %360 = vmatmul.bf16.gmra.mxu0 %v347
    %v361 = vpop.f32.mrf.mxu0
    %v362 = vadd.f32 %v88, %v361
    %v363 = vpop.f32.mrf.mxu0
    %364 = vdwg.mxu0
    %v365 = vunpack.c.l.b16 %v244
    %v366 = vpack.c.b16 %v365, %v365
    %367 = vrot.lane.b32.xlu0 %v366, 96
    %v368 = vpop.permute.xlu0 %367
    %v370 = vsel %vm253, %v228, 0
    %v373 = vsel %vm253, %v368, 0
    %375 = vmatpush.bf16.xpose.msra.mxu0 0
    %376 = vmatpush.bf16.xpose.msra.mxu0 0
    %377 = vmatpush.bf16.xpose.msra.mxu0 0
    %378 = vmatpush.bf16.xpose.msra.mxu0 0
    %379 = vmatpush.bf16.xpose.msra.mxu0 0
    %380 = vmatpush.bf16.xpose.msra.mxu0 0
    %381 = vmatpush.bf16.xpose.msra.mxu0 0
    %382 = vmatpush.bf16.xpose.msra.mxu0 %v373
    %383 = vmatmul.bf16.gmra.mxu0 %v370
    %v384 = vpop.f32.mrf.mxu0
    %v385 = vadd.f32 %v89, %v384
    %v386 = vpop.f32.mrf.mxu0
    %387 = vdwg.mxu0
    %v388 = vunpack.c.l.b16 %v246
    %v389 = vpack.c.b16 %v388, %v388
    %390 = vrot.lane.b32.xlu0 %v389, 96
    %v391 = vpop.permute.xlu0 %390
    %v393 = vsel %vm253, %v230, 0
    %v396 = vsel %vm253, %v391, 0
    %398 = vmatpush.bf16.xpose.msra.mxu0 0
    %399 = vmatpush.bf16.xpose.msra.mxu0 0
    %400 = vmatpush.bf16.xpose.msra.mxu0 0
    %401 = vmatpush.bf16.xpose.msra.mxu0 0
    %402 = vmatpush.bf16.xpose.msra.mxu0 0
    %403 = vmatpush.bf16.xpose.msra.mxu0 0
    %404 = vmatpush.bf16.xpose.msra.mxu0 0
    %405 = vmatpush.bf16.xpose.msra.mxu0 %v396
    %406 = vmatmul.bf16.gmra.mxu0 %v393
    %v407 = vpop.f32.mrf.mxu0
    %v408 = vadd.f32 %v88, %v407
    %v409 = vpop.f32.mrf.mxu0
    %410 = vdwg.mxu0
    %v411 = vunpack.c.l.b16 %v248
    %v412 = vpack.c.b16 %v411, %v411
    %413 = vrot.lane.b32.xlu0 %v412, 96
    %v414 = vpop.permute.xlu0 %413
    %v416 = vsel %vm253, %v232, 0
    %v419 = vsel %vm253, %v414, 0
    %421 = vmatpush.bf16.xpose.msra.mxu0 0
    %422 = vmatpush.bf16.xpose.msra.mxu0 0
    %423 = vmatpush.bf16.xpose.msra.mxu0 0
    %424 = vmatpush.bf16.xpose.msra.mxu0 0
    %425 = vmatpush.bf16.xpose.msra.mxu0 0
    %426 = vmatpush.bf16.xpose.msra.mxu0 0
    %427 = vmatpush.bf16.xpose.msra.mxu0 0
    %428 = vmatpush.bf16.xpose.msra.mxu0 %v419
    %429 = vmatmul.bf16.gmra.mxu0 %v416
    %v430 = vpop.f32.mrf.mxu0
    %v431 = vadd.f32 %v89, %v430
    %v432 = vpop.f32.mrf.mxu0
    %433 = vdwg.mxu0
    %v434 = vsel %vm253, %v270, -inf
    %435 = vmax.xlane.f32.xlu0 %v434
    %v436 = vpop.xlane.xlu0 %435
    %v437 = vsel %vm253, %v293, -inf
    %438 = vmax.xlane.f32.xlu0 %v437
    %v439 = vpop.xlane.xlu0 %438
    %v440 = vsel %vm253, %v316, -inf
    %441 = vmax.xlane.f32.xlu0 %v440
    %v442 = vpop.xlane.xlu0 %441
    %v443 = vsel %vm253, %v339, -inf
    %444 = vmax.xlane.f32.xlu0 %v443
    %v445 = vpop.xlane.xlu0 %444
    %v446 = vsel %vm253, %v362, -inf
    %447 = vmax.xlane.f32.xlu0 %v446
    %v448 = vpop.xlane.xlu0 %447
    %v449 = vsel %vm253, %v385, -inf
    %450 = vmax.xlane.f32.xlu0 %v449
    %v451 = vpop.xlane.xlu0 %450
    %v452 = vsel %vm253, %v408, -inf
    %453 = vmax.xlane.f32.xlu0 %v452
    %v454 = vpop.xlane.xlu0 %453
    %v455 = vsel %vm253, %v431, -inf
    %456 = vmax.xlane.f32.xlu0 %v455
    %v457 = vpop.xlane.xlu0 %456
    %v458 = vsub.f32 %v270, %v436
    %v459 = vsub.f32 %v293, %v439
    %v460 = vsub.f32 %v316, %v442
    %v461 = vsub.f32 %v339, %v445
    %v462 = vsub.f32 %v362, %v448
    %v463 = vsub.f32 %v385, %v451
    %v464 = vsub.f32 %v408, %v454
    %v465 = vsub.f32 %v431, %v457
    %v466 = vmul.f32 %v458, 1.442695
    %v467 = vpow.pop %v466
    %v468 = vmul.f32 %v459, 1.442695
    %v469 = vpow.pop %v468
    %v470 = vmul.f32 %v460, 1.442695
    %v471 = vpow.pop %v470
    %v472 = vmul.f32 %v461, 1.442695
    %v473 = vpow.pop %v472
    %v474 = vmul.f32 %v462, 1.442695
    %v475 = vpow.pop %v474
    %v476 = vmul.f32 %v463, 1.442695
    %v477 = vpow.pop %v476
    %v478 = vmul.f32 %v464, 1.442695
    %v479 = vpow.pop %v478
    %v480 = vmul.f32 %v465, 1.442695
    %v481 = vpow.pop %v480
    %v482 = vsel %vm253, %v467, 0.0
    %483 = vadd.xlane.f32.xlu0 %v482
    %v484 = vpop.xlane.xlu0 %483
    %v485 = vsel %vm253, %v469, 0.0
    %486 = vadd.xlane.f32.xlu0 %v485
    %v487 = vpop.xlane.xlu0 %486
    %v488 = vsel %vm253, %v471, 0.0
    %489 = vadd.xlane.f32.xlu0 %v488
    %v490 = vpop.xlane.xlu0 %489
    %v491 = vsel %vm253, %v473, 0.0
    %492 = vadd.xlane.f32.xlu0 %v491
    %v493 = vpop.xlane.xlu0 %492
    %v494 = vsel %vm253, %v475, 0.0
    %495 = vadd.xlane.f32.xlu0 %v494
    %v496 = vpop.xlane.xlu0 %495
    %v497 = vsel %vm253, %v477, 0.0
    %498 = vadd.xlane.f32.xlu0 %v497
    %v499 = vpop.xlane.xlu0 %498
    %v500 = vsel %vm253, %v479, 0.0
    %501 = vadd.xlane.f32.xlu0 %v500
    %v502 = vpop.xlane.xlu0 %501
    %v503 = vsel %vm253, %v481, 0.0
    %504 = vadd.xlane.f32.xlu0 %v503
    %v505 = vpop.xlane.xlu0 %504
    %v506 = vrcp.pop %v484
    %v507 = vmul.f32 %v484, %v506
    %v508 = vsub.f32 1.0, %v507
    %v509 = vmul.f32 %v506, %v508
    %v510 = vadd.f32 %v506, %v509
    %vm511 = vweird.f32 %v484
    %vm512 = vweird.f32 %v506
    %vm513 = vmor %vm511, %vm512
    %v514 = vsel %vm513, %v506, %v510
    %v515 = vand.u32 2147483647, %v484
    %vm516 = vcmp.eq.f32.partialorder %v515, 8.507059e+37
    %v517 = vand.u32 %v484, 2147483648
    %v518 = vor.u32 1.1754944e-38, %v517
    %v519 = vsel %vm516, %v518, %v514
    %v520 = vmul.f32 %v467, %v519
    %v521 = vrcp.pop %v487
    %v522 = vmul.f32 %v487, %v521
    %v523 = vsub.f32 1.0, %v522
    %v524 = vmul.f32 %v521, %v523
    %v525 = vadd.f32 %v521, %v524
    %vm526 = vweird.f32 %v487
    %vm527 = vweird.f32 %v521
    %vm528 = vmor %vm526, %vm527
    %v529 = vsel %vm528, %v521, %v525
    %v530 = vand.u32 2147483647, %v487
    %vm531 = vcmp.eq.f32.partialorder %v530, 8.507059e+37
    %v532 = vand.u32 %v487, 2147483648
    %v533 = vor.u32 1.1754944e-38, %v532
    %v534 = vsel %vm531, %v533, %v529
    %v535 = vmul.f32 %v469, %v534
    %v536 = vrcp.pop %v490
    %v537 = vmul.f32 %v490, %v536
    %v538 = vsub.f32 1.0, %v537
    %v539 = vmul.f32 %v536, %v538
    %v540 = vadd.f32 %v536, %v539
    %vm541 = vweird.f32 %v490
    %vm542 = vweird.f32 %v536
    %vm543 = vmor %vm541, %vm542
    %v544 = vsel %vm543, %v536, %v540
    %v545 = vand.u32 2147483647, %v490
    %vm546 = vcmp.eq.f32.partialorder %v545, 8.507059e+37
    %v547 = vand.u32 %v490, 2147483648
    %v548 = vor.u32 1.1754944e-38, %v547
    %v549 = vsel %vm546, %v548, %v544
    %v550 = vmul.f32 %v471, %v549
    %v551 = vrcp.pop %v493
    %v552 = vmul.f32 %v493, %v551
    %v553 = vsub.f32 1.0, %v552
    %v554 = vmul.f32 %v551, %v553
    %v555 = vadd.f32 %v551, %v554
    %vm556 = vweird.f32 %v493
    %vm557 = vweird.f32 %v551
    %vm558 = vmor %vm556, %vm557
    %v559 = vsel %vm558, %v551, %v555
    %v560 = vand.u32 2147483647, %v493
    %vm561 = vcmp.eq.f32.partialorder %v560, 8.507059e+37
    %v562 = vand.u32 %v493, 2147483648
    %v563 = vor.u32 1.1754944e-38, %v562
    %v564 = vsel %vm561, %v563, %v559
    %v565 = vmul.f32 %v473, %v564
    %v566 = vrcp.pop %v496
    %v567 = vmul.f32 %v496, %v566
    %v568 = vsub.f32 1.0, %v567
    %v569 = vmul.f32 %v566, %v568
    %v570 = vadd.f32 %v566, %v569
    %vm571 = vweird.f32 %v496
    %vm572 = vweird.f32 %v566
    %vm573 = vmor %vm571, %vm572
    %v574 = vsel %vm573, %v566, %v570
    %v575 = vand.u32 2147483647, %v496
    %vm576 = vcmp.eq.f32.partialorder %v575, 8.507059e+37
    %v577 = vand.u32 %v496, 2147483648
    %v578 = vor.u32 1.1754944e-38, %v577
    %v579 = vsel %vm576, %v578, %v574
    %v580 = vmul.f32 %v475, %v579
    %v581 = vrcp.pop %v499
    %v582 = vmul.f32 %v499, %v581
    %v583 = vsub.f32 1.0, %v582
    %v584 = vmul.f32 %v581, %v583
    %v585 = vadd.f32 %v581, %v584
    %vm586 = vweird.f32 %v499
    %vm587 = vweird.f32 %v581
    %vm588 = vmor %vm586, %vm587
    %v589 = vsel %vm588, %v581, %v585
    %v590 = vand.u32 2147483647, %v499
    %vm591 = vcmp.eq.f32.partialorder %v590, 8.507059e+37
    %v592 = vand.u32 %v499, 2147483648
    %v593 = vor.u32 1.1754944e-38, %v592
    %v594 = vsel %vm591, %v593, %v589
    %v595 = vmul.f32 %v477, %v594
    %v596 = vrcp.pop %v502
    %v597 = vmul.f32 %v502, %v596
    %v598 = vsub.f32 1.0, %v597
    %v599 = vmul.f32 %v596, %v598
    %v600 = vadd.f32 %v596, %v599
    %vm601 = vweird.f32 %v502
    %vm602 = vweird.f32 %v596
    %vm603 = vmor %vm601, %vm602
    %v604 = vsel %vm603, %v596, %v600
    %v605 = vand.u32 2147483647, %v502
    %vm606 = vcmp.eq.f32.partialorder %v605, 8.507059e+37
    %v607 = vand.u32 %v502, 2147483648
    %v608 = vor.u32 1.1754944e-38, %v607
    %v609 = vsel %vm606, %v608, %v604
    %v610 = vmul.f32 %v479, %v609
    %v611 = vrcp.pop %v505
    %v612 = vmul.f32 %v505, %v611
    %v613 = vsub.f32 1.0, %v612
    %v614 = vmul.f32 %v611, %v613
    %v615 = vadd.f32 %v611, %v614
    %vm616 = vweird.f32 %v505
    %vm617 = vweird.f32 %v611
    %vm618 = vmor %vm616, %vm617
    %v619 = vsel %vm618, %v611, %v615
    %v620 = vand.u32 2147483647, %v505
    %vm621 = vcmp.eq.f32.partialorder %v620, 8.507059e+37
    %v622 = vand.u32 %v505, 2147483648
    %v623 = vor.u32 1.1754944e-38, %v622
    %v624 = vsel %vm621, %v623, %v619
    %v625 = vmul.f32 %v481, %v624
    %v626 = vpack.c.bf16 %v520, %v520
    %v627 = vpack.c.bf16 %v535, %v535
    %v628 = vpack.c.bf16 %v550, %v550
    %v629 = vpack.c.bf16 %v565, %v565
    %v630 = vpack.c.bf16 %v580, %v580
    %v631 = vpack.c.bf16 %v595, %v595
    %v632 = vpack.c.bf16 %v610, %v610
    %v633 = vpack.c.bf16 %v625, %v625
    %634 = vrot.lane.b32.xlu0 %v250, 64
    %v635 = vpop.permute.xlu0 %634
    %v637 = vsel %vm253, %v626, 0
    %vm639 = vcmask 1043456
    %v641 = vsel %vm639, %v635, 0
    %643 = vmatpush.bf16.msra.mxu0 0
    %644 = vmatpush.bf16.msra.mxu0 0
    %645 = vmatpush.bf16.msra.mxu0 0
    %646 = vmatpush.bf16.msra.mxu0 0
    %647 = vmatpush.bf16.msra.mxu0 0
    %648 = vmatpush.bf16.msra.mxu0 0
    %649 = vmatpush.bf16.msra.mxu0 0
    %650 = vmatpush.bf16.msra.mxu0 %v641
    %651 = vmatmul.bf16.gmra.mxu0 %v637
    %v652 = vpop.f32.mrf.mxu0
    %v653 = vadd.f32 0.0, %v652
    %v654 = vpop.f32.mrf.mxu0
    %655 = vdwg.mxu0
    %656 = vrot.lane.b32.xlu0 %v274, 64
    %v657 = vpop.permute.xlu0 %656
    %v659 = vsel %vm253, %v627, 0
    %v662 = vsel %vm639, %v657, 0
    %664 = vmatpush.bf16.msra.mxu0 0
    %665 = vmatpush.bf16.msra.mxu0 0
    %666 = vmatpush.bf16.msra.mxu0 0
    %667 = vmatpush.bf16.msra.mxu0 0
    %668 = vmatpush.bf16.msra.mxu0 0
    %669 = vmatpush.bf16.msra.mxu0 0
    %670 = vmatpush.bf16.msra.mxu0 0
    %671 = vmatpush.bf16.msra.mxu0 %v662
    %672 = vmatmul.bf16.gmra.mxu0 %v659
    %v673 = vpop.f32.mrf.mxu0
    %v674 = vadd.f32 0.0, %v673
    %v675 = vpop.f32.mrf.mxu0
    %676 = vdwg.mxu0
    %677 = vrot.lane.b32.xlu0 %v297, 64
    %v678 = vpop.permute.xlu0 %677
    %v680 = vsel %vm253, %v628, 0
    %v683 = vsel %vm639, %v678, 0
    %685 = vmatpush.bf16.msra.mxu0 0
    %686 = vmatpush.bf16.msra.mxu0 0
    %687 = vmatpush.bf16.msra.mxu0 0
    %688 = vmatpush.bf16.msra.mxu0 0
    %689 = vmatpush.bf16.msra.mxu0 0
    %690 = vmatpush.bf16.msra.mxu0 0
    %691 = vmatpush.bf16.msra.mxu0 0
    %692 = vmatpush.bf16.msra.mxu0 %v683
    %693 = vmatmul.bf16.gmra.mxu0 %v680
    %v694 = vpop.f32.mrf.mxu0
    %v695 = vadd.f32 0.0, %v694
    %v696 = vpop.f32.mrf.mxu0
    %697 = vdwg.mxu0
    %698 = vrot.lane.b32.xlu0 %v320, 64
    %v699 = vpop.permute.xlu0 %698
    %v701 = vsel %vm253, %v629, 0
    %v704 = vsel %vm639, %v699, 0
    %706 = vmatpush.bf16.msra.mxu0 0
    %707 = vmatpush.bf16.msra.mxu0 0
    %708 = vmatpush.bf16.msra.mxu0 0
    %709 = vmatpush.bf16.msra.mxu0 0
    %710 = vmatpush.bf16.msra.mxu0 0
    %711 = vmatpush.bf16.msra.mxu0 0
    %712 = vmatpush.bf16.msra.mxu0 0
    %713 = vmatpush.bf16.msra.mxu0 %v704
    %714 = vmatmul.bf16.gmra.mxu0 %v701
    %v715 = vpop.f32.mrf.mxu0
    %v716 = vadd.f32 0.0, %v715
    %v717 = vpop.f32.mrf.mxu0
    %718 = vdwg.mxu0
    %719 = vrot.lane.b32.xlu0 %v343, 64
    %v720 = vpop.permute.xlu0 %719
    %v722 = vsel %vm253, %v630, 0
    %v725 = vsel %vm639, %v720, 0
    %727 = vmatpush.bf16.msra.mxu0 0
    %728 = vmatpush.bf16.msra.mxu0 0
    %729 = vmatpush.bf16.msra.mxu0 0
    %730 = vmatpush.bf16.msra.mxu0 0
    %731 = vmatpush.bf16.msra.mxu0 0
    %732 = vmatpush.bf16.msra.mxu0 0
    %733 = vmatpush.bf16.msra.mxu0 0
    %734 = vmatpush.bf16.msra.mxu0 %v725
    %735 = vmatmul.bf16.gmra.mxu0 %v722
    %v736 = vpop.f32.mrf.mxu0
    %v737 = vadd.f32 0.0, %v736
    %v738 = vpop.f32.mrf.mxu0
    %739 = vdwg.mxu0
    %740 = vrot.lane.b32.xlu0 %v366, 64
    %v741 = vpop.permute.xlu0 %740
    %v743 = vsel %vm253, %v631, 0
    %v746 = vsel %vm639, %v741, 0
    %748 = vmatpush.bf16.msra.mxu0 0
    %749 = vmatpush.bf16.msra.mxu0 0
    %750 = vmatpush.bf16.msra.mxu0 0
    %751 = vmatpush.bf16.msra.mxu0 0
    %752 = vmatpush.bf16.msra.mxu0 0
    %753 = vmatpush.bf16.msra.mxu0 0
    %754 = vmatpush.bf16.msra.mxu0 0
    %755 = vmatpush.bf16.msra.mxu0 %v746
    %756 = vmatmul.bf16.gmra.mxu0 %v743
    %v757 = vpop.f32.mrf.mxu0
    %v758 = vadd.f32 0.0, %v757
    %v759 = vpop.f32.mrf.mxu0
    %760 = vdwg.mxu0
    %761 = vrot.lane.b32.xlu0 %v389, 64
    %v762 = vpop.permute.xlu0 %761
    %v764 = vsel %vm253, %v632, 0
    %v767 = vsel %vm639, %v762, 0
    %769 = vmatpush.bf16.msra.mxu0 0
    %770 = vmatpush.bf16.msra.mxu0 0
    %771 = vmatpush.bf16.msra.mxu0 0
    %772 = vmatpush.bf16.msra.mxu0 0
    %773 = vmatpush.bf16.msra.mxu0 0
    %774 = vmatpush.bf16.msra.mxu0 0
    %775 = vmatpush.bf16.msra.mxu0 0
    %776 = vmatpush.bf16.msra.mxu0 %v767
    %777 = vmatmul.bf16.gmra.mxu0 %v764
    %v778 = vpop.f32.mrf.mxu0
    %v779 = vadd.f32 0.0, %v778
    %v780 = vpop.f32.mrf.mxu0
    %781 = vdwg.mxu0
    %782 = vrot.lane.b32.xlu0 %v412, 64
    %v783 = vpop.permute.xlu0 %782
    %v785 = vsel %vm253, %v633, 0
    %v788 = vsel %vm639, %v783, 0
    %790 = vmatpush.bf16.msra.mxu0 0
    %791 = vmatpush.bf16.msra.mxu0 0
    %792 = vmatpush.bf16.msra.mxu0 0
    %793 = vmatpush.bf16.msra.mxu0 0
    %794 = vmatpush.bf16.msra.mxu0 0
    %795 = vmatpush.bf16.msra.mxu0 0
    %796 = vmatpush.bf16.msra.mxu0 0
    %797 = vmatpush.bf16.msra.mxu0 %v788
    %798 = vmatmul.bf16.gmra.mxu0 %v785
    %v799 = vpop.f32.mrf.mxu0
    %v800 = vadd.f32 0.0, %v799
    %v801 = vpop.f32.mrf.mxu0
    %802 = vdwg.mxu0
    %805 = vrot.lane.b32.xlu0 %v695, 8
    %v806 = vpop.permute.xlu0 %805
    %807 = vrot.lane.b32.xlu0 %v716, 8
    %v808 = vpop.permute.xlu0 %807
    %813 = vrot.lane.b32.xlu0 %v737, 16
    %v814 = vpop.permute.xlu0 %813
    %815 = vrot.lane.b32.xlu0 %v758, 16
    %v816 = vpop.permute.xlu0 %815
    %821 = vrot.lane.b32.xlu0 %v779, 24
    %v822 = vpop.permute.xlu0 %821
    %823 = vrot.lane.b32.xlu0 %v800, 24
    %v824 = vpop.permute.xlu0 %823
    %v827 = vsel %vm253, %v653, %v806
    %v828 = vsel %vm253, %v674, %v808
    %vm829 = vcmask 130048
    %v830 = vsel %vm829, %v827, %v814
    %v831 = vsel %vm829, %v828, %v816
    %vm832 = vcmask 195584
    %v833 = vsel %vm832, %v830, %v822
    %v834 = vsel %vm832, %v831, %v824
    %v835 = vpack.c.bf16 %v834, %v833
    %v836 = vld [vmem:[%s7] sm:$0xf]
    %v837 = vld [vmem:[%s7 + $0x4] sm:$0xf]
    %v838 = vld [vmem:[%s7 + $0x8] sm:$0xf]
    %v839 = vld [vmem:[%s7 + $0xc] sm:$0xf]
    %v840 = vld [vmem:[%s8] sm:$0x1]
    %v842 = vperm.slane %v840, 0
    %v848 = vunpack.c.l.b16 %v836
    %v849 = vunpack.c.l.b16 %v837
    %v850 = vunpack.c.l.b16 %v838
    %v851 = vunpack.c.l.b16 %v839
    %v852 = vpack.c.b16 %v849, %v848
    %v853 = vpack.c.b16 %v851, %v850
    %v857 = vsel %vm130, %v835, 0
    %859 = vmatpush.bf16.msra.mxu0 0
    %860 = vmatpush.bf16.msra.mxu0 0
    %861 = vmatpush.bf16.msra.mxu0 0
    %862 = vmatpush.bf16.msra.mxu0 0
    %863 = vmatpush.bf16.msra.mxu0 0
    %864 = vmatpush.bf16.msra.mxu0 0
    %865 = vmatpush.bf16.msra.mxu0 %v853
    %866 = vmatpush.bf16.msra.mxu0 %v852
    %867 = vmatmul.bf16.gmra.mxu0 %v857
    %v868 = vpop.f32.mrf.mxu0
    %v869 = vadd.f32 %v842, %v868
    %v870 = vpop.f32.mrf.mxu0
    %v871 = vadd.f32 %v842, %v870
    %872 = vdwg.mxu0
    %v873 = vadd.f32 %v102, %v869
    %v874 = vadd.f32 %v103, %v871
    %v875 = vsel %vm130, %v873, 0.0
    %876 = vadd.xlane.f32.xlu0 %v875
    %v877 = vpop.xlane.xlu0 %876
    %v878 = vsel %vm130, %v874, 0.0
    %879 = vadd.xlane.f32.xlu0 %v878
    %v880 = vpop.xlane.xlu0 %879
    %v881 = vrcp.pop 32.0
    %v882 = vmul.f32 32.0, %v881
    %v883 = vsub.f32 1.0, %v882
    %v884 = vmul.f32 %v881, %v883
    %v885 = vadd.f32 %v881, %v884
    %vm886 = vweird.f32 %v881
    %v887 = vsel %vm886, %v881, %v885
    %v888 = vmul.f32 %v877, %v887
    %v889 = vmul.f32 %v880, %v887
    %v890 = vsub.f32 %v873, %v888
    %v891 = vsub.f32 %v874, %v889
    %v892 = vmul.f32 %v890, %v890
    %v893 = vmul.f32 %v891, %v891
    %v894 = vsel %vm130, %v892, 0.0
    %895 = vadd.xlane.f32.xlu0 %v894
    %v896 = vpop.xlane.xlu0 %895
    %v897 = vsel %vm130, %v893, 0.0
    %898 = vadd.xlane.f32.xlu0 %v897
    %v899 = vpop.xlane.xlu0 %898
    %v900 = vmul.f32 %v896, %v887
    %v901 = vmul.f32 %v899, %v887
    %v902 = vadd.f32 %v900, 1e-05
    %v903 = vadd.f32 %v901, 1e-05
    %v904 = vrsqrt.pop %v902
    %v905 = vmul.f32 %v904, %v902
    %v906 = vmul.f32 %v905, %v904
    %v907 = vmul.f32 0.5, %v906
    %v908 = vsub.f32 1.5, %v907
    %v909 = vmul.f32 %v904, %v908
    %vm910 = vweird.f32 %v902
    %vm911 = vweird.f32 %v904
    %vm912 = vmor %vm910, %vm911
    %v913 = vsel %vm912, %v904, %v909
    %v914 = vrsqrt.pop %v903
    %v915 = vmul.f32 %v914, %v903
    %v916 = vmul.f32 %v915, %v914
    %v917 = vmul.f32 0.5, %v916
    %v918 = vsub.f32 1.5, %v917
    %v919 = vmul.f32 %v914, %v918
    %vm920 = vweird.f32 %v903
    %vm921 = vweird.f32 %v914
    %vm922 = vmor %vm920, %vm921
    %v923 = vsel %vm922, %v914, %v919
    %v924 = vmul.f32 %v890, %v913
    %v925 = vmul.f32 %v891, %v923
    %v926 = vperm.slane %v176, 0
    %v927 = vmul.f32 %v924, %v926
    %v928 = vmul.f32 %v925, %v926
    %v929 = vperm.slane %v176, 1
    %v930 = vadd.f32 %v927, %v929
    %v931 = vadd.f32 %v928, %v929
    %v932 = vpack.c.bf16 %v931, %v930
    %v933 = vld [vmem:[%s9] sm:$0xf]
    %v934 = vld [vmem:[%s9 + $0x4] sm:$0xf]
    %v935 = vld [vmem:[%s9 + $0x8] sm:$0xf]
    %v936 = vld [vmem:[%s9 + $0xc] sm:$0xf]
    %v937 = vld [vmem:[%s10] sm:$0x1]
    %v939 = vperm.slane %v937, 0
    %v945 = vunpack.c.l.b16 %v933
    %v946 = vunpack.c.l.b16 %v934
    %v947 = vunpack.c.l.b16 %v935
    %v948 = vunpack.c.l.b16 %v936
    %v949 = vpack.c.b16 %v946, %v945
    %v950 = vpack.c.b16 %v948, %v947
    %v954 = vsel %vm130, %v932, 0
    %956 = vmatpush.bf16.msra.mxu0 0
    %957 = vmatpush.bf16.msra.mxu0 0
    %958 = vmatpush.bf16.msra.mxu0 0
    %959 = vmatpush.bf16.msra.mxu0 0
    %960 = vmatpush.bf16.msra.mxu0 0
    %961 = vmatpush.bf16.msra.mxu0 0
    %962 = vmatpush.bf16.msra.mxu0 %v950
    %963 = vmatpush.bf16.msra.mxu0 %v949
    %964 = vmatmul.bf16.gmra.mxu0 %v954
    %v965 = vpop.f32.mrf.mxu0
    %v966 = vadd.f32 %v939, %v965
    %v967 = vpop.f32.mrf.mxu0
    %v968 = vadd.f32 %v939, %v967
    %969 = vdwg.mxu0
    %v970 = vmul.f32 %v966, 0.35355338
    %v971 = vmul.f32 %v968, 0.35355338
    %v972 = vpack.c.bf16 %v970, %v970
    %v973 = vpack.c.bf16 %v971, %v971
    %976 = vrot.lane.b32.xlu0 %v972, 120
    %v977 = vpop.permute.xlu0 %976
    %978 = vrot.lane.b32.xlu0 %v973, 120
    %v979 = vpop.permute.xlu0 %978
    %980 = vrot.lane.b32.xlu0 %v972, 112
    %v981 = vpop.permute.xlu0 %980
    %982 = vrot.lane.b32.xlu0 %v973, 112
    %v983 = vpop.permute.xlu0 %982
    %984 = vrot.lane.b32.xlu0 %v972, 104
    %v985 = vpop.permute.xlu0 %984
    %986 = vrot.lane.b32.xlu0 %v973, 104
    %v987 = vpop.permute.xlu0 %986
    %v988 = vpack.c.bf16 %v147, %v147
    %v989 = vpack.c.bf16 %v149, %v149
    %v990 = vpack.c.bf16 %v152, %v152
    %v991 = vpack.c.bf16 %v154, %v154
    %996 = vrot.lane.b32.xlu0 %v988, 120
    %v997 = vpop.permute.xlu0 %996
    %998 = vrot.lane.b32.xlu0 %v989, 120
    %v999 = vpop.permute.xlu0 %998
    %1000 = vrot.lane.b32.xlu0 %v990, 120
    %v1001 = vpop.permute.xlu0 %1000
    %1002 = vrot.lane.b32.xlu0 %v991, 120
    %v1003 = vpop.permute.xlu0 %1002
    %1004 = vrot.lane.b32.xlu0 %v988, 112
    %v1005 = vpop.permute.xlu0 %1004
    %1006 = vrot.lane.b32.xlu0 %v989, 112
    %v1007 = vpop.permute.xlu0 %1006
    %1008 = vrot.lane.b32.xlu0 %v990, 112
    %v1009 = vpop.permute.xlu0 %1008
    %1010 = vrot.lane.b32.xlu0 %v991, 112
    %v1011 = vpop.permute.xlu0 %1010
    %1012 = vrot.lane.b32.xlu0 %v988, 104
    %v1013 = vpop.permute.xlu0 %1012
    %1014 = vrot.lane.b32.xlu0 %v989, 104
    %v1015 = vpop.permute.xlu0 %1014
    %1016 = vrot.lane.b32.xlu0 %v990, 104
    %v1017 = vpop.permute.xlu0 %1016
    %1018 = vrot.lane.b32.xlu0 %v991, 104
    %v1019 = vpop.permute.xlu0 %1018
    %v1020 = vpack.c.bf16 %v172, %v172
    %v1021 = vpack.c.bf16 %v174, %v174
    %1024 = vrot.lane.b32.xlu0 %v1020, 120
    %v1025 = vpop.permute.xlu0 %1024
    %1026 = vrot.lane.b32.xlu0 %v1021, 120
    %v1027 = vpop.permute.xlu0 %1026
    %1028 = vrot.lane.b32.xlu0 %v1020, 112
    %v1029 = vpop.permute.xlu0 %1028
    %1030 = vrot.lane.b32.xlu0 %v1021, 112
    %v1031 = vpop.permute.xlu0 %1030
    %1032 = vrot.lane.b32.xlu0 %v1020, 104
    %v1033 = vpop.permute.xlu0 %1032
    %1034 = vrot.lane.b32.xlu0 %v1021, 104
    %v1035 = vpop.permute.xlu0 %1034
    %v1036 = vunpack.c.l.b16 %v988
    %v1037 = vunpack.c.l.b16 %v989
    %v1038 = vpack.c.b16 %v1037, %v1036
    %v1040 = vsel %vm253, %v972, 0
    %v1043 = vsel %vm253, %v1038, 0
    %1045 = vmatpush.bf16.xpose.msra.mxu0 0
    %1046 = vmatpush.bf16.xpose.msra.mxu0 0
    %1047 = vmatpush.bf16.xpose.msra.mxu0 0
    %1048 = vmatpush.bf16.xpose.msra.mxu0 0
    %1049 = vmatpush.bf16.xpose.msra.mxu0 0
    %1050 = vmatpush.bf16.xpose.msra.mxu0 0
    %1051 = vmatpush.bf16.xpose.msra.mxu0 0
    %1052 = vmatpush.bf16.xpose.msra.mxu0 %v1043
    %1053 = vmatmul.bf16.gmra.mxu0 %v1040
    %v1054 = vpop.f32.mrf.mxu0
    %v1055 = vadd.f32 %v98, %v1054
    %v1056 = vpop.f32.mrf.mxu0
    %1057 = vdwg.mxu0
    %v1058 = vunpack.c.l.b16 %v990
    %v1059 = vunpack.c.l.b16 %v991
    %v1060 = vpack.c.b16 %v1059, %v1058
    %v1062 = vsel %vm253, %v973, 0
    %v1065 = vsel %vm253, %v1060, 0
    %1067 = vmatpush.bf16.xpose.msra.mxu0 0
    %1068 = vmatpush.bf16.xpose.msra.mxu0 0
    %1069 = vmatpush.bf16.xpose.msra.mxu0 0
    %1070 = vmatpush.bf16.xpose.msra.mxu0 0
    %1071 = vmatpush.bf16.xpose.msra.mxu0 0
    %1072 = vmatpush.bf16.xpose.msra.mxu0 0
    %1073 = vmatpush.bf16.xpose.msra.mxu0 0
    %1074 = vmatpush.bf16.xpose.msra.mxu0 %v1065
    %1075 = vmatmul.bf16.gmra.mxu0 %v1062
    %v1076 = vpop.f32.mrf.mxu0
    %v1077 = vadd.f32 %v99, %v1076
    %v1078 = vpop.f32.mrf.mxu0
    %1079 = vdwg.mxu0
    %v1080 = vunpack.c.l.b16 %v997
    %v1081 = vunpack.c.l.b16 %v999
    %v1082 = vpack.c.b16 %v1081, %v1080
    %v1084 = vsel %vm253, %v977, 0
    %v1087 = vsel %vm253, %v1082, 0
    %1089 = vmatpush.bf16.xpose.msra.mxu0 0
    %1090 = vmatpush.bf16.xpose.msra.mxu0 0
    %1091 = vmatpush.bf16.xpose.msra.mxu0 0
    %1092 = vmatpush.bf16.xpose.msra.mxu0 0
    %1093 = vmatpush.bf16.xpose.msra.mxu0 0
    %1094 = vmatpush.bf16.xpose.msra.mxu0 0
    %1095 = vmatpush.bf16.xpose.msra.mxu0 0
    %1096 = vmatpush.bf16.xpose.msra.mxu0 %v1087
    %1097 = vmatmul.bf16.gmra.mxu0 %v1084
    %v1098 = vpop.f32.mrf.mxu0
    %v1099 = vadd.f32 %v98, %v1098
    %v1100 = vpop.f32.mrf.mxu0
    %1101 = vdwg.mxu0
    %v1102 = vunpack.c.l.b16 %v1001
    %v1103 = vunpack.c.l.b16 %v1003
    %v1104 = vpack.c.b16 %v1103, %v1102
    %v1106 = vsel %vm253, %v979, 0
    %v1109 = vsel %vm253, %v1104, 0
    %1111 = vmatpush.bf16.xpose.msra.mxu0 0
    %1112 = vmatpush.bf16.xpose.msra.mxu0 0
    %1113 = vmatpush.bf16.xpose.msra.mxu0 0
    %1114 = vmatpush.bf16.xpose.msra.mxu0 0
    %1115 = vmatpush.bf16.xpose.msra.mxu0 0
    %1116 = vmatpush.bf16.xpose.msra.mxu0 0
    %1117 = vmatpush.bf16.xpose.msra.mxu0 0
    %1118 = vmatpush.bf16.xpose.msra.mxu0 %v1109
    %1119 = vmatmul.bf16.gmra.mxu0 %v1106
    %v1120 = vpop.f32.mrf.mxu0
    %v1121 = vadd.f32 %v99, %v1120
    %v1122 = vpop.f32.mrf.mxu0
    %1123 = vdwg.mxu0
    %v1124 = vunpack.c.l.b16 %v1005
    %v1125 = vunpack.c.l.b16 %v1007
    %v1126 = vpack.c.b16 %v1125, %v1124
    %v1128 = vsel %vm253, %v981, 0
    %v1131 = vsel %vm253, %v1126, 0
    %1133 = vmatpush.bf16.xpose.msra.mxu0 0
    %1134 = vmatpush.bf16.xpose.msra.mxu0 0
    %1135 = vmatpush.bf16.xpose.msra.mxu0 0
    %1136 = vmatpush.bf16.xpose.msra.mxu0 0
    %1137 = vmatpush.bf16.xpose.msra.mxu0 0
    %1138 = vmatpush.bf16.xpose.msra.mxu0 0
    %1139 = vmatpush.bf16.xpose.msra.mxu0 0
    %1140 = vmatpush.bf16.xpose.msra.mxu0 %v1131
    %1141 = vmatmul.bf16.gmra.mxu0 %v1128
    %v1142 = vpop.f32.mrf.mxu0
    %v1143 = vadd.f32 %v98, %v1142
    %v1144 = vpop.f32.mrf.mxu0
    %1145 = vdwg.mxu0
    %v1146 = vunpack.c.l.b16 %v1009
    %v1147 = vunpack.c.l.b16 %v1011
    %v1148 = vpack.c.b16 %v1147, %v1146
    %v1150 = vsel %vm253, %v983, 0
    %v1153 = vsel %vm253, %v1148, 0
    %1155 = vmatpush.bf16.xpose.msra.mxu0 0
    %1156 = vmatpush.bf16.xpose.msra.mxu0 0
    %1157 = vmatpush.bf16.xpose.msra.mxu0 0
    %1158 = vmatpush.bf16.xpose.msra.mxu0 0
    %1159 = vmatpush.bf16.xpose.msra.mxu0 0
    %1160 = vmatpush.bf16.xpose.msra.mxu0 0
    %1161 = vmatpush.bf16.xpose.msra.mxu0 0
    %1162 = vmatpush.bf16.xpose.msra.mxu0 %v1153
    %1163 = vmatmul.bf16.gmra.mxu0 %v1150
    %v1164 = vpop.f32.mrf.mxu0
    %v1165 = vadd.f32 %v99, %v1164
    %v1166 = vpop.f32.mrf.mxu0
    %1167 = vdwg.mxu0
    %v1168 = vunpack.c.l.b16 %v1013
    %v1169 = vunpack.c.l.b16 %v1015
    %v1170 = vpack.c.b16 %v1169, %v1168
    %v1172 = vsel %vm253, %v985, 0
    %v1175 = vsel %vm253, %v1170, 0
    %1177 = vmatpush.bf16.xpose.msra.mxu0 0
    %1178 = vmatpush.bf16.xpose.msra.mxu0 0
    %1179 = vmatpush.bf16.xpose.msra.mxu0 0
    %1180 = vmatpush.bf16.xpose.msra.mxu0 0
    %1181 = vmatpush.bf16.xpose.msra.mxu0 0
    %1182 = vmatpush.bf16.xpose.msra.mxu0 0
    %1183 = vmatpush.bf16.xpose.msra.mxu0 0
    %1184 = vmatpush.bf16.xpose.msra.mxu0 %v1175
    %1185 = vmatmul.bf16.gmra.mxu0 %v1172
    %v1186 = vpop.f32.mrf.mxu0
    %v1187 = vadd.f32 %v98, %v1186
    %v1188 = vpop.f32.mrf.mxu0
    %1189 = vdwg.mxu0
    %v1190 = vunpack.c.l.b16 %v1017
    %v1191 = vunpack.c.l.b16 %v1019
    %v1192 = vpack.c.b16 %v1191, %v1190
    %v1194 = vsel %vm253, %v987, 0
    %v1197 = vsel %vm253, %v1192, 0
    %1199 = vmatpush.bf16.xpose.msra.mxu0 0
    %1200 = vmatpush.bf16.xpose.msra.mxu0 0
    %1201 = vmatpush.bf16.xpose.msra.mxu0 0
    %1202 = vmatpush.bf16.xpose.msra.mxu0 0
    %1203 = vmatpush.bf16.xpose.msra.mxu0 0
    %1204 = vmatpush.bf16.xpose.msra.mxu0 0
    %1205 = vmatpush.bf16.xpose.msra.mxu0 0
    %1206 = vmatpush.bf16.xpose.msra.mxu0 %v1197
    %1207 = vmatmul.bf16.gmra.mxu0 %v1194
    %v1208 = vpop.f32.mrf.mxu0
    %v1209 = vadd.f32 %v99, %v1208
    %v1210 = vpop.f32.mrf.mxu0
    %1211 = vdwg.mxu0
    %v1212 = vsel %vm829, %v1055, -inf
    %1213 = vmax.xlane.f32.xlu0 %v1212
    %v1214 = vpop.xlane.xlu0 %1213
    %v1215 = vsel %vm829, %v1077, -inf
    %1216 = vmax.xlane.f32.xlu0 %v1215
    %v1217 = vpop.xlane.xlu0 %1216
    %v1218 = vsel %vm829, %v1099, -inf
    %1219 = vmax.xlane.f32.xlu0 %v1218
    %v1220 = vpop.xlane.xlu0 %1219
    %v1221 = vsel %vm829, %v1121, -inf
    %1222 = vmax.xlane.f32.xlu0 %v1221
    %v1223 = vpop.xlane.xlu0 %1222
    %v1224 = vsel %vm829, %v1143, -inf
    %1225 = vmax.xlane.f32.xlu0 %v1224
    %v1226 = vpop.xlane.xlu0 %1225
    %v1227 = vsel %vm829, %v1165, -inf
    %1228 = vmax.xlane.f32.xlu0 %v1227
    %v1229 = vpop.xlane.xlu0 %1228
    %v1230 = vsel %vm829, %v1187, -inf
    %1231 = vmax.xlane.f32.xlu0 %v1230
    %v1232 = vpop.xlane.xlu0 %1231
    %v1233 = vsel %vm829, %v1209, -inf
    %1234 = vmax.xlane.f32.xlu0 %v1233
    %v1235 = vpop.xlane.xlu0 %1234
    %v1236 = vsub.f32 %v1055, %v1214
    %v1237 = vsub.f32 %v1077, %v1217
    %v1238 = vsub.f32 %v1099, %v1220
    %v1239 = vsub.f32 %v1121, %v1223
    %v1240 = vsub.f32 %v1143, %v1226
    %v1241 = vsub.f32 %v1165, %v1229
    %v1242 = vsub.f32 %v1187, %v1232
    %v1243 = vsub.f32 %v1209, %v1235
    %v1244 = vmul.f32 %v1236, 1.442695
    %v1245 = vpow.pop %v1244
    %v1246 = vmul.f32 %v1237, 1.442695
    %v1247 = vpow.pop %v1246
    %v1248 = vmul.f32 %v1238, 1.442695
    %v1249 = vpow.pop %v1248
    %v1250 = vmul.f32 %v1239, 1.442695
    %v1251 = vpow.pop %v1250
    %v1252 = vmul.f32 %v1240, 1.442695
    %v1253 = vpow.pop %v1252
    %v1254 = vmul.f32 %v1241, 1.442695
    %v1255 = vpow.pop %v1254
    %v1256 = vmul.f32 %v1242, 1.442695
    %v1257 = vpow.pop %v1256
    %v1258 = vmul.f32 %v1243, 1.442695
    %v1259 = vpow.pop %v1258
    %v1260 = vsel %vm829, %v1245, 0.0
    %1261 = vadd.xlane.f32.xlu0 %v1260
    %v1262 = vpop.xlane.xlu0 %1261
    %v1263 = vsel %vm829, %v1247, 0.0
    %1264 = vadd.xlane.f32.xlu0 %v1263
    %v1265 = vpop.xlane.xlu0 %1264
    %v1266 = vsel %vm829, %v1249, 0.0
    %1267 = vadd.xlane.f32.xlu0 %v1266
    %v1268 = vpop.xlane.xlu0 %1267
    %v1269 = vsel %vm829, %v1251, 0.0
    %1270 = vadd.xlane.f32.xlu0 %v1269
    %v1271 = vpop.xlane.xlu0 %1270
    %v1272 = vsel %vm829, %v1253, 0.0
    %1273 = vadd.xlane.f32.xlu0 %v1272
    %v1274 = vpop.xlane.xlu0 %1273
    %v1275 = vsel %vm829, %v1255, 0.0
    %1276 = vadd.xlane.f32.xlu0 %v1275
    %v1277 = vpop.xlane.xlu0 %1276
    %v1278 = vsel %vm829, %v1257, 0.0
    %1279 = vadd.xlane.f32.xlu0 %v1278
    %v1280 = vpop.xlane.xlu0 %1279
    %v1281 = vsel %vm829, %v1259, 0.0
    %1282 = vadd.xlane.f32.xlu0 %v1281
    %v1283 = vpop.xlane.xlu0 %1282
    %v1284 = vrcp.pop %v1262
    %v1285 = vmul.f32 %v1262, %v1284
    %v1286 = vsub.f32 1.0, %v1285
    %v1287 = vmul.f32 %v1284, %v1286
    %v1288 = vadd.f32 %v1284, %v1287
    %vm1289 = vweird.f32 %v1262
    %vm1290 = vweird.f32 %v1284
    %vm1291 = vmor %vm1289, %vm1290
    %v1292 = vsel %vm1291, %v1284, %v1288
    %v1293 = vand.u32 2147483647, %v1262
    %vm1294 = vcmp.eq.f32.partialorder %v1293, 8.507059e+37
    %v1295 = vand.u32 %v1262, 2147483648
    %v1296 = vor.u32 1.1754944e-38, %v1295
    %v1297 = vsel %vm1294, %v1296, %v1292
    %v1298 = vmul.f32 %v1245, %v1297
    %v1299 = vrcp.pop %v1265
    %v1300 = vmul.f32 %v1265, %v1299
    %v1301 = vsub.f32 1.0, %v1300
    %v1302 = vmul.f32 %v1299, %v1301
    %v1303 = vadd.f32 %v1299, %v1302
    %vm1304 = vweird.f32 %v1265
    %vm1305 = vweird.f32 %v1299
    %vm1306 = vmor %vm1304, %vm1305
    %v1307 = vsel %vm1306, %v1299, %v1303
    %v1308 = vand.u32 2147483647, %v1265
    %vm1309 = vcmp.eq.f32.partialorder %v1308, 8.507059e+37
    %v1310 = vand.u32 %v1265, 2147483648
    %v1311 = vor.u32 1.1754944e-38, %v1310
    %v1312 = vsel %vm1309, %v1311, %v1307
    %v1313 = vmul.f32 %v1247, %v1312
    %v1314 = vrcp.pop %v1268
    %v1315 = vmul.f32 %v1268, %v1314
    %v1316 = vsub.f32 1.0, %v1315
    %v1317 = vmul.f32 %v1314, %v1316
    %v1318 = vadd.f32 %v1314, %v1317
    %vm1319 = vweird.f32 %v1268
    %vm1320 = vweird.f32 %v1314
    %vm1321 = vmor %vm1319, %vm1320
    %v1322 = vsel %vm1321, %v1314, %v1318
    %v1323 = vand.u32 2147483647, %v1268
    %vm1324 = vcmp.eq.f32.partialorder %v1323, 8.507059e+37
    %v1325 = vand.u32 %v1268, 2147483648
    %v1326 = vor.u32 1.1754944e-38, %v1325
    %v1327 = vsel %vm1324, %v1326, %v1322
    %v1328 = vmul.f32 %v1249, %v1327
    %v1329 = vrcp.pop %v1271
    %v1330 = vmul.f32 %v1271, %v1329
    %v1331 = vsub.f32 1.0, %v1330
    %v1332 = vmul.f32 %v1329, %v1331
    %v1333 = vadd.f32 %v1329, %v1332
    %vm1334 = vweird.f32 %v1271
    %vm1335 = vweird.f32 %v1329
    %vm1336 = vmor %vm1334, %vm1335
    %v1337 = vsel %vm1336, %v1329, %v1333
    %v1338 = vand.u32 2147483647, %v1271
    %vm1339 = vcmp.eq.f32.partialorder %v1338, 8.507059e+37
    %v1340 = vand.u32 %v1271, 2147483648
    %v1341 = vor.u32 1.1754944e-38, %v1340
    %v1342 = vsel %vm1339, %v1341, %v1337
    %v1343 = vmul.f32 %v1251, %v1342
    %v1344 = vrcp.pop %v1274
    %v1345 = vmul.f32 %v1274, %v1344
    %v1346 = vsub.f32 1.0, %v1345
    %v1347 = vmul.f32 %v1344, %v1346
    %v1348 = vadd.f32 %v1344, %v1347
    %vm1349 = vweird.f32 %v1274
    %vm1350 = vweird.f32 %v1344
    %vm1351 = vmor %vm1349, %vm1350
    %v1352 = vsel %vm1351, %v1344, %v1348
    %v1353 = vand.u32 2147483647, %v1274
    %vm1354 = vcmp.eq.f32.partialorder %v1353, 8.507059e+37
    %v1355 = vand.u32 %v1274, 2147483648
    %v1356 = vor.u32 1.1754944e-38, %v1355
    %v1357 = vsel %vm1354, %v1356, %v1352
    %v1358 = vmul.f32 %v1253, %v1357
    %v1359 = vrcp.pop %v1277
    %v1360 = vmul.f32 %v1277, %v1359
    %v1361 = vsub.f32 1.0, %v1360
    %v1362 = vmul.f32 %v1359, %v1361
    %v1363 = vadd.f32 %v1359, %v1362
    %vm1364 = vweird.f32 %v1277
    %vm1365 = vweird.f32 %v1359
    %vm1366 = vmor %vm1364, %vm1365
    %v1367 = vsel %vm1366, %v1359, %v1363
    %v1368 = vand.u32 2147483647, %v1277
    %vm1369 = vcmp.eq.f32.partialorder %v1368, 8.507059e+37
    %v1370 = vand.u32 %v1277, 2147483648
    %v1371 = vor.u32 1.1754944e-38, %v1370
    %v1372 = vsel %vm1369, %v1371, %v1367
    %v1373 = vmul.f32 %v1255, %v1372
    %v1374 = vrcp.pop %v1280
    %v1375 = vmul.f32 %v1280, %v1374
    %v1376 = vsub.f32 1.0, %v1375
    %v1377 = vmul.f32 %v1374, %v1376
    %v1378 = vadd.f32 %v1374, %v1377
    %vm1379 = vweird.f32 %v1280
    %vm1380 = vweird.f32 %v1374
    %vm1381 = vmor %vm1379, %vm1380
    %v1382 = vsel %vm1381, %v1374, %v1378
    %v1383 = vand.u32 2147483647, %v1280
    %vm1384 = vcmp.eq.f32.partialorder %v1383, 8.507059e+37
    %v1385 = vand.u32 %v1280, 2147483648
    %v1386 = vor.u32 1.1754944e-38, %v1385
    %v1387 = vsel %vm1384, %v1386, %v1382
    %v1388 = vmul.f32 %v1257, %v1387
    %v1389 = vrcp.pop %v1283
    %v1390 = vmul.f32 %v1283, %v1389
    %v1391 = vsub.f32 1.0, %v1390
    %v1392 = vmul.f32 %v1389, %v1391
    %v1393 = vadd.f32 %v1389, %v1392
    %vm1394 = vweird.f32 %v1283
    %vm1395 = vweird.f32 %v1389
    %vm1396 = vmor %vm1394, %vm1395
    %v1397 = vsel %vm1396, %v1389, %v1393
    %v1398 = vand.u32 2147483647, %v1283
    %vm1399 = vcmp.eq.f32.partialorder %v1398, 8.507059e+37
    %v1400 = vand.u32 %v1283, 2147483648
    %v1401 = vor.u32 1.1754944e-38, %v1400
    %v1402 = vsel %vm1399, %v1401, %v1397
    %v1403 = vmul.f32 %v1259, %v1402
    %v1404 = vpack.c.bf16 %v1298, %v1298
    %v1405 = vpack.c.bf16 %v1313, %v1313
    %v1406 = vpack.c.bf16 %v1328, %v1328
    %v1407 = vpack.c.bf16 %v1343, %v1343
    %v1408 = vpack.c.bf16 %v1358, %v1358
    %v1409 = vpack.c.bf16 %v1373, %v1373
    %v1410 = vpack.c.bf16 %v1388, %v1388
    %v1411 = vpack.c.bf16 %v1403, %v1403
    %1412 = vrot.lane.b32.xlu0 %v1038, 96
    %v1413 = vpop.permute.xlu0 %1412
    %v1416 = vsel %vm829, %v1404, 0
    %1418 = vmatpush.bf16.msra.mxu0 0
    %1419 = vmatpush.bf16.msra.mxu0 0
    %1420 = vmatpush.bf16.msra.mxu0 0
    %1421 = vmatpush.bf16.msra.mxu0 0
    %1422 = vmatpush.bf16.msra.mxu0 0
    %1423 = vmatpush.bf16.msra.mxu0 0
    %1424 = vmatpush.bf16.msra.mxu0 0
    %1425 = vmatpush.bf16.msra.mxu0 %v1413
    %1426 = vmatmul.bf16.gmra.mxu0 %v1416
    %v1427 = vpop.f32.mrf.mxu0
    %v1428 = vadd.f32 0.0, %v1427
    %v1429 = vpop.f32.mrf.mxu0
    %1430 = vdwg.mxu0
    %1431 = vrot.lane.b32.xlu0 %v1060, 96
    %v1432 = vpop.permute.xlu0 %1431
    %v1435 = vsel %vm829, %v1405, 0
    %1437 = vmatpush.bf16.msra.mxu0 0
    %1438 = vmatpush.bf16.msra.mxu0 0
    %1439 = vmatpush.bf16.msra.mxu0 0
    %1440 = vmatpush.bf16.msra.mxu0 0
    %1441 = vmatpush.bf16.msra.mxu0 0
    %1442 = vmatpush.bf16.msra.mxu0 0
    %1443 = vmatpush.bf16.msra.mxu0 0
    %1444 = vmatpush.bf16.msra.mxu0 %v1432
    %1445 = vmatmul.bf16.gmra.mxu0 %v1435
    %v1446 = vpop.f32.mrf.mxu0
    %v1447 = vadd.f32 0.0, %v1446
    %v1448 = vpop.f32.mrf.mxu0
    %1449 = vdwg.mxu0
    %1450 = vrot.lane.b32.xlu0 %v1082, 96
    %v1451 = vpop.permute.xlu0 %1450
    %v1454 = vsel %vm829, %v1406, 0
    %1456 = vmatpush.bf16.msra.mxu0 0
    %1457 = vmatpush.bf16.msra.mxu0 0
    %1458 = vmatpush.bf16.msra.mxu0 0
    %1459 = vmatpush.bf16.msra.mxu0 0
    %1460 = vmatpush.bf16.msra.mxu0 0
    %1461 = vmatpush.bf16.msra.mxu0 0
    %1462 = vmatpush.bf16.msra.mxu0 0
    %1463 = vmatpush.bf16.msra.mxu0 %v1451
    %1464 = vmatmul.bf16.gmra.mxu0 %v1454
    %v1465 = vpop.f32.mrf.mxu0
    %v1466 = vadd.f32 0.0, %v1465
    %v1467 = vpop.f32.mrf.mxu0
    %1468 = vdwg.mxu0
    %1469 = vrot.lane.b32.xlu0 %v1104, 96
    %v1470 = vpop.permute.xlu0 %1469
    %v1473 = vsel %vm829, %v1407, 0
    %1475 = vmatpush.bf16.msra.mxu0 0
    %1476 = vmatpush.bf16.msra.mxu0 0
    %1477 = vmatpush.bf16.msra.mxu0 0
    %1478 = vmatpush.bf16.msra.mxu0 0
    %1479 = vmatpush.bf16.msra.mxu0 0
    %1480 = vmatpush.bf16.msra.mxu0 0
    %1481 = vmatpush.bf16.msra.mxu0 0
    %1482 = vmatpush.bf16.msra.mxu0 %v1470
    %1483 = vmatmul.bf16.gmra.mxu0 %v1473
    %v1484 = vpop.f32.mrf.mxu0
    %v1485 = vadd.f32 0.0, %v1484
    %v1486 = vpop.f32.mrf.mxu0
    %1487 = vdwg.mxu0
    %1488 = vrot.lane.b32.xlu0 %v1126, 96
    %v1489 = vpop.permute.xlu0 %1488
    %v1492 = vsel %vm829, %v1408, 0
    %1494 = vmatpush.bf16.msra.mxu0 0
    %1495 = vmatpush.bf16.msra.mxu0 0
    %1496 = vmatpush.bf16.msra.mxu0 0
    %1497 = vmatpush.bf16.msra.mxu0 0
    %1498 = vmatpush.bf16.msra.mxu0 0
    %1499 = vmatpush.bf16.msra.mxu0 0
    %1500 = vmatpush.bf16.msra.mxu0 0
    %1501 = vmatpush.bf16.msra.mxu0 %v1489
    %1502 = vmatmul.bf16.gmra.mxu0 %v1492
    %v1503 = vpop.f32.mrf.mxu0
    %v1504 = vadd.f32 0.0, %v1503
    %v1505 = vpop.f32.mrf.mxu0
    %1506 = vdwg.mxu0
    %1507 = vrot.lane.b32.xlu0 %v1148, 96
    %v1508 = vpop.permute.xlu0 %1507
    %v1511 = vsel %vm829, %v1409, 0
    %1513 = vmatpush.bf16.msra.mxu0 0
    %1514 = vmatpush.bf16.msra.mxu0 0
    %1515 = vmatpush.bf16.msra.mxu0 0
    %1516 = vmatpush.bf16.msra.mxu0 0
    %1517 = vmatpush.bf16.msra.mxu0 0
    %1518 = vmatpush.bf16.msra.mxu0 0
    %1519 = vmatpush.bf16.msra.mxu0 0
    %1520 = vmatpush.bf16.msra.mxu0 %v1508
    %1521 = vmatmul.bf16.gmra.mxu0 %v1511
    %v1522 = vpop.f32.mrf.mxu0
    %v1523 = vadd.f32 0.0, %v1522
    %v1524 = vpop.f32.mrf.mxu0
    %1525 = vdwg.mxu0
    %1526 = vrot.lane.b32.xlu0 %v1170, 96
    %v1527 = vpop.permute.xlu0 %1526
    %v1530 = vsel %vm829, %v1410, 0
    %1532 = vmatpush.bf16.msra.mxu0 0
    %1533 = vmatpush.bf16.msra.mxu0 0
    %1534 = vmatpush.bf16.msra.mxu0 0
    %1535 = vmatpush.bf16.msra.mxu0 0
    %1536 = vmatpush.bf16.msra.mxu0 0
    %1537 = vmatpush.bf16.msra.mxu0 0
    %1538 = vmatpush.bf16.msra.mxu0 0
    %1539 = vmatpush.bf16.msra.mxu0 %v1527
    %1540 = vmatmul.bf16.gmra.mxu0 %v1530
    %v1541 = vpop.f32.mrf.mxu0
    %v1542 = vadd.f32 0.0, %v1541
    %v1543 = vpop.f32.mrf.mxu0
    %1544 = vdwg.mxu0
    %1545 = vrot.lane.b32.xlu0 %v1192, 96
    %v1546 = vpop.permute.xlu0 %1545
    %v1549 = vsel %vm829, %v1411, 0
    %1551 = vmatpush.bf16.msra.mxu0 0
    %1552 = vmatpush.bf16.msra.mxu0 0
    %1553 = vmatpush.bf16.msra.mxu0 0
    %1554 = vmatpush.bf16.msra.mxu0 0
    %1555 = vmatpush.bf16.msra.mxu0 0
    %1556 = vmatpush.bf16.msra.mxu0 0
    %1557 = vmatpush.bf16.msra.mxu0 0
    %1558 = vmatpush.bf16.msra.mxu0 %v1546
    %1559 = vmatmul.bf16.gmra.mxu0 %v1549
    %v1560 = vpop.f32.mrf.mxu0
    %v1561 = vadd.f32 0.0, %v1560
    %v1562 = vpop.f32.mrf.mxu0
    %1563 = vdwg.mxu0
    %1566 = vrot.lane.b32.xlu0 %v1466, 8
    %v1567 = vpop.permute.xlu0 %1566
    %1568 = vrot.lane.b32.xlu0 %v1485, 8
    %v1569 = vpop.permute.xlu0 %1568
    %1574 = vrot.lane.b32.xlu0 %v1504, 16
    %v1575 = vpop.permute.xlu0 %1574
    %1576 = vrot.lane.b32.xlu0 %v1523, 16
    %v1577 = vpop.permute.xlu0 %1576
    %1582 = vrot.lane.b32.xlu0 %v1542, 24
    %v1583 = vpop.permute.xlu0 %1582
    %1584 = vrot.lane.b32.xlu0 %v1561, 24
    %v1585 = vpop.permute.xlu0 %1584
    %v1588 = vsel %vm253, %v1428, %v1567
    %v1589 = vsel %vm253, %v1447, %v1569
    %v1590 = vsel %vm829, %v1588, %v1575
    %v1591 = vsel %vm829, %v1589, %v1577
    %v1592 = vsel %vm832, %v1590, %v1583
    %v1593 = vsel %vm832, %v1591, %v1585
    %v1595 = vsel %vm253, %v1020, 0
    %1597 = vmatpush.bf16.xpose.msra.mxu0 0
    %1598 = vmatpush.bf16.xpose.msra.mxu0 0
    %1599 = vmatpush.bf16.xpose.msra.mxu0 0
    %1600 = vmatpush.bf16.xpose.msra.mxu0 0
    %1601 = vmatpush.bf16.xpose.msra.mxu0 0
    %1602 = vmatpush.bf16.xpose.msra.mxu0 0
    %1603 = vmatpush.bf16.xpose.msra.mxu0 0
    %1604 = vmatpush.bf16.xpose.msra.mxu0 %v1595
    %1605 = vmatmul.bf16.gmra.mxu0 %v1040
    %v1606 = vpop.f32.mrf.mxu0
    %v1607 = vadd.f32 0.0, %v1606
    %v1608 = vpop.f32.mrf.mxu0
    %1609 = vdwg.mxu0
    %v1611 = vsel %vm253, %v1021, 0
    %1613 = vmatpush.bf16.xpose.msra.mxu0 0
    %1614 = vmatpush.bf16.xpose.msra.mxu0 0
    %1615 = vmatpush.bf16.xpose.msra.mxu0 0
    %1616 = vmatpush.bf16.xpose.msra.mxu0 0
    %1617 = vmatpush.bf16.xpose.msra.mxu0 0
    %1618 = vmatpush.bf16.xpose.msra.mxu0 0
    %1619 = vmatpush.bf16.xpose.msra.mxu0 0
    %1620 = vmatpush.bf16.xpose.msra.mxu0 %v1611
    %1621 = vmatmul.bf16.gmra.mxu0 %v1062
    %v1622 = vpop.f32.mrf.mxu0
    %v1623 = vadd.f32 0.0, %v1622
    %v1624 = vpop.f32.mrf.mxu0
    %1625 = vdwg.mxu0
    %v1627 = vsel %vm253, %v1025, 0
    %1629 = vmatpush.bf16.xpose.msra.mxu0 0
    %1630 = vmatpush.bf16.xpose.msra.mxu0 0
    %1631 = vmatpush.bf16.xpose.msra.mxu0 0
    %1632 = vmatpush.bf16.xpose.msra.mxu0 0
    %1633 = vmatpush.bf16.xpose.msra.mxu0 0
    %1634 = vmatpush.bf16.xpose.msra.mxu0 0
    %1635 = vmatpush.bf16.xpose.msra.mxu0 0
    %1636 = vmatpush.bf16.xpose.msra.mxu0 %v1627
    %1637 = vmatmul.bf16.gmra.mxu0 %v1084
    %v1638 = vpop.f32.mrf.mxu0
    %v1639 = vadd.f32 0.0, %v1638
    %v1640 = vpop.f32.mrf.mxu0
    %1641 = vdwg.mxu0
    %v1643 = vsel %vm253, %v1027, 0
    %1645 = vmatpush.bf16.xpose.msra.mxu0 0
    %1646 = vmatpush.bf16.xpose.msra.mxu0 0
    %1647 = vmatpush.bf16.xpose.msra.mxu0 0
    %1648 = vmatpush.bf16.xpose.msra.mxu0 0
    %1649 = vmatpush.bf16.xpose.msra.mxu0 0
    %1650 = vmatpush.bf16.xpose.msra.mxu0 0
    %1651 = vmatpush.bf16.xpose.msra.mxu0 0
    %1652 = vmatpush.bf16.xpose.msra.mxu0 %v1643
    %1653 = vmatmul.bf16.gmra.mxu0 %v1106
    %v1654 = vpop.f32.mrf.mxu0
    %v1655 = vadd.f32 0.0, %v1654
    %v1656 = vpop.f32.mrf.mxu0
    %1657 = vdwg.mxu0
    %v1659 = vsel %vm253, %v1029, 0
    %1661 = vmatpush.bf16.xpose.msra.mxu0 0
    %1662 = vmatpush.bf16.xpose.msra.mxu0 0
    %1663 = vmatpush.bf16.xpose.msra.mxu0 0
    %1664 = vmatpush.bf16.xpose.msra.mxu0 0
    %1665 = vmatpush.bf16.xpose.msra.mxu0 0
    %1666 = vmatpush.bf16.xpose.msra.mxu0 0
    %1667 = vmatpush.bf16.xpose.msra.mxu0 0
    %1668 = vmatpush.bf16.xpose.msra.mxu0 %v1659
    %1669 = vmatmul.bf16.gmra.mxu0 %v1128
    %v1670 = vpop.f32.mrf.mxu0
    %v1671 = vadd.f32 0.0, %v1670
    %v1672 = vpop.f32.mrf.mxu0
    %1673 = vdwg.mxu0
    %v1675 = vsel %vm253, %v1031, 0
    %1677 = vmatpush.bf16.xpose.msra.mxu0 0
    %1678 = vmatpush.bf16.xpose.msra.mxu0 0
    %1679 = vmatpush.bf16.xpose.msra.mxu0 0
    %1680 = vmatpush.bf16.xpose.msra.mxu0 0
    %1681 = vmatpush.bf16.xpose.msra.mxu0 0
    %1682 = vmatpush.bf16.xpose.msra.mxu0 0
    %1683 = vmatpush.bf16.xpose.msra.mxu0 0
    %1684 = vmatpush.bf16.xpose.msra.mxu0 %v1675
    %1685 = vmatmul.bf16.gmra.mxu0 %v1150
    %v1686 = vpop.f32.mrf.mxu0
    %v1687 = vadd.f32 0.0, %v1686
    %v1688 = vpop.f32.mrf.mxu0
    %1689 = vdwg.mxu0
    %v1691 = vsel %vm253, %v1033, 0
    %1693 = vmatpush.bf16.xpose.msra.mxu0 0
    %1694 = vmatpush.bf16.xpose.msra.mxu0 0
    %1695 = vmatpush.bf16.xpose.msra.mxu0 0
    %1696 = vmatpush.bf16.xpose.msra.mxu0 0
    %1697 = vmatpush.bf16.xpose.msra.mxu0 0
    %1698 = vmatpush.bf16.xpose.msra.mxu0 0
    %1699 = vmatpush.bf16.xpose.msra.mxu0 0
    %1700 = vmatpush.bf16.xpose.msra.mxu0 %v1691
    %1701 = vmatmul.bf16.gmra.mxu0 %v1172
    %v1702 = vpop.f32.mrf.mxu0
    %v1703 = vadd.f32 0.0, %v1702
    %v1704 = vpop.f32.mrf.mxu0
    %1705 = vdwg.mxu0
    %v1707 = vsel %vm253, %v1035, 0
    %1709 = vmatpush.bf16.xpose.msra.mxu0 0
    %1710 = vmatpush.bf16.xpose.msra.mxu0 0
    %1711 = vmatpush.bf16.xpose.msra.mxu0 0
    %1712 = vmatpush.bf16.xpose.msra.mxu0 0
    %1713 = vmatpush.bf16.xpose.msra.mxu0 0
    %1714 = vmatpush.bf16.xpose.msra.mxu0 0
    %1715 = vmatpush.bf16.xpose.msra.mxu0 0
    %1716 = vmatpush.bf16.xpose.msra.mxu0 %v1707
    %1717 = vmatmul.bf16.gmra.mxu0 %v1194
    %v1718 = vpop.f32.mrf.mxu0
    %v1719 = vadd.f32 0.0, %v1718
    %v1720 = vpop.f32.mrf.mxu0
    %1721 = vdwg.mxu0
    %v1722 = vxor.u32 %v1607, 2147483648
    %v1723 = vxor.u32 %v1623, 2147483648
    %v1724 = vxor.u32 %v1639, 2147483648
    %v1725 = vxor.u32 %v1655, 2147483648
    %v1726 = vxor.u32 %v1671, 2147483648
    %v1727 = vxor.u32 %v1687, 2147483648
    %v1728 = vxor.u32 %v1703, 2147483648
    %v1729 = vxor.u32 %v1719, 2147483648
    %v1730 = vmul.f32 %v1722, 1.442695
    %v1731 = vpow.pop %v1730
    %v1732 = vmul.f32 %v1723, 1.442695
    %v1733 = vpow.pop %v1732
    %v1734 = vmul.f32 %v1724, 1.442695
    %v1735 = vpow.pop %v1734
    %v1736 = vmul.f32 %v1725, 1.442695
    %v1737 = vpow.pop %v1736
    %v1738 = vmul.f32 %v1726, 1.442695
    %v1739 = vpow.pop %v1738
    %v1740 = vmul.f32 %v1727, 1.442695
    %v1741 = vpow.pop %v1740
    %v1742 = vmul.f32 %v1728, 1.442695
    %v1743 = vpow.pop %v1742
    %v1744 = vmul.f32 %v1729, 1.442695
    %v1745 = vpow.pop %v1744
    %v1746 = vadd.f32 %v1731, 1.0
    %v1747 = vadd.f32 %v1733, 1.0
    %v1748 = vadd.f32 %v1735, 1.0
    %v1749 = vadd.f32 %v1737, 1.0
    %v1750 = vadd.f32 %v1739, 1.0
    %v1751 = vadd.f32 %v1741, 1.0
    %v1752 = vadd.f32 %v1743, 1.0
    %v1753 = vadd.f32 %v1745, 1.0
    %v1754 = vrcp.pop %v1746
    %v1755 = vmul.f32 %v1746, %v1754
    %v1756 = vsub.f32 1.0, %v1755
    %v1757 = vmul.f32 %v1754, %v1756
    %v1758 = vadd.f32 %v1754, %v1757
    %vm1759 = vweird.f32 %v1746
    %vm1760 = vweird.f32 %v1754
    %vm1761 = vmor %vm1759, %vm1760
    %v1762 = vsel %vm1761, %v1754, %v1758
    %v1763 = vand.u32 2147483647, %v1746
    %vm1764 = vcmp.eq.f32.partialorder %v1763, 8.507059e+37
    %v1765 = vand.u32 %v1746, 2147483648
    %v1766 = vor.u32 1.1754944e-38, %v1765
    %v1767 = vsel %vm1764, %v1766, %v1762
    %v1768 = vmul.f32 1.0, %v1767
    %v1769 = vrcp.pop %v1747
    %v1770 = vmul.f32 %v1747, %v1769
    %v1771 = vsub.f32 1.0, %v1770
    %v1772 = vmul.f32 %v1769, %v1771
    %v1773 = vadd.f32 %v1769, %v1772
    %vm1774 = vweird.f32 %v1747
    %vm1775 = vweird.f32 %v1769
    %vm1776 = vmor %vm1774, %vm1775
    %v1777 = vsel %vm1776, %v1769, %v1773
    %v1778 = vand.u32 2147483647, %v1747
    %vm1779 = vcmp.eq.f32.partialorder %v1778, 8.507059e+37
    %v1780 = vand.u32 %v1747, 2147483648
    %v1781 = vor.u32 1.1754944e-38, %v1780
    %v1782 = vsel %vm1779, %v1781, %v1777
    %v1783 = vmul.f32 1.0, %v1782
    %v1784 = vrcp.pop %v1748
    %v1785 = vmul.f32 %v1748, %v1784
    %v1786 = vsub.f32 1.0, %v1785
    %v1787 = vmul.f32 %v1784, %v1786
    %v1788 = vadd.f32 %v1784, %v1787
    %vm1789 = vweird.f32 %v1748
    %vm1790 = vweird.f32 %v1784
    %vm1791 = vmor %vm1789, %vm1790
    %v1792 = vsel %vm1791, %v1784, %v1788
    %v1793 = vand.u32 2147483647, %v1748
    %vm1794 = vcmp.eq.f32.partialorder %v1793, 8.507059e+37
    %v1795 = vand.u32 %v1748, 2147483648
    %v1796 = vor.u32 1.1754944e-38, %v1795
    %v1797 = vsel %vm1794, %v1796, %v1792
    %v1798 = vmul.f32 1.0, %v1797
    %v1799 = vrcp.pop %v1749
    %v1800 = vmul.f32 %v1749, %v1799
    %v1801 = vsub.f32 1.0, %v1800
    %v1802 = vmul.f32 %v1799, %v1801
    %v1803 = vadd.f32 %v1799, %v1802
    %vm1804 = vweird.f32 %v1749
    %vm1805 = vweird.f32 %v1799
    %vm1806 = vmor %vm1804, %vm1805
    %v1807 = vsel %vm1806, %v1799, %v1803
    %v1808 = vand.u32 2147483647, %v1749
    %vm1809 = vcmp.eq.f32.partialorder %v1808, 8.507059e+37
    %v1810 = vand.u32 %v1749, 2147483648
    %v1811 = vor.u32 1.1754944e-38, %v1810
    %v1812 = vsel %vm1809, %v1811, %v1807
    %v1813 = vmul.f32 1.0, %v1812
    %v1814 = vrcp.pop %v1750
    %v1815 = vmul.f32 %v1750, %v1814
    %v1816 = vsub.f32 1.0, %v1815
    %v1817 = vmul.f32 %v1814, %v1816
    %v1818 = vadd.f32 %v1814, %v1817
    %vm1819 = vweird.f32 %v1750
    %vm1820 = vweird.f32 %v1814
    %vm1821 = vmor %vm1819, %vm1820
    %v1822 = vsel %vm1821, %v1814, %v1818
    %v1823 = vand.u32 2147483647, %v1750
    %vm1824 = vcmp.eq.f32.partialorder %v1823, 8.507059e+37
    %v1825 = vand.u32 %v1750, 2147483648
    %v1826 = vor.u32 1.1754944e-38, %v1825
    %v1827 = vsel %vm1824, %v1826, %v1822
    %v1828 = vmul.f32 1.0, %v1827
    %v1829 = vrcp.pop %v1751
    %v1830 = vmul.f32 %v1751, %v1829
    %v1831 = vsub.f32 1.0, %v1830
    %v1832 = vmul.f32 %v1829, %v1831
    %v1833 = vadd.f32 %v1829, %v1832
    %vm1834 = vweird.f32 %v1751
    %vm1835 = vweird.f32 %v1829
    %vm1836 = vmor %vm1834, %vm1835
    %v1837 = vsel %vm1836, %v1829, %v1833
    %v1838 = vand.u32 2147483647, %v1751
    %vm1839 = vcmp.eq.f32.partialorder %v1838, 8.507059e+37
    %v1840 = vand.u32 %v1751, 2147483648
    %v1841 = vor.u32 1.1754944e-38, %v1840
    %v1842 = vsel %vm1839, %v1841, %v1837
    %v1843 = vmul.f32 1.0, %v1842
    %v1844 = vrcp.pop %v1752
    %v1845 = vmul.f32 %v1752, %v1844
    %v1846 = vsub.f32 1.0, %v1845
    %v1847 = vmul.f32 %v1844, %v1846
    %v1848 = vadd.f32 %v1844, %v1847
    %vm1849 = vweird.f32 %v1752
    %vm1850 = vweird.f32 %v1844
    %vm1851 = vmor %vm1849, %vm1850
    %v1852 = vsel %vm1851, %v1844, %v1848
    %v1853 = vand.u32 2147483647, %v1752
    %vm1854 = vcmp.eq.f32.partialorder %v1853, 8.507059e+37
    %v1855 = vand.u32 %v1752, 2147483648
    %v1856 = vor.u32 1.1754944e-38, %v1855
    %v1857 = vsel %vm1854, %v1856, %v1852
    %v1858 = vmul.f32 1.0, %v1857
    %v1859 = vrcp.pop %v1753
    %v1860 = vmul.f32 %v1753, %v1859
    %v1861 = vsub.f32 1.0, %v1860
    %v1862 = vmul.f32 %v1859, %v1861
    %v1863 = vadd.f32 %v1859, %v1862
    %vm1864 = vweird.f32 %v1753
    %vm1865 = vweird.f32 %v1859
    %vm1866 = vmor %vm1864, %vm1865
    %v1867 = vsel %vm1866, %v1859, %v1863
    %v1868 = vand.u32 2147483647, %v1753
    %vm1869 = vcmp.eq.f32.partialorder %v1868, 8.507059e+37
    %v1870 = vand.u32 %v1753, 2147483648
    %v1871 = vor.u32 1.1754944e-38, %v1870
    %v1872 = vsel %vm1869, %v1871, %v1867
    %v1873 = vmul.f32 1.0, %v1872
    %v1874 = vrot.slane %v1828, 4
    %vm1875 = vcmask 1047556
    %v1876 = vsel %vm1875, %v1874, %v1768
    %v1877 = vrot.slane %v1768, 4
    %v1878 = vsel %vm1875, %v1828, %v1877
    %v1880 = vunpack.c.l.s4 1983009808
    %v1881 = vunpack.c.0.s8 %v1880
    %v1882 = vperm.slane %v1876, %v1881
    %v1884 = vunpack.c.l.s4 1983009808
    %v1885 = vunpack.c.0.s8 %v1884
    %v1886 = vperm.slane %v1878, %v1885
    %v1887 = vrot.slane %v1858, 4
    %v1888 = vsel %vm1875, %v1887, %v1798
    %v1889 = vrot.slane %v1798, 4
    %v1890 = vsel %vm1875, %v1858, %v1889
    %v1892 = vunpack.c.l.s4 1983009808
    %v1893 = vunpack.c.0.s8 %v1892
    %v1894 = vperm.slane %v1888, %v1893
    %v1896 = vunpack.c.l.s4 1983009808
    %v1897 = vunpack.c.0.s8 %v1896
    %v1898 = vperm.slane %v1890, %v1897
    %v1899 = vrot.slane %v1894, 4
    %v1900 = vsel %vm1875, %v1899, %v1882
    %v1901 = vrot.slane %v1882, 4
    %v1902 = vsel %vm1875, %v1894, %v1901
    %v1904 = vunpack.c.l.s4 1934713408
    %v1905 = vunpack.c.0.s8 %v1904
    %v1906 = vperm.slane %v1900, %v1905
    %v1908 = vunpack.c.l.s4 1934713408
    %v1909 = vunpack.c.0.s8 %v1908
    %v1910 = vperm.slane %v1902, %v1909
    %v1911 = vrot.slane %v1898, 4
    %v1912 = vsel %vm1875, %v1911, %v1886
    %v1913 = vrot.slane %v1886, 4
    %v1914 = vsel %vm1875, %v1898, %v1913
    %v1916 = vunpack.c.l.s4 1934713408
    %v1917 = vunpack.c.0.s8 %v1916
    %v1918 = vperm.slane %v1912, %v1917
    %v1920 = vunpack.c.l.s4 1934713408
    %v1921 = vunpack.c.0.s8 %v1920
    %v1922 = vperm.slane %v1914, %v1921
    %v1923 = vrot.slane %v1906, 4
    %v1924 = vsel %vm1875, 0.0, %v1923
    %v1925 = vrot.slane %v1910, 4
    %v1926 = vsel %vm1875, 0.0, %v1925
    %v1927 = vrot.slane %v1918, 4
    %v1928 = vsel %vm1875, 0.0, %v1927
    %v1929 = vrot.slane %v1922, 4
    %v1930 = vsel %vm1875, 0.0, %v1929
    %v1931 = vrot.slane %v1843, 4
    %v1932 = vsel %vm1875, %v1931, %v1783
    %v1933 = vrot.slane %v1783, 4
    %v1934 = vsel %vm1875, %v1843, %v1933
    %v1936 = vunpack.c.l.s4 1983009808
    %v1937 = vunpack.c.0.s8 %v1936
    %v1938 = vperm.slane %v1932, %v1937
    %v1940 = vunpack.c.l.s4 1983009808
    %v1941 = vunpack.c.0.s8 %v1940
    %v1942 = vperm.slane %v1934, %v1941
    %v1943 = vrot.slane %v1873, 4
    %v1944 = vsel %vm1875, %v1943, %v1813
    %v1945 = vrot.slane %v1813, 4
    %v1946 = vsel %vm1875, %v1873, %v1945
    %v1948 = vunpack.c.l.s4 1983009808
    %v1949 = vunpack.c.0.s8 %v1948
    %v1950 = vperm.slane %v1944, %v1949
    %v1952 = vunpack.c.l.s4 1983009808
    %v1953 = vunpack.c.0.s8 %v1952
    %v1954 = vperm.slane %v1946, %v1953
    %v1955 = vrot.slane %v1950, 4
    %v1956 = vsel %vm1875, %v1955, %v1938
    %v1957 = vrot.slane %v1938, 4
    %v1958 = vsel %vm1875, %v1950, %v1957
    %v1960 = vunpack.c.l.s4 1934713408
    %v1961 = vunpack.c.0.s8 %v1960
    %v1962 = vperm.slane %v1956, %v1961
    %v1964 = vunpack.c.l.s4 1934713408
    %v1965 = vunpack.c.0.s8 %v1964
    %v1966 = vperm.slane %v1958, %v1965
    %v1967 = vrot.slane %v1954, 4
    %v1968 = vsel %vm1875, %v1967, %v1942
    %v1969 = vrot.slane %v1942, 4
    %v1970 = vsel %vm1875, %v1954, %v1969
    %v1972 = vunpack.c.l.s4 1934713408
    %v1973 = vunpack.c.0.s8 %v1972
    %v1974 = vperm.slane %v1968, %v1973
    %v1976 = vunpack.c.l.s4 1934713408
    %v1977 = vunpack.c.0.s8 %v1976
    %v1978 = vperm.slane %v1970, %v1977
    %v1979 = vrot.slane %v1962, 4
    %v1980 = vsel %vm1875, 0.0, %v1979
    %v1981 = vrot.slane %v1966, 4
    %v1982 = vsel %vm1875, 0.0, %v1981
    %v1983 = vrot.slane %v1974, 4
    %v1984 = vsel %vm1875, 0.0, %v1983
    %v1985 = vrot.slane %v1978, 4
    %v1986 = vsel %vm1875, 0.0, %v1985
    %1989 = vrot.lane.b32.xlu0 %v1924, 8
    %v1990 = vpop.permute.xlu0 %1989
    %1991 = vrot.lane.b32.xlu0 %v1980, 8
    %v1992 = vpop.permute.xlu0 %1991
    %1997 = vrot.lane.b32.xlu0 %v1910, 16
    %v1998 = vpop.permute.xlu0 %1997
    %1999 = vrot.lane.b32.xlu0 %v1966, 16
    %v2000 = vpop.permute.xlu0 %1999
    %2005 = vrot.lane.b32.xlu0 %v1926, 24
    %v2006 = vpop.permute.xlu0 %2005
    %2007 = vrot.lane.b32.xlu0 %v1982, 24
    %v2008 = vpop.permute.xlu0 %2007
    %2013 = vrot.lane.b32.xlu0 %v1918, 32
    %v2014 = vpop.permute.xlu0 %2013
    %2015 = vrot.lane.b32.xlu0 %v1974, 32
    %v2016 = vpop.permute.xlu0 %2015
    %2021 = vrot.lane.b32.xlu0 %v1928, 40
    %v2022 = vpop.permute.xlu0 %2021
    %2023 = vrot.lane.b32.xlu0 %v1984, 40
    %v2024 = vpop.permute.xlu0 %2023
    %2029 = vrot.lane.b32.xlu0 %v1922, 48
    %v2030 = vpop.permute.xlu0 %2029
    %2031 = vrot.lane.b32.xlu0 %v1978, 48
    %v2032 = vpop.permute.xlu0 %2031
    %2037 = vrot.lane.b32.xlu0 %v1930, 56
    %v2038 = vpop.permute.xlu0 %2037
    %2039 = vrot.lane.b32.xlu0 %v1986, 56
    %v2040 = vpop.permute.xlu0 %2039
    %v2043 = vsel %vm253, %v1906, %v1990
    %v2044 = vsel %vm253, %v1962, %v1992
    %v2045 = vsel %vm829, %v2043, %v1998
    %v2046 = vsel %vm829, %v2044, %v2000
    %v2047 = vsel %vm832, %v2045, %v2006
    %v2048 = vsel %vm832, %v2046, %v2008
    %v2049 = vsel %vm130, %v2047, %v2014
    %v2050 = vsel %vm130, %v2048, %v2016
    %vm2051 = vcmask 326656
    %v2052 = vsel %vm2051, %v2049, %v2022
    %v2053 = vsel %vm2051, %v2050, %v2024
    %vm2054 = vcmask 392192
    %v2055 = vsel %vm2054, %v2052, %v2030
    %v2056 = vsel %vm2054, %v2053, %v2032
    %vm2057 = vcmask 457728
    %v2058 = vsel %vm2057, %v2055, %v2038
    %v2059 = vsel %vm2057, %v2056, %v2040
    %vm2060 = vcmask 519168
    %2061 = vst.msk [vmem:[%s21] sm:$0xf] %vm2060, %v2058
    %2062 = vst.msk [vmem:[%s21 + $0x4] sm:$0xf] %vm2060, %v2059
    %v2063 = vpack.c.bf16 %v1593, %v1592
    %v2064 = vld [vmem:[%s13] sm:$0xf]
    %v2065 = vld [vmem:[%s13 + $0x4] sm:$0xf]
    %v2066 = vld [vmem:[%s13 + $0x8] sm:$0xf]
    %v2067 = vld [vmem:[%s13 + $0xc] sm:$0xf]
    %v2068 = vld [vmem:[%s14] sm:$0x1]
    %v2070 = vperm.slane %v2068, 0
    %v2076 = vunpack.c.l.b16 %v2064
    %v2077 = vunpack.c.l.b16 %v2065
    %v2078 = vunpack.c.l.b16 %v2066
    %v2079 = vunpack.c.l.b16 %v2067
    %v2080 = vpack.c.b16 %v2077, %v2076
    %v2081 = vpack.c.b16 %v2079, %v2078
    %v2085 = vsel %vm130, %v2063, 0
    %2087 = vmatpush.bf16.msra.mxu0 0
    %2088 = vmatpush.bf16.msra.mxu0 0
    %2089 = vmatpush.bf16.msra.mxu0 0
    %2090 = vmatpush.bf16.msra.mxu0 0
    %2091 = vmatpush.bf16.msra.mxu0 0
    %2092 = vmatpush.bf16.msra.mxu0 0
    %2093 = vmatpush.bf16.msra.mxu0 %v2081
    %2094 = vmatpush.bf16.msra.mxu0 %v2080
    %2095 = vmatmul.bf16.gmra.mxu0 %v2085
    %v2096 = vpop.f32.mrf.mxu0
    %v2097 = vadd.f32 %v2070, %v2096
    %v2098 = vpop.f32.mrf.mxu0
    %v2099 = vadd.f32 %v2070, %v2098
    %2100 = vdwg.mxu0
    %v2101 = vadd.f32 %v930, %v2097
    %v2102 = vadd.f32 %v931, %v2099
    %v2103 = vsel %vm130, %v2101, 0.0
    %2104 = vadd.xlane.f32.xlu0 %v2103
    %v2105 = vpop.xlane.xlu0 %2104
    %v2106 = vsel %vm130, %v2102, 0.0
    %2107 = vadd.xlane.f32.xlu0 %v2106
    %v2108 = vpop.xlane.xlu0 %2107
    %v2109 = vmul.f32 %v2105, %v887
    %v2110 = vmul.f32 %v2108, %v887
    %v2111 = vsub.f32 %v2101, %v2109
    %v2112 = vsub.f32 %v2102, %v2110
    %v2113 = vmul.f32 %v2111, %v2111
    %v2114 = vmul.f32 %v2112, %v2112
    %v2115 = vsel %vm130, %v2113, 0.0
    %2116 = vadd.xlane.f32.xlu0 %v2115
    %v2117 = vpop.xlane.xlu0 %2116
    %v2118 = vsel %vm130, %v2114, 0.0
    %2119 = vadd.xlane.f32.xlu0 %v2118
    %v2120 = vpop.xlane.xlu0 %2119
    %v2121 = vmul.f32 %v2117, %v887
    %v2122 = vmul.f32 %v2120, %v887
    %v2123 = vadd.f32 %v2121, 1e-05
    %v2124 = vadd.f32 %v2122, 1e-05
    %v2125 = vrsqrt.pop %v2123
    %v2126 = vmul.f32 %v2125, %v2123
    %v2127 = vmul.f32 %v2126, %v2125
    %v2128 = vmul.f32 0.5, %v2127
    %v2129 = vsub.f32 1.5, %v2128
    %v2130 = vmul.f32 %v2125, %v2129
    %vm2131 = vweird.f32 %v2123
    %vm2132 = vweird.f32 %v2125
    %vm2133 = vmor %vm2131, %vm2132
    %v2134 = vsel %vm2133, %v2125, %v2130
    %v2135 = vrsqrt.pop %v2124
    %v2136 = vmul.f32 %v2135, %v2124
    %v2137 = vmul.f32 %v2136, %v2135
    %v2138 = vmul.f32 0.5, %v2137
    %v2139 = vsub.f32 1.5, %v2138
    %v2140 = vmul.f32 %v2135, %v2139
    %vm2141 = vweird.f32 %v2124
    %vm2142 = vweird.f32 %v2135
    %vm2143 = vmor %vm2141, %vm2142
    %v2144 = vsel %vm2143, %v2135, %v2140
    %v2145 = vmul.f32 %v2111, %v2134
    %v2146 = vmul.f32 %v2112, %v2144
    %v2147 = vperm.slane %v176, 2
    %v2148 = vmul.f32 %v2145, %v2147
    %v2149 = vmul.f32 %v2146, %v2147
    %v2150 = vperm.slane %v176, 3
    %v2151 = vadd.f32 %v2148, %v2150
    %v2152 = vadd.f32 %v2149, %v2150
    %v2153 = vpack.c.bf16 %v2152, %v2151
    %v2154 = vld [vmem:[%s15] sm:$0xf]
    %v2155 = vld [vmem:[%s15 + $0x4] sm:$0xf]
    %v2156 = vld [vmem:[%s15 + $0x8] sm:$0xf]
    %v2157 = vld [vmem:[%s15 + $0xc] sm:$0xf]
    %v2158 = vld [vmem:[%s16] sm:$0x1]
    %v2160 = vperm.slane %v2158, 0
    %v2166 = vunpack.c.l.b16 %v2154
    %v2167 = vunpack.c.l.b16 %v2155
    %v2168 = vunpack.c.l.b16 %v2156
    %v2169 = vunpack.c.l.b16 %v2157
    %v2170 = vpack.c.b16 %v2167, %v2166
    %v2171 = vpack.c.b16 %v2169, %v2168
    %v2175 = vsel %vm130, %v2153, 0
    %2177 = vmatpush.bf16.msra.mxu0 0
    %2178 = vmatpush.bf16.msra.mxu0 0
    %2179 = vmatpush.bf16.msra.mxu0 0
    %2180 = vmatpush.bf16.msra.mxu0 0
    %2181 = vmatpush.bf16.msra.mxu0 0
    %2182 = vmatpush.bf16.msra.mxu0 0
    %2183 = vmatpush.bf16.msra.mxu0 %v2171
    %2184 = vmatpush.bf16.msra.mxu0 %v2170
    %2185 = vmatmul.bf16.gmra.mxu0 %v2175
    %v2186 = vpop.f32.mrf.mxu0
    %v2187 = vadd.f32 %v2160, %v2186
    %v2188 = vpop.f32.mrf.mxu0
    %v2189 = vadd.f32 %v2160, %v2188
    %2190 = vdwg.mxu0
    %v2191 = vmul.f32 %v2187, %v2187
    %v2192 = vmul.f32 %v2189, %v2189
    %v2193 = vmul.f32 %v2187, %v2191
    %v2194 = vmul.f32 %v2189, %v2192
    %v2195 = vmul.f32 %v2193, 0.044715
    %v2196 = vmul.f32 %v2194, 0.044715
    %v2197 = vadd.f32 %v2187, %v2195
    %v2198 = vadd.f32 %v2189, %v2196
    %v2199 = vmul.f32 %v2197, 0.7978846
    %v2200 = vmul.f32 %v2198, 0.7978846
    %v2201 = vtanh.pop %v2199
    %v2202 = vtanh.pop %v2200
    %v2203 = vadd.f32 %v2201, 1.0
    %v2204 = vadd.f32 %v2202, 1.0
    %v2205 = vmul.f32 %v2203, 0.5
    %v2206 = vmul.f32 %v2204, 0.5
    %v2207 = vmul.f32 %v2187, %v2205
    %v2208 = vmul.f32 %v2189, %v2206
    %v2209 = vpack.c.bf16 %v2208, %v2207
    %v2210 = vld [vmem:[%s17] sm:$0xf]
    %v2211 = vld [vmem:[%s17 + $0x4] sm:$0xf]
    %v2212 = vld [vmem:[%s17 + $0x8] sm:$0xf]
    %v2213 = vld [vmem:[%s17 + $0xc] sm:$0xf]
    %v2214 = vld [vmem:[%s17 + $0x10] sm:$0xf]
    %v2215 = vld [vmem:[%s17 + $0x14] sm:$0xf]
    %v2216 = vld [vmem:[%s17 + $0x18] sm:$0xf]
    %v2217 = vld [vmem:[%s17 + $0x1c] sm:$0xf]
    %v2218 = vld [vmem:[%s18] sm:$0x1]
    %v2220 = vperm.slane %v2218, 0
    %v2230 = vunpack.c.l.b16 %v2210
    %v2231 = vunpack.c.l.b16 %v2211
    %v2232 = vunpack.c.l.b16 %v2212
    %v2233 = vunpack.c.l.b16 %v2213
    %v2234 = vunpack.c.l.b16 %v2214
    %v2235 = vunpack.c.l.b16 %v2215
    %v2236 = vunpack.c.l.b16 %v2216
    %v2237 = vunpack.c.l.b16 %v2217
    %v2238 = vpack.c.b16 %v2231, %v2230
    %v2239 = vpack.c.b16 %v2233, %v2232
    %v2240 = vpack.c.b16 %v2235, %v2234
    %v2241 = vpack.c.b16 %v2237, %v2236
    %vm2246 = vcmask 523264
    %v2248 = vsel %vm2246, %v2209, 0
    %2250 = vmatpush.bf16.msra.mxu0 0
    %2251 = vmatpush.bf16.msra.mxu0 0
    %2252 = vmatpush.bf16.msra.mxu0 0
    %2253 = vmatpush.bf16.msra.mxu0 0
    %2254 = vmatpush.bf16.msra.mxu0 %v2241
    %2255 = vmatpush.bf16.msra.mxu0 %v2240
    %2256 = vmatpush.bf16.msra.mxu0 %v2239
    %2257 = vmatpush.bf16.msra.mxu0 %v2238
    %2258 = vmatmul.bf16.gmra.mxu0 %v2248
    %v2259 = vpop.f32.mrf.mxu0
    %v2260 = vadd.f32 %v2220, %v2259
    %v2261 = vpop.f32.mrf.mxu0
    %v2262 = vadd.f32 %v2220, %v2261
    %2263 = vdwg.mxu0
    %v2264 = vadd.f32 %v2151, %v2260
    %v2265 = vadd.f32 %v2152, %v2262
    %v2266 = vsel %vm130, %v2264, 0.0
    %2267 = vadd.xlane.f32.xlu0 %v2266
    %v2268 = vpop.xlane.xlu0 %2267
    %v2269 = vsel %vm130, %v2265, 0.0
    %2270 = vadd.xlane.f32.xlu0 %v2269
    %v2271 = vpop.xlane.xlu0 %2270
    %v2272 = vmul.f32 %v2268, %v887
    %v2273 = vmul.f32 %v2271, %v887
    %v2274 = vsub.f32 %v2264, %v2272
    %v2275 = vsub.f32 %v2265, %v2273
    %v2276 = vmul.f32 %v2274, %v2274
    %v2277 = vmul.f32 %v2275, %v2275
    %v2278 = vsel %vm130, %v2276, 0.0
    %2279 = vadd.xlane.f32.xlu0 %v2278
    %v2280 = vpop.xlane.xlu0 %2279
    %v2281 = vsel %vm130, %v2277, 0.0
    %2282 = vadd.xlane.f32.xlu0 %v2281
    %v2283 = vpop.xlane.xlu0 %2282
    %v2284 = vmul.f32 %v2280, %v887
    %v2285 = vmul.f32 %v2283, %v887
    %v2286 = vadd.f32 %v2284, 1e-05
    %v2287 = vadd.f32 %v2285, 1e-05
    %v2288 = vrsqrt.pop %v2286
    %v2289 = vmul.f32 %v2288, %v2286
    %v2290 = vmul.f32 %v2289, %v2288
    %v2291 = vmul.f32 0.5, %v2290
    %v2292 = vsub.f32 1.5, %v2291
    %v2293 = vmul.f32 %v2288, %v2292
    %vm2294 = vweird.f32 %v2286
    %vm2295 = vweird.f32 %v2288
    %vm2296 = vmor %vm2294, %vm2295
    %v2297 = vsel %vm2296, %v2288, %v2293
    %v2298 = vrsqrt.pop %v2287
    %v2299 = vmul.f32 %v2298, %v2287
    %v2300 = vmul.f32 %v2299, %v2298
    %v2301 = vmul.f32 0.5, %v2300
    %v2302 = vsub.f32 1.5, %v2301
    %v2303 = vmul.f32 %v2298, %v2302
    %vm2304 = vweird.f32 %v2287
    %vm2305 = vweird.f32 %v2298
    %vm2306 = vmor %vm2304, %vm2305
    %v2307 = vsel %vm2306, %v2298, %v2303
    %v2308 = vmul.f32 %v2274, %v2297
    %v2309 = vmul.f32 %v2275, %v2307
    %v2310 = vperm.slane %v176, 4
    %v2311 = vmul.f32 %v2308, %v2310
    %v2312 = vmul.f32 %v2309, %v2310
    %v2313 = vperm.slane %v176, 5
    %v2314 = vadd.f32 %v2311, %v2313
    %v2315 = vadd.f32 %v2312, %v2313
    %s2316 = scalar_lea.vmem %s19, 8
    %v2317 = vld [vmem:[%s2316] sm:$0x3f]
    %v2318 = vpack.c.bf16 %v2315, %v2314
    %s2319 = scalar_lea.vmem %s5, 16
    %v2320 = vld [vmem:[%s2319] sm:$0xf]
    %v2321 = vld [vmem:[%s2319 + $0x4] sm:$0xf]
    %v2322 = vld [vmem:[%s2319 + $0x8] sm:$0xf]
    %v2323 = vld [vmem:[%s2319 + $0xc] sm:$0xf]
    %s2324 = scalar_lea.vmem %s6, 1
    %v2325 = vld [vmem:[%s2324] sm:$0x1]
    %v2327 = vperm.slane %v2325, 0
    %v2333 = vunpack.c.l.b16 %v2320
    %v2334 = vunpack.c.l.b16 %v2321
    %v2335 = vunpack.c.l.b16 %v2322
    %v2336 = vunpack.c.l.b16 %v2323
    %v2337 = vpack.c.b16 %v2334, %v2333
    %v2338 = vpack.c.b16 %v2336, %v2335
    %v2342 = vsel %vm130, %v2318, 0
    %2344 = vmatpush.bf16.msra.mxu0 0
    %2345 = vmatpush.bf16.msra.mxu0 0
    %2346 = vmatpush.bf16.msra.mxu0 0
    %2347 = vmatpush.bf16.msra.mxu0 0
    %2348 = vmatpush.bf16.msra.mxu0 0
    %2349 = vmatpush.bf16.msra.mxu0 0
    %2350 = vmatpush.bf16.msra.mxu0 %v2338
    %2351 = vmatpush.bf16.msra.mxu0 %v2337
    %2352 = vmatmul.bf16.gmra.mxu0 %v2342
    %v2353 = vpop.f32.mrf.mxu0
    %v2354 = vadd.f32 %v2327, %v2353
    %v2355 = vpop.f32.mrf.mxu0
    %v2356 = vadd.f32 %v2327, %v2355
    %2357 = vdwg.mxu0
    %v2358 = vmul.f32 %v2354, 0.35355338
    %v2359 = vmul.f32 %v2356, 0.35355338
    %v2360 = vpack.c.bf16 %v2358, %v2358
    %v2361 = vpack.c.bf16 %v2359, %v2359
    %2364 = vrot.lane.b32.xlu0 %v2360, 120
    %v2365 = vpop.permute.xlu0 %2364
    %2366 = vrot.lane.b32.xlu0 %v2361, 120
    %v2367 = vpop.permute.xlu0 %2366
    %2368 = vrot.lane.b32.xlu0 %v2360, 112
    %v2369 = vpop.permute.xlu0 %2368
    %2370 = vrot.lane.b32.xlu0 %v2361, 112
    %v2371 = vpop.permute.xlu0 %2370
    %2372 = vrot.lane.b32.xlu0 %v2360, 104
    %v2373 = vpop.permute.xlu0 %2372
    %2374 = vrot.lane.b32.xlu0 %v2361, 104
    %v2375 = vpop.permute.xlu0 %2374
    %v2376 = vpack.c.bf16 %v2354, %v2354
    %v2377 = vpack.c.bf16 %v2356, %v2356
    %2380 = vrot.lane.b32.xlu0 %v2376, 120
    %v2381 = vpop.permute.xlu0 %2380
    %2382 = vrot.lane.b32.xlu0 %v2377, 120
    %v2383 = vpop.permute.xlu0 %2382
    %2384 = vrot.lane.b32.xlu0 %v2376, 112
    %v2385 = vpop.permute.xlu0 %2384
    %2386 = vrot.lane.b32.xlu0 %v2377, 112
    %v2387 = vpop.permute.xlu0 %2386
    %2388 = vrot.lane.b32.xlu0 %v2376, 104
    %v2389 = vpop.permute.xlu0 %2388
    %2390 = vrot.lane.b32.xlu0 %v2377, 104
    %v2391 = vpop.permute.xlu0 %2390
    %v2392 = vunpack.c.l.b16 %v2376
    %v2393 = vpack.c.b16 %v2392, %v2392
    %2394 = vrot.lane.b32.xlu0 %v2393, 96
    %v2395 = vpop.permute.xlu0 %2394
    %v2397 = vsel %vm253, %v2360, 0
    %v2400 = vsel %vm253, %v2395, 0
    %2402 = vmatpush.bf16.xpose.msra.mxu0 0
    %2403 = vmatpush.bf16.xpose.msra.mxu0 0
    %2404 = vmatpush.bf16.xpose.msra.mxu0 0
    %2405 = vmatpush.bf16.xpose.msra.mxu0 0
    %2406 = vmatpush.bf16.xpose.msra.mxu0 0
    %2407 = vmatpush.bf16.xpose.msra.mxu0 0
    %2408 = vmatpush.bf16.xpose.msra.mxu0 0
    %2409 = vmatpush.bf16.xpose.msra.mxu0 %v2400
    %2410 = vmatmul.bf16.gmra.mxu0 %v2397
    %v2411 = vpop.f32.mrf.mxu0
    %v2412 = vadd.f32 %v88, %v2411
    %v2413 = vpop.f32.mrf.mxu0
    %2414 = vdwg.mxu0
    %v2415 = vunpack.c.l.b16 %v2377
    %v2416 = vpack.c.b16 %v2415, %v2415
    %2417 = vrot.lane.b32.xlu0 %v2416, 96
    %v2418 = vpop.permute.xlu0 %2417
    %v2420 = vsel %vm253, %v2361, 0
    %v2423 = vsel %vm253, %v2418, 0
    %2425 = vmatpush.bf16.xpose.msra.mxu0 0
    %2426 = vmatpush.bf16.xpose.msra.mxu0 0
    %2427 = vmatpush.bf16.xpose.msra.mxu0 0
    %2428 = vmatpush.bf16.xpose.msra.mxu0 0
    %2429 = vmatpush.bf16.xpose.msra.mxu0 0
    %2430 = vmatpush.bf16.xpose.msra.mxu0 0
    %2431 = vmatpush.bf16.xpose.msra.mxu0 0
    %2432 = vmatpush.bf16.xpose.msra.mxu0 %v2423
    %2433 = vmatmul.bf16.gmra.mxu0 %v2420
    %v2434 = vpop.f32.mrf.mxu0
    %v2435 = vadd.f32 %v89, %v2434
    %v2436 = vpop.f32.mrf.mxu0
    %2437 = vdwg.mxu0
    %v2438 = vunpack.c.l.b16 %v2381
    %v2439 = vpack.c.b16 %v2438, %v2438
    %2440 = vrot.lane.b32.xlu0 %v2439, 96
    %v2441 = vpop.permute.xlu0 %2440
    %v2443 = vsel %vm253, %v2365, 0
    %v2446 = vsel %vm253, %v2441, 0
    %2448 = vmatpush.bf16.xpose.msra.mxu0 0
    %2449 = vmatpush.bf16.xpose.msra.mxu0 0
    %2450 = vmatpush.bf16.xpose.msra.mxu0 0
    %2451 = vmatpush.bf16.xpose.msra.mxu0 0
    %2452 = vmatpush.bf16.xpose.msra.mxu0 0
    %2453 = vmatpush.bf16.xpose.msra.mxu0 0
    %2454 = vmatpush.bf16.xpose.msra.mxu0 0
    %2455 = vmatpush.bf16.xpose.msra.mxu0 %v2446
    %2456 = vmatmul.bf16.gmra.mxu0 %v2443
    %v2457 = vpop.f32.mrf.mxu0
    %v2458 = vadd.f32 %v88, %v2457
    %v2459 = vpop.f32.mrf.mxu0
    %2460 = vdwg.mxu0
    %v2461 = vunpack.c.l.b16 %v2383
    %v2462 = vpack.c.b16 %v2461, %v2461
    %2463 = vrot.lane.b32.xlu0 %v2462, 96
    %v2464 = vpop.permute.xlu0 %2463
    %v2466 = vsel %vm253, %v2367, 0
    %v2469 = vsel %vm253, %v2464, 0
    %2471 = vmatpush.bf16.xpose.msra.mxu0 0
    %2472 = vmatpush.bf16.xpose.msra.mxu0 0
    %2473 = vmatpush.bf16.xpose.msra.mxu0 0
    %2474 = vmatpush.bf16.xpose.msra.mxu0 0
    %2475 = vmatpush.bf16.xpose.msra.mxu0 0
    %2476 = vmatpush.bf16.xpose.msra.mxu0 0
    %2477 = vmatpush.bf16.xpose.msra.mxu0 0
    %2478 = vmatpush.bf16.xpose.msra.mxu0 %v2469
    %2479 = vmatmul.bf16.gmra.mxu0 %v2466
    %v2480 = vpop.f32.mrf.mxu0
    %v2481 = vadd.f32 %v89, %v2480
    %v2482 = vpop.f32.mrf.mxu0
    %2483 = vdwg.mxu0
    %v2484 = vunpack.c.l.b16 %v2385
    %v2485 = vpack.c.b16 %v2484, %v2484
    %2486 = vrot.lane.b32.xlu0 %v2485, 96
    %v2487 = vpop.permute.xlu0 %2486
    %v2489 = vsel %vm253, %v2369, 0
    %v2492 = vsel %vm253, %v2487, 0
    %2494 = vmatpush.bf16.xpose.msra.mxu0 0
    %2495 = vmatpush.bf16.xpose.msra.mxu0 0
    %2496 = vmatpush.bf16.xpose.msra.mxu0 0
    %2497 = vmatpush.bf16.xpose.msra.mxu0 0
    %2498 = vmatpush.bf16.xpose.msra.mxu0 0
    %2499 = vmatpush.bf16.xpose.msra.mxu0 0
    %2500 = vmatpush.bf16.xpose.msra.mxu0 0
    %2501 = vmatpush.bf16.xpose.msra.mxu0 %v2492
    %2502 = vmatmul.bf16.gmra.mxu0 %v2489
    %v2503 = vpop.f32.mrf.mxu0
    %v2504 = vadd.f32 %v88, %v2503
    %v2505 = vpop.f32.mrf.mxu0
    %2506 = vdwg.mxu0
    %v2507 = vunpack.c.l.b16 %v2387
    %v2508 = vpack.c.b16 %v2507, %v2507
    %2509 = vrot.lane.b32.xlu0 %v2508, 96
    %v2510 = vpop.permute.xlu0 %2509
    %v2512 = vsel %vm253, %v2371, 0
    %v2515 = vsel %vm253, %v2510, 0
    %2517 = vmatpush.bf16.xpose.msra.mxu0 0
    %2518 = vmatpush.bf16.xpose.msra.mxu0 0
    %2519 = vmatpush.bf16.xpose.msra.mxu0 0
    %2520 = vmatpush.bf16.xpose.msra.mxu0 0
    %2521 = vmatpush.bf16.xpose.msra.mxu0 0
    %2522 = vmatpush.bf16.xpose.msra.mxu0 0
    %2523 = vmatpush.bf16.xpose.msra.mxu0 0
    %2524 = vmatpush.bf16.xpose.msra.mxu0 %v2515
    %2525 = vmatmul.bf16.gmra.mxu0 %v2512
    %v2526 = vpop.f32.mrf.mxu0
    %v2527 = vadd.f32 %v89, %v2526
    %v2528 = vpop.f32.mrf.mxu0
    %2529 = vdwg.mxu0
    %v2530 = vunpack.c.l.b16 %v2389
    %v2531 = vpack.c.b16 %v2530, %v2530
    %2532 = vrot.lane.b32.xlu0 %v2531, 96
    %v2533 = vpop.permute.xlu0 %2532
    %v2535 = vsel %vm253, %v2373, 0
    %v2538 = vsel %vm253, %v2533, 0
    %2540 = vmatpush.bf16.xpose.msra.mxu0 0
    %2541 = vmatpush.bf16.xpose.msra.mxu0 0
    %2542 = vmatpush.bf16.xpose.msra.mxu0 0
    %2543 = vmatpush.bf16.xpose.msra.mxu0 0
    %2544 = vmatpush.bf16.xpose.msra.mxu0 0
    %2545 = vmatpush.bf16.xpose.msra.mxu0 0
    %2546 = vmatpush.bf16.xpose.msra.mxu0 0
    %2547 = vmatpush.bf16.xpose.msra.mxu0 %v2538
    %2548 = vmatmul.bf16.gmra.mxu0 %v2535
    %v2549 = vpop.f32.mrf.mxu0
    %v2550 = vadd.f32 %v88, %v2549
    %v2551 = vpop.f32.mrf.mxu0
    %2552 = vdwg.mxu0
    %v2553 = vunpack.c.l.b16 %v2391
    %v2554 = vpack.c.b16 %v2553, %v2553
    %2555 = vrot.lane.b32.xlu0 %v2554, 96
    %v2556 = vpop.permute.xlu0 %2555
    %v2558 = vsel %vm253, %v2375, 0
    %v2561 = vsel %vm253, %v2556, 0
    %2563 = vmatpush.bf16.xpose.msra.mxu0 0
    %2564 = vmatpush.bf16.xpose.msra.mxu0 0
    %2565 = vmatpush.bf16.xpose.msra.mxu0 0
    %2566 = vmatpush.bf16.xpose.msra.mxu0 0
    %2567 = vmatpush.bf16.xpose.msra.mxu0 0
    %2568 = vmatpush.bf16.xpose.msra.mxu0 0
    %2569 = vmatpush.bf16.xpose.msra.mxu0 0
    %2570 = vmatpush.bf16.xpose.msra.mxu0 %v2561
    %2571 = vmatmul.bf16.gmra.mxu0 %v2558
    %v2572 = vpop.f32.mrf.mxu0
    %v2573 = vadd.f32 %v89, %v2572
    %v2574 = vpop.f32.mrf.mxu0
    %2575 = vdwg.mxu0
    %v2576 = vsel %vm253, %v2412, -inf
    %2577 = vmax.xlane.f32.xlu0 %v2576
    %v2578 = vpop.xlane.xlu0 %2577
    %v2579 = vsel %vm253, %v2435, -inf
    %2580 = vmax.xlane.f32.xlu0 %v2579
    %v2581 = vpop.xlane.xlu0 %2580
    %v2582 = vsel %vm253, %v2458, -inf
    %2583 = vmax.xlane.f32.xlu0 %v2582
    %v2584 = vpop.xlane.xlu0 %2583
    %v2585 = vsel %vm253, %v2481, -inf
    %2586 = vmax.xlane.f32.xlu0 %v2585
    %v2587 = vpop.xlane.xlu0 %2586
    %v2588 = vsel %vm253, %v2504, -inf
    %2589 = vmax.xlane.f32.xlu0 %v2588
    %v2590 = vpop.xlane.xlu0 %2589
    %v2591 = vsel %vm253, %v2527, -inf
    %2592 = vmax.xlane.f32.xlu0 %v2591
    %v2593 = vpop.xlane.xlu0 %2592
    %v2594 = vsel %vm253, %v2550, -inf
    %2595 = vmax.xlane.f32.xlu0 %v2594
    %v2596 = vpop.xlane.xlu0 %2595
    %v2597 = vsel %vm253, %v2573, -inf
    %2598 = vmax.xlane.f32.xlu0 %v2597
    %v2599 = vpop.xlane.xlu0 %2598
    %v2600 = vsub.f32 %v2412, %v2578
    %v2601 = vsub.f32 %v2435, %v2581
    %v2602 = vsub.f32 %v2458, %v2584
    %v2603 = vsub.f32 %v2481, %v2587
    %v2604 = vsub.f32 %v2504, %v2590
    %v2605 = vsub.f32 %v2527, %v2593
    %v2606 = vsub.f32 %v2550, %v2596
    %v2607 = vsub.f32 %v2573, %v2599
    %v2608 = vmul.f32 %v2600, 1.442695
    %v2609 = vpow.pop %v2608
    %v2610 = vmul.f32 %v2601, 1.442695
    %v2611 = vpow.pop %v2610
    %v2612 = vmul.f32 %v2602, 1.442695
    %v2613 = vpow.pop %v2612
    %v2614 = vmul.f32 %v2603, 1.442695
    %v2615 = vpow.pop %v2614
    %v2616 = vmul.f32 %v2604, 1.442695
    %v2617 = vpow.pop %v2616
    %v2618 = vmul.f32 %v2605, 1.442695
    %v2619 = vpow.pop %v2618
    %v2620 = vmul.f32 %v2606, 1.442695
    %v2621 = vpow.pop %v2620
    %v2622 = vmul.f32 %v2607, 1.442695
    %v2623 = vpow.pop %v2622
    %v2624 = vsel %vm253, %v2609, 0.0
    %2625 = vadd.xlane.f32.xlu0 %v2624
    %v2626 = vpop.xlane.xlu0 %2625
    %v2627 = vsel %vm253, %v2611, 0.0
    %2628 = vadd.xlane.f32.xlu0 %v2627
    %v2629 = vpop.xlane.xlu0 %2628
    %v2630 = vsel %vm253, %v2613, 0.0
    %2631 = vadd.xlane.f32.xlu0 %v2630
    %v2632 = vpop.xlane.xlu0 %2631
    %v2633 = vsel %vm253, %v2615, 0.0
    %2634 = vadd.xlane.f32.xlu0 %v2633
    %v2635 = vpop.xlane.xlu0 %2634
    %v2636 = vsel %vm253, %v2617, 0.0
    %2637 = vadd.xlane.f32.xlu0 %v2636
    %v2638 = vpop.xlane.xlu0 %2637
    %v2639 = vsel %vm253, %v2619, 0.0
    %2640 = vadd.xlane.f32.xlu0 %v2639
    %v2641 = vpop.xlane.xlu0 %2640
    %v2642 = vsel %vm253, %v2621, 0.0
    %2643 = vadd.xlane.f32.xlu0 %v2642
    %v2644 = vpop.xlane.xlu0 %2643
    %v2645 = vsel %vm253, %v2623, 0.0
    %2646 = vadd.xlane.f32.xlu0 %v2645
    %v2647 = vpop.xlane.xlu0 %2646
    %v2648 = vrcp.pop %v2626
    %v2649 = vmul.f32 %v2626, %v2648
    %v2650 = vsub.f32 1.0, %v2649
    %v2651 = vmul.f32 %v2648, %v2650
    %v2652 = vadd.f32 %v2648, %v2651
    %vm2653 = vweird.f32 %v2626
    %vm2654 = vweird.f32 %v2648
    %vm2655 = vmor %vm2653, %vm2654
    %v2656 = vsel %vm2655, %v2648, %v2652
    %v2657 = vand.u32 2147483647, %v2626
    %vm2658 = vcmp.eq.f32.partialorder %v2657, 8.507059e+37
    %v2659 = vand.u32 %v2626, 2147483648
    %v2660 = vor.u32 1.1754944e-38, %v2659
    %v2661 = vsel %vm2658, %v2660, %v2656
    %v2662 = vmul.f32 %v2609, %v2661
    %v2663 = vrcp.pop %v2629
    %v2664 = vmul.f32 %v2629, %v2663
    %v2665 = vsub.f32 1.0, %v2664
    %v2666 = vmul.f32 %v2663, %v2665
    %v2667 = vadd.f32 %v2663, %v2666
    %vm2668 = vweird.f32 %v2629
    %vm2669 = vweird.f32 %v2663
    %vm2670 = vmor %vm2668, %vm2669
    %v2671 = vsel %vm2670, %v2663, %v2667
    %v2672 = vand.u32 2147483647, %v2629
    %vm2673 = vcmp.eq.f32.partialorder %v2672, 8.507059e+37
    %v2674 = vand.u32 %v2629, 2147483648
    %v2675 = vor.u32 1.1754944e-38, %v2674
    %v2676 = vsel %vm2673, %v2675, %v2671
    %v2677 = vmul.f32 %v2611, %v2676
    %v2678 = vrcp.pop %v2632
    %v2679 = vmul.f32 %v2632, %v2678
    %v2680 = vsub.f32 1.0, %v2679
    %v2681 = vmul.f32 %v2678, %v2680
    %v2682 = vadd.f32 %v2678, %v2681
    %vm2683 = vweird.f32 %v2632
    %vm2684 = vweird.f32 %v2678
    %vm2685 = vmor %vm2683, %vm2684
    %v2686 = vsel %vm2685, %v2678, %v2682
    %v2687 = vand.u32 2147483647, %v2632
    %vm2688 = vcmp.eq.f32.partialorder %v2687, 8.507059e+37
    %v2689 = vand.u32 %v2632, 2147483648
    %v2690 = vor.u32 1.1754944e-38, %v2689
    %v2691 = vsel %vm2688, %v2690, %v2686
    %v2692 = vmul.f32 %v2613, %v2691
    %v2693 = vrcp.pop %v2635
    %v2694 = vmul.f32 %v2635, %v2693
    %v2695 = vsub.f32 1.0, %v2694
    %v2696 = vmul.f32 %v2693, %v2695
    %v2697 = vadd.f32 %v2693, %v2696
    %vm2698 = vweird.f32 %v2635
    %vm2699 = vweird.f32 %v2693
    %vm2700 = vmor %vm2698, %vm2699
    %v2701 = vsel %vm2700, %v2693, %v2697
    %v2702 = vand.u32 2147483647, %v2635
    %vm2703 = vcmp.eq.f32.partialorder %v2702, 8.507059e+37
    %v2704 = vand.u32 %v2635, 2147483648
    %v2705 = vor.u32 1.1754944e-38, %v2704
    %v2706 = vsel %vm2703, %v2705, %v2701
    %v2707 = vmul.f32 %v2615, %v2706
    %v2708 = vrcp.pop %v2638
    %v2709 = vmul.f32 %v2638, %v2708
    %v2710 = vsub.f32 1.0, %v2709
    %v2711 = vmul.f32 %v2708, %v2710
    %v2712 = vadd.f32 %v2708, %v2711
    %vm2713 = vweird.f32 %v2638
    %vm2714 = vweird.f32 %v2708
    %vm2715 = vmor %vm2713, %vm2714
    %v2716 = vsel %vm2715, %v2708, %v2712
    %v2717 = vand.u32 2147483647, %v2638
    %vm2718 = vcmp.eq.f32.partialorder %v2717, 8.507059e+37
    %v2719 = vand.u32 %v2638, 2147483648
    %v2720 = vor.u32 1.1754944e-38, %v2719
    %v2721 = vsel %vm2718, %v2720, %v2716
    %v2722 = vmul.f32 %v2617, %v2721
    %v2723 = vrcp.pop %v2641
    %v2724 = vmul.f32 %v2641, %v2723
    %v2725 = vsub.f32 1.0, %v2724
    %v2726 = vmul.f32 %v2723, %v2725
    %v2727 = vadd.f32 %v2723, %v2726
    %vm2728 = vweird.f32 %v2641
    %vm2729 = vweird.f32 %v2723
    %vm2730 = vmor %vm2728, %vm2729
    %v2731 = vsel %vm2730, %v2723, %v2727
    %v2732 = vand.u32 2147483647, %v2641
    %vm2733 = vcmp.eq.f32.partialorder %v2732, 8.507059e+37
    %v2734 = vand.u32 %v2641, 2147483648
    %v2735 = vor.u32 1.1754944e-38, %v2734
    %v2736 = vsel %vm2733, %v2735, %v2731
    %v2737 = vmul.f32 %v2619, %v2736
    %v2738 = vrcp.pop %v2644
    %v2739 = vmul.f32 %v2644, %v2738
    %v2740 = vsub.f32 1.0, %v2739
    %v2741 = vmul.f32 %v2738, %v2740
    %v2742 = vadd.f32 %v2738, %v2741
    %vm2743 = vweird.f32 %v2644
    %vm2744 = vweird.f32 %v2738
    %vm2745 = vmor %vm2743, %vm2744
    %v2746 = vsel %vm2745, %v2738, %v2742
    %v2747 = vand.u32 2147483647, %v2644
    %vm2748 = vcmp.eq.f32.partialorder %v2747, 8.507059e+37
    %v2749 = vand.u32 %v2644, 2147483648
    %v2750 = vor.u32 1.1754944e-38, %v2749
    %v2751 = vsel %vm2748, %v2750, %v2746
    %v2752 = vmul.f32 %v2621, %v2751
    %v2753 = vrcp.pop %v2647
    %v2754 = vmul.f32 %v2647, %v2753
    %v2755 = vsub.f32 1.0, %v2754
    %v2756 = vmul.f32 %v2753, %v2755
    %v2757 = vadd.f32 %v2753, %v2756
    %vm2758 = vweird.f32 %v2647
    %vm2759 = vweird.f32 %v2753
    %vm2760 = vmor %vm2758, %vm2759
    %v2761 = vsel %vm2760, %v2753, %v2757
    %v2762 = vand.u32 2147483647, %v2647
    %vm2763 = vcmp.eq.f32.partialorder %v2762, 8.507059e+37
    %v2764 = vand.u32 %v2647, 2147483648
    %v2765 = vor.u32 1.1754944e-38, %v2764
    %v2766 = vsel %vm2763, %v2765, %v2761
    %v2767 = vmul.f32 %v2623, %v2766
    %v2768 = vpack.c.bf16 %v2662, %v2662
    %v2769 = vpack.c.bf16 %v2677, %v2677
    %v2770 = vpack.c.bf16 %v2692, %v2692
    %v2771 = vpack.c.bf16 %v2707, %v2707
    %v2772 = vpack.c.bf16 %v2722, %v2722
    %v2773 = vpack.c.bf16 %v2737, %v2737
    %v2774 = vpack.c.bf16 %v2752, %v2752
    %v2775 = vpack.c.bf16 %v2767, %v2767
    %2776 = vrot.lane.b32.xlu0 %v2393, 64
    %v2777 = vpop.permute.xlu0 %2776
    %v2779 = vsel %vm253, %v2768, 0
    %v2782 = vsel %vm639, %v2777, 0
    %2784 = vmatpush.bf16.msra.mxu0 0
    %2785 = vmatpush.bf16.msra.mxu0 0
    %2786 = vmatpush.bf16.msra.mxu0 0
    %2787 = vmatpush.bf16.msra.mxu0 0
    %2788 = vmatpush.bf16.msra.mxu0 0
    %2789 = vmatpush.bf16.msra.mxu0 0
    %2790 = vmatpush.bf16.msra.mxu0 0
    %2791 = vmatpush.bf16.msra.mxu0 %v2782
    %2792 = vmatmul.bf16.gmra.mxu0 %v2779
    %v2793 = vpop.f32.mrf.mxu0
    %v2794 = vadd.f32 0.0, %v2793
    %v2795 = vpop.f32.mrf.mxu0
    %2796 = vdwg.mxu0
    %2797 = vrot.lane.b32.xlu0 %v2416, 64
    %v2798 = vpop.permute.xlu0 %2797
    %v2800 = vsel %vm253, %v2769, 0
    %v2803 = vsel %vm639, %v2798, 0
    %2805 = vmatpush.bf16.msra.mxu0 0
    %2806 = vmatpush.bf16.msra.mxu0 0
    %2807 = vmatpush.bf16.msra.mxu0 0
    %2808 = vmatpush.bf16.msra.mxu0 0
    %2809 = vmatpush.bf16.msra.mxu0 0
    %2810 = vmatpush.bf16.msra.mxu0 0
    %2811 = vmatpush.bf16.msra.mxu0 0
    %2812 = vmatpush.bf16.msra.mxu0 %v2803
    %2813 = vmatmul.bf16.gmra.mxu0 %v2800
    %v2814 = vpop.f32.mrf.mxu0
    %v2815 = vadd.f32 0.0, %v2814
    %v2816 = vpop.f32.mrf.mxu0
    %2817 = vdwg.mxu0
    %2818 = vrot.lane.b32.xlu0 %v2439, 64
    %v2819 = vpop.permute.xlu0 %2818
    %v2821 = vsel %vm253, %v2770, 0
    %v2824 = vsel %vm639, %v2819, 0
    %2826 = vmatpush.bf16.msra.mxu0 0
    %2827 = vmatpush.bf16.msra.mxu0 0
    %2828 = vmatpush.bf16.msra.mxu0 0
    %2829 = vmatpush.bf16.msra.mxu0 0
    %2830 = vmatpush.bf16.msra.mxu0 0
    %2831 = vmatpush.bf16.msra.mxu0 0
    %2832 = vmatpush.bf16.msra.mxu0 0
    %2833 = vmatpush.bf16.msra.mxu0 %v2824
    %2834 = vmatmul.bf16.gmra.mxu0 %v2821
    %v2835 = vpop.f32.mrf.mxu0
    %v2836 = vadd.f32 0.0, %v2835
    %v2837 = vpop.f32.mrf.mxu0
    %2838 = vdwg.mxu0
    %2839 = vrot.lane.b32.xlu0 %v2462, 64
    %v2840 = vpop.permute.xlu0 %2839
    %v2842 = vsel %vm253, %v2771, 0
    %v2845 = vsel %vm639, %v2840, 0
    %2847 = vmatpush.bf16.msra.mxu0 0
    %2848 = vmatpush.bf16.msra.mxu0 0
    %2849 = vmatpush.bf16.msra.mxu0 0
    %2850 = vmatpush.bf16.msra.mxu0 0
    %2851 = vmatpush.bf16.msra.mxu0 0
    %2852 = vmatpush.bf16.msra.mxu0 0
    %2853 = vmatpush.bf16.msra.mxu0 0
    %2854 = vmatpush.bf16.msra.mxu0 %v2845
    %2855 = vmatmul.bf16.gmra.mxu0 %v2842
    %v2856 = vpop.f32.mrf.mxu0
    %v2857 = vadd.f32 0.0, %v2856
    %v2858 = vpop.f32.mrf.mxu0
    %2859 = vdwg.mxu0
    %2860 = vrot.lane.b32.xlu0 %v2485, 64
    %v2861 = vpop.permute.xlu0 %2860
    %v2863 = vsel %vm253, %v2772, 0
    %v2866 = vsel %vm639, %v2861, 0
    %2868 = vmatpush.bf16.msra.mxu0 0
    %2869 = vmatpush.bf16.msra.mxu0 0
    %2870 = vmatpush.bf16.msra.mxu0 0
    %2871 = vmatpush.bf16.msra.mxu0 0
    %2872 = vmatpush.bf16.msra.mxu0 0
    %2873 = vmatpush.bf16.msra.mxu0 0
    %2874 = vmatpush.bf16.msra.mxu0 0
    %2875 = vmatpush.bf16.msra.mxu0 %v2866
    %2876 = vmatmul.bf16.gmra.mxu0 %v2863
    %v2877 = vpop.f32.mrf.mxu0
    %v2878 = vadd.f32 0.0, %v2877
    %v2879 = vpop.f32.mrf.mxu0
    %2880 = vdwg.mxu0
    %2881 = vrot.lane.b32.xlu0 %v2508, 64
    %v2882 = vpop.permute.xlu0 %2881
    %v2884 = vsel %vm253, %v2773, 0
    %v2887 = vsel %vm639, %v2882, 0
    %2889 = vmatpush.bf16.msra.mxu0 0
    %2890 = vmatpush.bf16.msra.mxu0 0
    %2891 = vmatpush.bf16.msra.mxu0 0
    %2892 = vmatpush.bf16.msra.mxu0 0
    %2893 = vmatpush.bf16.msra.mxu0 0
    %2894 = vmatpush.bf16.msra.mxu0 0
    %2895 = vmatpush.bf16.msra.mxu0 0
    %2896 = vmatpush.bf16.msra.mxu0 %v2887
    %2897 = vmatmul.bf16.gmra.mxu0 %v2884
    %v2898 = vpop.f32.mrf.mxu0
    %v2899 = vadd.f32 0.0, %v2898
    %v2900 = vpop.f32.mrf.mxu0
    %2901 = vdwg.mxu0
    %2902 = vrot.lane.b32.xlu0 %v2531, 64
    %v2903 = vpop.permute.xlu0 %2902
    %v2905 = vsel %vm253, %v2774, 0
    %v2908 = vsel %vm639, %v2903, 0
    %2910 = vmatpush.bf16.msra.mxu0 0
    %2911 = vmatpush.bf16.msra.mxu0 0
    %2912 = vmatpush.bf16.msra.mxu0 0
    %2913 = vmatpush.bf16.msra.mxu0 0
    %2914 = vmatpush.bf16.msra.mxu0 0
    %2915 = vmatpush.bf16.msra.mxu0 0
    %2916 = vmatpush.bf16.msra.mxu0 0
    %2917 = vmatpush.bf16.msra.mxu0 %v2908
    %2918 = vmatmul.bf16.gmra.mxu0 %v2905
    %v2919 = vpop.f32.mrf.mxu0
    %v2920 = vadd.f32 0.0, %v2919
    %v2921 = vpop.f32.mrf.mxu0
    %2922 = vdwg.mxu0
    %2923 = vrot.lane.b32.xlu0 %v2554, 64
    %v2924 = vpop.permute.xlu0 %2923
    %v2926 = vsel %vm253, %v2775, 0
    %v2929 = vsel %vm639, %v2924, 0
    %2931 = vmatpush.bf16.msra.mxu0 0
    %2932 = vmatpush.bf16.msra.mxu0 0
    %2933 = vmatpush.bf16.msra.mxu0 0
    %2934 = vmatpush.bf16.msra.mxu0 0
    %2935 = vmatpush.bf16.msra.mxu0 0
    %2936 = vmatpush.bf16.msra.mxu0 0
    %2937 = vmatpush.bf16.msra.mxu0 0
    %2938 = vmatpush.bf16.msra.mxu0 %v2929
    %2939 = vmatmul.bf16.gmra.mxu0 %v2926
    %v2940 = vpop.f32.mrf.mxu0
    %v2941 = vadd.f32 0.0, %v2940
    %v2942 = vpop.f32.mrf.mxu0
    %2943 = vdwg.mxu0
    %2946 = vrot.lane.b32.xlu0 %v2836, 8
    %v2947 = vpop.permute.xlu0 %2946
    %2948 = vrot.lane.b32.xlu0 %v2857, 8
    %v2949 = vpop.permute.xlu0 %2948
    %2954 = vrot.lane.b32.xlu0 %v2878, 16
    %v2955 = vpop.permute.xlu0 %2954
    %2956 = vrot.lane.b32.xlu0 %v2899, 16
    %v2957 = vpop.permute.xlu0 %2956
    %2962 = vrot.lane.b32.xlu0 %v2920, 24
    %v2963 = vpop.permute.xlu0 %2962
    %2964 = vrot.lane.b32.xlu0 %v2941, 24
    %v2965 = vpop.permute.xlu0 %2964
    %v2968 = vsel %vm253, %v2794, %v2947
    %v2969 = vsel %vm253, %v2815, %v2949
    %v2970 = vsel %vm829, %v2968, %v2955
    %v2971 = vsel %vm829, %v2969, %v2957
    %v2972 = vsel %vm832, %v2970, %v2963
    %v2973 = vsel %vm832, %v2971, %v2965
    %v2974 = vpack.c.bf16 %v2973, %v2972
    %s2975 = scalar_lea.vmem %s7, 16
    %v2976 = vld [vmem:[%s2975] sm:$0xf]
    %v2977 = vld [vmem:[%s2975 + $0x4] sm:$0xf]
    %v2978 = vld [vmem:[%s2975 + $0x8] sm:$0xf]
    %v2979 = vld [vmem:[%s2975 + $0xc] sm:$0xf]
    %s2980 = scalar_lea.vmem %s8, 1
    %v2981 = vld [vmem:[%s2980] sm:$0x1]
    %v2983 = vperm.slane %v2981, 0
    %v2989 = vunpack.c.l.b16 %v2976
    %v2990 = vunpack.c.l.b16 %v2977
    %v2991 = vunpack.c.l.b16 %v2978
    %v2992 = vunpack.c.l.b16 %v2979
    %v2993 = vpack.c.b16 %v2990, %v2989
    %v2994 = vpack.c.b16 %v2992, %v2991
    %v2998 = vsel %vm130, %v2974, 0
    %3000 = vmatpush.bf16.msra.mxu0 0
    %3001 = vmatpush.bf16.msra.mxu0 0
    %3002 = vmatpush.bf16.msra.mxu0 0
    %3003 = vmatpush.bf16.msra.mxu0 0
    %3004 = vmatpush.bf16.msra.mxu0 0
    %3005 = vmatpush.bf16.msra.mxu0 0
    %3006 = vmatpush.bf16.msra.mxu0 %v2994
    %3007 = vmatpush.bf16.msra.mxu0 %v2993
    %3008 = vmatmul.bf16.gmra.mxu0 %v2998
    %v3009 = vpop.f32.mrf.mxu0
    %v3010 = vadd.f32 %v2983, %v3009
    %v3011 = vpop.f32.mrf.mxu0
    %v3012 = vadd.f32 %v2983, %v3011
    %3013 = vdwg.mxu0
    %v3014 = vadd.f32 %v2314, %v3010
    %v3015 = vadd.f32 %v2315, %v3012
    %v3016 = vsel %vm130, %v3014, 0.0
    %3017 = vadd.xlane.f32.xlu0 %v3016
    %v3018 = vpop.xlane.xlu0 %3017
    %v3019 = vsel %vm130, %v3015, 0.0
    %3020 = vadd.xlane.f32.xlu0 %v3019
    %v3021 = vpop.xlane.xlu0 %3020
    %v3022 = vmul.f32 %v3018, %v887
    %v3023 = vmul.f32 %v3021, %v887
    %v3024 = vsub.f32 %v3014, %v3022
    %v3025 = vsub.f32 %v3015, %v3023
    %v3026 = vmul.f32 %v3024, %v3024
    %v3027 = vmul.f32 %v3025, %v3025
    %v3028 = vsel %vm130, %v3026, 0.0
    %3029 = vadd.xlane.f32.xlu0 %v3028
    %v3030 = vpop.xlane.xlu0 %3029
    %v3031 = vsel %vm130, %v3027, 0.0
    %3032 = vadd.xlane.f32.xlu0 %v3031
    %v3033 = vpop.xlane.xlu0 %3032
    %v3034 = vmul.f32 %v3030, %v887
    %v3035 = vmul.f32 %v3033, %v887
    %v3036 = vadd.f32 %v3034, 1e-05
    %v3037 = vadd.f32 %v3035, 1e-05
    %v3038 = vrsqrt.pop %v3036
    %v3039 = vmul.f32 %v3038, %v3036
    %v3040 = vmul.f32 %v3039, %v3038
    %v3041 = vmul.f32 0.5, %v3040
    %v3042 = vsub.f32 1.5, %v3041
    %v3043 = vmul.f32 %v3038, %v3042
    %vm3044 = vweird.f32 %v3036
    %vm3045 = vweird.f32 %v3038
    %vm3046 = vmor %vm3044, %vm3045
    %v3047 = vsel %vm3046, %v3038, %v3043
    %v3048 = vrsqrt.pop %v3037
    %v3049 = vmul.f32 %v3048, %v3037
    %v3050 = vmul.f32 %v3049, %v3048
    %v3051 = vmul.f32 0.5, %v3050
    %v3052 = vsub.f32 1.5, %v3051
    %v3053 = vmul.f32 %v3048, %v3052
    %vm3054 = vweird.f32 %v3037
    %vm3055 = vweird.f32 %v3048
    %vm3056 = vmor %vm3054, %vm3055
    %v3057 = vsel %vm3056, %v3048, %v3053
    %v3058 = vmul.f32 %v3024, %v3047
    %v3059 = vmul.f32 %v3025, %v3057
    %v3060 = vperm.slane %v2317, 0
    %v3061 = vmul.f32 %v3058, %v3060
    %v3062 = vmul.f32 %v3059, %v3060
    %v3063 = vperm.slane %v2317, 1
    %v3064 = vadd.f32 %v3061, %v3063
    %v3065 = vadd.f32 %v3062, %v3063
    %v3066 = vpack.c.bf16 %v3065, %v3064
    %s3067 = scalar_lea.vmem %s9, 16
    %v3068 = vld [vmem:[%s3067] sm:$0xf]
    %v3069 = vld [vmem:[%s3067 + $0x4] sm:$0xf]
    %v3070 = vld [vmem:[%s3067 + $0x8] sm:$0xf]
    %v3071 = vld [vmem:[%s3067 + $0xc] sm:$0xf]
    %s3072 = scalar_lea.vmem %s10, 1
    %v3073 = vld [vmem:[%s3072] sm:$0x1]
    %v3075 = vperm.slane %v3073, 0
    %v3081 = vunpack.c.l.b16 %v3068
    %v3082 = vunpack.c.l.b16 %v3069
    %v3083 = vunpack.c.l.b16 %v3070
    %v3084 = vunpack.c.l.b16 %v3071
    %v3085 = vpack.c.b16 %v3082, %v3081
    %v3086 = vpack.c.b16 %v3084, %v3083
    %v3090 = vsel %vm130, %v3066, 0
    %3092 = vmatpush.bf16.msra.mxu0 0
    %3093 = vmatpush.bf16.msra.mxu0 0
    %3094 = vmatpush.bf16.msra.mxu0 0
    %3095 = vmatpush.bf16.msra.mxu0 0
    %3096 = vmatpush.bf16.msra.mxu0 0
    %3097 = vmatpush.bf16.msra.mxu0 0
    %3098 = vmatpush.bf16.msra.mxu0 %v3086
    %3099 = vmatpush.bf16.msra.mxu0 %v3085
    %3100 = vmatmul.bf16.gmra.mxu0 %v3090
    %v3101 = vpop.f32.mrf.mxu0
    %v3102 = vadd.f32 %v3075, %v3101
    %v3103 = vpop.f32.mrf.mxu0
    %v3104 = vadd.f32 %v3075, %v3103
    %3105 = vdwg.mxu0
    %v3106 = vmul.f32 %v3102, 0.35355338
    %v3107 = vmul.f32 %v3104, 0.35355338
    %v3108 = vpack.c.bf16 %v3106, %v3106
    %v3109 = vpack.c.bf16 %v3107, %v3107
    %3112 = vrot.lane.b32.xlu0 %v3108, 120
    %v3113 = vpop.permute.xlu0 %3112
    %3114 = vrot.lane.b32.xlu0 %v3109, 120
    %v3115 = vpop.permute.xlu0 %3114
    %3116 = vrot.lane.b32.xlu0 %v3108, 112
    %v3117 = vpop.permute.xlu0 %3116
    %3118 = vrot.lane.b32.xlu0 %v3109, 112
    %v3119 = vpop.permute.xlu0 %3118
    %3120 = vrot.lane.b32.xlu0 %v3108, 104
    %v3121 = vpop.permute.xlu0 %3120
    %3122 = vrot.lane.b32.xlu0 %v3109, 104
    %v3123 = vpop.permute.xlu0 %3122
    %3124 = vrot.lane.b32.xlu0 %v1038, 64
    %v3125 = vpop.permute.xlu0 %3124
    %v3127 = vsel %vm253, %v3108, 0
    %v3130 = vsel %vm253, %v3125, 0
    %3132 = vmatpush.bf16.xpose.msra.mxu0 0
    %3133 = vmatpush.bf16.xpose.msra.mxu0 0
    %3134 = vmatpush.bf16.xpose.msra.mxu0 0
    %3135 = vmatpush.bf16.xpose.msra.mxu0 0
    %3136 = vmatpush.bf16.xpose.msra.mxu0 0
    %3137 = vmatpush.bf16.xpose.msra.mxu0 0
    %3138 = vmatpush.bf16.xpose.msra.mxu0 0
    %3139 = vmatpush.bf16.xpose.msra.mxu0 %v3130
    %3140 = vmatmul.bf16.gmra.mxu0 %v3127
    %v3141 = vpop.f32.mrf.mxu0
    %v3142 = vadd.f32 %v98, %v3141
    %v3143 = vpop.f32.mrf.mxu0
    %3144 = vdwg.mxu0
    %3145 = vrot.lane.b32.xlu0 %v1060, 64
    %v3146 = vpop.permute.xlu0 %3145
    %v3148 = vsel %vm253, %v3109, 0
    %v3151 = vsel %vm253, %v3146, 0
    %3153 = vmatpush.bf16.xpose.msra.mxu0 0
    %3154 = vmatpush.bf16.xpose.msra.mxu0 0
    %3155 = vmatpush.bf16.xpose.msra.mxu0 0
    %3156 = vmatpush.bf16.xpose.msra.mxu0 0
    %3157 = vmatpush.bf16.xpose.msra.mxu0 0
    %3158 = vmatpush.bf16.xpose.msra.mxu0 0
    %3159 = vmatpush.bf16.xpose.msra.mxu0 0
    %3160 = vmatpush.bf16.xpose.msra.mxu0 %v3151
    %3161 = vmatmul.bf16.gmra.mxu0 %v3148
    %v3162 = vpop.f32.mrf.mxu0
    %v3163 = vadd.f32 %v99, %v3162
    %v3164 = vpop.f32.mrf.mxu0
    %3165 = vdwg.mxu0
    %3166 = vrot.lane.b32.xlu0 %v1082, 64
    %v3167 = vpop.permute.xlu0 %3166
    %v3169 = vsel %vm253, %v3113, 0
    %v3172 = vsel %vm253, %v3167, 0
    %3174 = vmatpush.bf16.xpose.msra.mxu0 0
    %3175 = vmatpush.bf16.xpose.msra.mxu0 0
    %3176 = vmatpush.bf16.xpose.msra.mxu0 0
    %3177 = vmatpush.bf16.xpose.msra.mxu0 0
    %3178 = vmatpush.bf16.xpose.msra.mxu0 0
    %3179 = vmatpush.bf16.xpose.msra.mxu0 0
    %3180 = vmatpush.bf16.xpose.msra.mxu0 0
    %3181 = vmatpush.bf16.xpose.msra.mxu0 %v3172
    %3182 = vmatmul.bf16.gmra.mxu0 %v3169
    %v3183 = vpop.f32.mrf.mxu0
    %v3184 = vadd.f32 %v98, %v3183
    %v3185 = vpop.f32.mrf.mxu0
    %3186 = vdwg.mxu0
    %3187 = vrot.lane.b32.xlu0 %v1104, 64
    %v3188 = vpop.permute.xlu0 %3187
    %v3190 = vsel %vm253, %v3115, 0
    %v3193 = vsel %vm253, %v3188, 0
    %3195 = vmatpush.bf16.xpose.msra.mxu0 0
    %3196 = vmatpush.bf16.xpose.msra.mxu0 0
    %3197 = vmatpush.bf16.xpose.msra.mxu0 0
    %3198 = vmatpush.bf16.xpose.msra.mxu0 0
    %3199 = vmatpush.bf16.xpose.msra.mxu0 0
    %3200 = vmatpush.bf16.xpose.msra.mxu0 0
    %3201 = vmatpush.bf16.xpose.msra.mxu0 0
    %3202 = vmatpush.bf16.xpose.msra.mxu0 %v3193
    %3203 = vmatmul.bf16.gmra.mxu0 %v3190
    %v3204 = vpop.f32.mrf.mxu0
    %v3205 = vadd.f32 %v99, %v3204
    %v3206 = vpop.f32.mrf.mxu0
    %3207 = vdwg.mxu0
    %3208 = vrot.lane.b32.xlu0 %v1126, 64
    %v3209 = vpop.permute.xlu0 %3208
    %v3211 = vsel %vm253, %v3117, 0
    %v3214 = vsel %vm253, %v3209, 0
    %3216 = vmatpush.bf16.xpose.msra.mxu0 0
    %3217 = vmatpush.bf16.xpose.msra.mxu0 0
    %3218 = vmatpush.bf16.xpose.msra.mxu0 0
    %3219 = vmatpush.bf16.xpose.msra.mxu0 0
    %3220 = vmatpush.bf16.xpose.msra.mxu0 0
    %3221 = vmatpush.bf16.xpose.msra.mxu0 0
    %3222 = vmatpush.bf16.xpose.msra.mxu0 0
    %3223 = vmatpush.bf16.xpose.msra.mxu0 %v3214
    %3224 = vmatmul.bf16.gmra.mxu0 %v3211
    %v3225 = vpop.f32.mrf.mxu0
    %v3226 = vadd.f32 %v98, %v3225
    %v3227 = vpop.f32.mrf.mxu0
    %3228 = vdwg.mxu0
    %3229 = vrot.lane.b32.xlu0 %v1148, 64
    %v3230 = vpop.permute.xlu0 %3229
    %v3232 = vsel %vm253, %v3119, 0
    %v3235 = vsel %vm253, %v3230, 0
    %3237 = vmatpush.bf16.xpose.msra.mxu0 0
    %3238 = vmatpush.bf16.xpose.msra.mxu0 0
    %3239 = vmatpush.bf16.xpose.msra.mxu0 0
    %3240 = vmatpush.bf16.xpose.msra.mxu0 0
    %3241 = vmatpush.bf16.xpose.msra.mxu0 0
    %3242 = vmatpush.bf16.xpose.msra.mxu0 0
    %3243 = vmatpush.bf16.xpose.msra.mxu0 0
    %3244 = vmatpush.bf16.xpose.msra.mxu0 %v3235
    %3245 = vmatmul.bf16.gmra.mxu0 %v3232
    %v3246 = vpop.f32.mrf.mxu0
    %v3247 = vadd.f32 %v99, %v3246
    %v3248 = vpop.f32.mrf.mxu0
    %3249 = vdwg.mxu0
    %3250 = vrot.lane.b32.xlu0 %v1170, 64
    %v3251 = vpop.permute.xlu0 %3250
    %v3253 = vsel %vm253, %v3121, 0
    %v3256 = vsel %vm253, %v3251, 0
    %3258 = vmatpush.bf16.xpose.msra.mxu0 0
    %3259 = vmatpush.bf16.xpose.msra.mxu0 0
    %3260 = vmatpush.bf16.xpose.msra.mxu0 0
    %3261 = vmatpush.bf16.xpose.msra.mxu0 0
    %3262 = vmatpush.bf16.xpose.msra.mxu0 0
    %3263 = vmatpush.bf16.xpose.msra.mxu0 0
    %3264 = vmatpush.bf16.xpose.msra.mxu0 0
    %3265 = vmatpush.bf16.xpose.msra.mxu0 %v3256
    %3266 = vmatmul.bf16.gmra.mxu0 %v3253
    %v3267 = vpop.f32.mrf.mxu0
    %v3268 = vadd.f32 %v98, %v3267
    %v3269 = vpop.f32.mrf.mxu0
    %3270 = vdwg.mxu0
    %3271 = vrot.lane.b32.xlu0 %v1192, 64
    %v3272 = vpop.permute.xlu0 %3271
    %v3274 = vsel %vm253, %v3123, 0
    %v3277 = vsel %vm253, %v3272, 0
    %3279 = vmatpush.bf16.xpose.msra.mxu0 0
    %3280 = vmatpush.bf16.xpose.msra.mxu0 0
    %3281 = vmatpush.bf16.xpose.msra.mxu0 0
    %3282 = vmatpush.bf16.xpose.msra.mxu0 0
    %3283 = vmatpush.bf16.xpose.msra.mxu0 0
    %3284 = vmatpush.bf16.xpose.msra.mxu0 0
    %3285 = vmatpush.bf16.xpose.msra.mxu0 0
    %3286 = vmatpush.bf16.xpose.msra.mxu0 %v3277
    %3287 = vmatmul.bf16.gmra.mxu0 %v3274
    %v3288 = vpop.f32.mrf.mxu0
    %v3289 = vadd.f32 %v99, %v3288
    %v3290 = vpop.f32.mrf.mxu0
    %3291 = vdwg.mxu0
    %v3292 = vsel %vm829, %v3142, -inf
    %3293 = vmax.xlane.f32.xlu0 %v3292
    %v3294 = vpop.xlane.xlu0 %3293
    %v3295 = vsel %vm829, %v3163, -inf
    %3296 = vmax.xlane.f32.xlu0 %v3295
    %v3297 = vpop.xlane.xlu0 %3296
    %v3298 = vsel %vm829, %v3184, -inf
    %3299 = vmax.xlane.f32.xlu0 %v3298
    %v3300 = vpop.xlane.xlu0 %3299
    %v3301 = vsel %vm829, %v3205, -inf
    %3302 = vmax.xlane.f32.xlu0 %v3301
    %v3303 = vpop.xlane.xlu0 %3302
    %v3304 = vsel %vm829, %v3226, -inf
    %3305 = vmax.xlane.f32.xlu0 %v3304
    %v3306 = vpop.xlane.xlu0 %3305
    %v3307 = vsel %vm829, %v3247, -inf
    %3308 = vmax.xlane.f32.xlu0 %v3307
    %v3309 = vpop.xlane.xlu0 %3308
    %v3310 = vsel %vm829, %v3268, -inf
    %3311 = vmax.xlane.f32.xlu0 %v3310
    %v3312 = vpop.xlane.xlu0 %3311
    %v3313 = vsel %vm829, %v3289, -inf
    %3314 = vmax.xlane.f32.xlu0 %v3313
    %v3315 = vpop.xlane.xlu0 %3314
    %v3316 = vsub.f32 %v3142, %v3294
    %v3317 = vsub.f32 %v3163, %v3297
    %v3318 = vsub.f32 %v3184, %v3300
    %v3319 = vsub.f32 %v3205, %v3303
    %v3320 = vsub.f32 %v3226, %v3306
    %v3321 = vsub.f32 %v3247, %v3309
    %v3322 = vsub.f32 %v3268, %v3312
    %v3323 = vsub.f32 %v3289, %v3315
    %v3324 = vmul.f32 %v3316, 1.442695
    %v3325 = vpow.pop %v3324
    %v3326 = vmul.f32 %v3317, 1.442695
    %v3327 = vpow.pop %v3326
    %v3328 = vmul.f32 %v3318, 1.442695
    %v3329 = vpow.pop %v3328
    %v3330 = vmul.f32 %v3319, 1.442695
    %v3331 = vpow.pop %v3330
    %v3332 = vmul.f32 %v3320, 1.442695
    %v3333 = vpow.pop %v3332
    %v3334 = vmul.f32 %v3321, 1.442695
    %v3335 = vpow.pop %v3334
    %v3336 = vmul.f32 %v3322, 1.442695
    %v3337 = vpow.pop %v3336
    %v3338 = vmul.f32 %v3323, 1.442695
    %v3339 = vpow.pop %v3338
    %v3340 = vsel %vm829, %v3325, 0.0
    %3341 = vadd.xlane.f32.xlu0 %v3340
    %v3342 = vpop.xlane.xlu0 %3341
    %v3343 = vsel %vm829, %v3327, 0.0
    %3344 = vadd.xlane.f32.xlu0 %v3343
    %v3345 = vpop.xlane.xlu0 %3344
    %v3346 = vsel %vm829, %v3329, 0.0
    %3347 = vadd.xlane.f32.xlu0 %v3346
    %v3348 = vpop.xlane.xlu0 %3347
    %v3349 = vsel %vm829, %v3331, 0.0
    %3350 = vadd.xlane.f32.xlu0 %v3349
    %v3351 = vpop.xlane.xlu0 %3350
    %v3352 = vsel %vm829, %v3333, 0.0
    %3353 = vadd.xlane.f32.xlu0 %v3352
    %v3354 = vpop.xlane.xlu0 %3353
    %v3355 = vsel %vm829, %v3335, 0.0
    %3356 = vadd.xlane.f32.xlu0 %v3355
    %v3357 = vpop.xlane.xlu0 %3356
    %v3358 = vsel %vm829, %v3337, 0.0
    %3359 = vadd.xlane.f32.xlu0 %v3358
    %v3360 = vpop.xlane.xlu0 %3359
    %v3361 = vsel %vm829, %v3339, 0.0
    %3362 = vadd.xlane.f32.xlu0 %v3361
    %v3363 = vpop.xlane.xlu0 %3362
    %v3364 = vrcp.pop %v3342
    %v3365 = vmul.f32 %v3342, %v3364
    %v3366 = vsub.f32 1.0, %v3365
    %v3367 = vmul.f32 %v3364, %v3366
    %v3368 = vadd.f32 %v3364, %v3367
    %vm3369 = vweird.f32 %v3342
    %vm3370 = vweird.f32 %v3364
    %vm3371 = vmor %vm3369, %vm3370
    %v3372 = vsel %vm3371, %v3364, %v3368
    %v3373 = vand.u32 2147483647, %v3342
    %vm3374 = vcmp.eq.f32.partialorder %v3373, 8.507059e+37
    %v3375 = vand.u32 %v3342, 2147483648
    %v3376 = vor.u32 1.1754944e-38, %v3375
    %v3377 = vsel %vm3374, %v3376, %v3372
    %v3378 = vmul.f32 %v3325, %v3377
    %v3379 = vrcp.pop %v3345
    %v3380 = vmul.f32 %v3345, %v3379
    %v3381 = vsub.f32 1.0, %v3380
    %v3382 = vmul.f32 %v3379, %v3381
    %v3383 = vadd.f32 %v3379, %v3382
    %vm3384 = vweird.f32 %v3345
    %vm3385 = vweird.f32 %v3379
    %vm3386 = vmor %vm3384, %vm3385
    %v3387 = vsel %vm3386, %v3379, %v3383
    %v3388 = vand.u32 2147483647, %v3345
    %vm3389 = vcmp.eq.f32.partialorder %v3388, 8.507059e+37
    %v3390 = vand.u32 %v3345, 2147483648
    %v3391 = vor.u32 1.1754944e-38, %v3390
    %v3392 = vsel %vm3389, %v3391, %v3387
    %v3393 = vmul.f32 %v3327, %v3392
    %v3394 = vrcp.pop %v3348
    %v3395 = vmul.f32 %v3348, %v3394
    %v3396 = vsub.f32 1.0, %v3395
    %v3397 = vmul.f32 %v3394, %v3396
    %v3398 = vadd.f32 %v3394, %v3397
    %vm3399 = vweird.f32 %v3348
    %vm3400 = vweird.f32 %v3394
    %vm3401 = vmor %vm3399, %vm3400
    %v3402 = vsel %vm3401, %v3394, %v3398
    %v3403 = vand.u32 2147483647, %v3348
    %vm3404 = vcmp.eq.f32.partialorder %v3403, 8.507059e+37
    %v3405 = vand.u32 %v3348, 2147483648
    %v3406 = vor.u32 1.1754944e-38, %v3405
    %v3407 = vsel %vm3404, %v3406, %v3402
    %v3408 = vmul.f32 %v3329, %v3407
    %v3409 = vrcp.pop %v3351
    %v3410 = vmul.f32 %v3351, %v3409
    %v3411 = vsub.f32 1.0, %v3410
    %v3412 = vmul.f32 %v3409, %v3411
    %v3413 = vadd.f32 %v3409, %v3412
    %vm3414 = vweird.f32 %v3351
    %vm3415 = vweird.f32 %v3409
    %vm3416 = vmor %vm3414, %vm3415
    %v3417 = vsel %vm3416, %v3409, %v3413
    %v3418 = vand.u32 2147483647, %v3351
    %vm3419 = vcmp.eq.f32.partialorder %v3418, 8.507059e+37
    %v3420 = vand.u32 %v3351, 2147483648
    %v3421 = vor.u32 1.1754944e-38, %v3420
    %v3422 = vsel %vm3419, %v3421, %v3417
    %v3423 = vmul.f32 %v3331, %v3422
    %v3424 = vrcp.pop %v3354
    %v3425 = vmul.f32 %v3354, %v3424
    %v3426 = vsub.f32 1.0, %v3425
    %v3427 = vmul.f32 %v3424, %v3426
    %v3428 = vadd.f32 %v3424, %v3427
    %vm3429 = vweird.f32 %v3354
    %vm3430 = vweird.f32 %v3424
    %vm3431 = vmor %vm3429, %vm3430
    %v3432 = vsel %vm3431, %v3424, %v3428
    %v3433 = vand.u32 2147483647, %v3354
    %vm3434 = vcmp.eq.f32.partialorder %v3433, 8.507059e+37
    %v3435 = vand.u32 %v3354, 2147483648
    %v3436 = vor.u32 1.1754944e-38, %v3435
    %v3437 = vsel %vm3434, %v3436, %v3432
    %v3438 = vmul.f32 %v3333, %v3437
    %v3439 = vrcp.pop %v3357
    %v3440 = vmul.f32 %v3357, %v3439
    %v3441 = vsub.f32 1.0, %v3440
    %v3442 = vmul.f32 %v3439, %v3441
    %v3443 = vadd.f32 %v3439, %v3442
    %vm3444 = vweird.f32 %v3357
    %vm3445 = vweird.f32 %v3439
    %vm3446 = vmor %vm3444, %vm3445
    %v3447 = vsel %vm3446, %v3439, %v3443
    %v3448 = vand.u32 2147483647, %v3357
    %vm3449 = vcmp.eq.f32.partialorder %v3448, 8.507059e+37
    %v3450 = vand.u32 %v3357, 2147483648
    %v3451 = vor.u32 1.1754944e-38, %v3450
    %v3452 = vsel %vm3449, %v3451, %v3447
    %v3453 = vmul.f32 %v3335, %v3452
    %v3454 = vrcp.pop %v3360
    %v3455 = vmul.f32 %v3360, %v3454
    %v3456 = vsub.f32 1.0, %v3455
    %v3457 = vmul.f32 %v3454, %v3456
    %v3458 = vadd.f32 %v3454, %v3457
    %vm3459 = vweird.f32 %v3360
    %vm3460 = vweird.f32 %v3454
    %vm3461 = vmor %vm3459, %vm3460
    %v3462 = vsel %vm3461, %v3454, %v3458
    %v3463 = vand.u32 2147483647, %v3360
    %vm3464 = vcmp.eq.f32.partialorder %v3463, 8.507059e+37
    %v3465 = vand.u32 %v3360, 2147483648
    %v3466 = vor.u32 1.1754944e-38, %v3465
    %v3467 = vsel %vm3464, %v3466, %v3462
    %v3468 = vmul.f32 %v3337, %v3467
    %v3469 = vrcp.pop %v3363
    %v3470 = vmul.f32 %v3363, %v3469
    %v3471 = vsub.f32 1.0, %v3470
    %v3472 = vmul.f32 %v3469, %v3471
    %v3473 = vadd.f32 %v3469, %v3472
    %vm3474 = vweird.f32 %v3363
    %vm3475 = vweird.f32 %v3469
    %vm3476 = vmor %vm3474, %vm3475
    %v3477 = vsel %vm3476, %v3469, %v3473
    %v3478 = vand.u32 2147483647, %v3363
    %vm3479 = vcmp.eq.f32.partialorder %v3478, 8.507059e+37
    %v3480 = vand.u32 %v3363, 2147483648
    %v3481 = vor.u32 1.1754944e-38, %v3480
    %v3482 = vsel %vm3479, %v3481, %v3477
    %v3483 = vmul.f32 %v3339, %v3482
    %v3484 = vpack.c.bf16 %v3378, %v3378
    %v3485 = vpack.c.bf16 %v3393, %v3393
    %v3486 = vpack.c.bf16 %v3408, %v3408
    %v3487 = vpack.c.bf16 %v3423, %v3423
    %v3488 = vpack.c.bf16 %v3438, %v3438
    %v3489 = vpack.c.bf16 %v3453, %v3453
    %v3490 = vpack.c.bf16 %v3468, %v3468
    %v3491 = vpack.c.bf16 %v3483, %v3483
    %3492 = vrot.lane.b32.xlu0 %v1038, 32
    %v3493 = vpop.permute.xlu0 %3492
    %v3496 = vsel %vm829, %v3484, 0
    %3498 = vmatpush.bf16.msra.mxu0 0
    %3499 = vmatpush.bf16.msra.mxu0 0
    %3500 = vmatpush.bf16.msra.mxu0 0
    %3501 = vmatpush.bf16.msra.mxu0 0
    %3502 = vmatpush.bf16.msra.mxu0 0
    %3503 = vmatpush.bf16.msra.mxu0 0
    %3504 = vmatpush.bf16.msra.mxu0 0
    %3505 = vmatpush.bf16.msra.mxu0 %v3493
    %3506 = vmatmul.bf16.gmra.mxu0 %v3496
    %v3507 = vpop.f32.mrf.mxu0
    %v3508 = vadd.f32 0.0, %v3507
    %v3509 = vpop.f32.mrf.mxu0
    %3510 = vdwg.mxu0
    %3511 = vrot.lane.b32.xlu0 %v1060, 32
    %v3512 = vpop.permute.xlu0 %3511
    %v3515 = vsel %vm829, %v3485, 0
    %3517 = vmatpush.bf16.msra.mxu0 0
    %3518 = vmatpush.bf16.msra.mxu0 0
    %3519 = vmatpush.bf16.msra.mxu0 0
    %3520 = vmatpush.bf16.msra.mxu0 0
    %3521 = vmatpush.bf16.msra.mxu0 0
    %3522 = vmatpush.bf16.msra.mxu0 0
    %3523 = vmatpush.bf16.msra.mxu0 0
    %3524 = vmatpush.bf16.msra.mxu0 %v3512
    %3525 = vmatmul.bf16.gmra.mxu0 %v3515
    %v3526 = vpop.f32.mrf.mxu0
    %v3527 = vadd.f32 0.0, %v3526
    %v3528 = vpop.f32.mrf.mxu0
    %3529 = vdwg.mxu0
    %3530 = vrot.lane.b32.xlu0 %v1082, 32
    %v3531 = vpop.permute.xlu0 %3530
    %v3534 = vsel %vm829, %v3486, 0
    %3536 = vmatpush.bf16.msra.mxu0 0
    %3537 = vmatpush.bf16.msra.mxu0 0
    %3538 = vmatpush.bf16.msra.mxu0 0
    %3539 = vmatpush.bf16.msra.mxu0 0
    %3540 = vmatpush.bf16.msra.mxu0 0
    %3541 = vmatpush.bf16.msra.mxu0 0
    %3542 = vmatpush.bf16.msra.mxu0 0
    %3543 = vmatpush.bf16.msra.mxu0 %v3531
    %3544 = vmatmul.bf16.gmra.mxu0 %v3534
    %v3545 = vpop.f32.mrf.mxu0
    %v3546 = vadd.f32 0.0, %v3545
    %v3547 = vpop.f32.mrf.mxu0
    %3548 = vdwg.mxu0
    %3549 = vrot.lane.b32.xlu0 %v1104, 32
    %v3550 = vpop.permute.xlu0 %3549
    %v3553 = vsel %vm829, %v3487, 0
    %3555 = vmatpush.bf16.msra.mxu0 0
    %3556 = vmatpush.bf16.msra.mxu0 0
    %3557 = vmatpush.bf16.msra.mxu0 0
    %3558 = vmatpush.bf16.msra.mxu0 0
    %3559 = vmatpush.bf16.msra.mxu0 0
    %3560 = vmatpush.bf16.msra.mxu0 0
    %3561 = vmatpush.bf16.msra.mxu0 0
    %3562 = vmatpush.bf16.msra.mxu0 %v3550
    %3563 = vmatmul.bf16.gmra.mxu0 %v3553
    %v3564 = vpop.f32.mrf.mxu0
    %v3565 = vadd.f32 0.0, %v3564
    %v3566 = vpop.f32.mrf.mxu0
    %3567 = vdwg.mxu0
    %3568 = vrot.lane.b32.xlu0 %v1126, 32
    %v3569 = vpop.permute.xlu0 %3568
    %v3572 = vsel %vm829, %v3488, 0
    %3574 = vmatpush.bf16.msra.mxu0 0
    %3575 = vmatpush.bf16.msra.mxu0 0
    %3576 = vmatpush.bf16.msra.mxu0 0
    %3577 = vmatpush.bf16.msra.mxu0 0
    %3578 = vmatpush.bf16.msra.mxu0 0
    %3579 = vmatpush.bf16.msra.mxu0 0
    %3580 = vmatpush.bf16.msra.mxu0 0
    %3581 = vmatpush.bf16.msra.mxu0 %v3569
    %3582 = vmatmul.bf16.gmra.mxu0 %v3572
    %v3583 = vpop.f32.mrf.mxu0
    %v3584 = vadd.f32 0.0, %v3583
    %v3585 = vpop.f32.mrf.mxu0
    %3586 = vdwg.mxu0
    %3587 = vrot.lane.b32.xlu0 %v1148, 32
    %v3588 = vpop.permute.xlu0 %3587
    %v3591 = vsel %vm829, %v3489, 0
    %3593 = vmatpush.bf16.msra.mxu0 0
    %3594 = vmatpush.bf16.msra.mxu0 0
    %3595 = vmatpush.bf16.msra.mxu0 0
    %3596 = vmatpush.bf16.msra.mxu0 0
    %3597 = vmatpush.bf16.msra.mxu0 0
    %3598 = vmatpush.bf16.msra.mxu0 0
    %3599 = vmatpush.bf16.msra.mxu0 0
    %3600 = vmatpush.bf16.msra.mxu0 %v3588
    %3601 = vmatmul.bf16.gmra.mxu0 %v3591
    %v3602 = vpop.f32.mrf.mxu0
    %v3603 = vadd.f32 0.0, %v3602
    %v3604 = vpop.f32.mrf.mxu0
    %3605 = vdwg.mxu0
    %3606 = vrot.lane.b32.xlu0 %v1170, 32
    %v3607 = vpop.permute.xlu0 %3606
    %v3610 = vsel %vm829, %v3490, 0
    %3612 = vmatpush.bf16.msra.mxu0 0
    %3613 = vmatpush.bf16.msra.mxu0 0
    %3614 = vmatpush.bf16.msra.mxu0 0
    %3615 = vmatpush.bf16.msra.mxu0 0
    %3616 = vmatpush.bf16.msra.mxu0 0
    %3617 = vmatpush.bf16.msra.mxu0 0
    %3618 = vmatpush.bf16.msra.mxu0 0
    %3619 = vmatpush.bf16.msra.mxu0 %v3607
    %3620 = vmatmul.bf16.gmra.mxu0 %v3610
    %v3621 = vpop.f32.mrf.mxu0
    %v3622 = vadd.f32 0.0, %v3621
    %v3623 = vpop.f32.mrf.mxu0
    %3624 = vdwg.mxu0
    %3625 = vrot.lane.b32.xlu0 %v1192, 32
    %v3626 = vpop.permute.xlu0 %3625
    %v3629 = vsel %vm829, %v3491, 0
    %3631 = vmatpush.bf16.msra.mxu0 0
    %3632 = vmatpush.bf16.msra.mxu0 0
    %3633 = vmatpush.bf16.msra.mxu0 0
    %3634 = vmatpush.bf16.msra.mxu0 0
    %3635 = vmatpush.bf16.msra.mxu0 0
    %3636 = vmatpush.bf16.msra.mxu0 0
    %3637 = vmatpush.bf16.msra.mxu0 0
    %3638 = vmatpush.bf16.msra.mxu0 %v3626
    %3639 = vmatmul.bf16.gmra.mxu0 %v3629
    %v3640 = vpop.f32.mrf.mxu0
    %v3641 = vadd.f32 0.0, %v3640
    %v3642 = vpop.f32.mrf.mxu0
    %3643 = vdwg.mxu0
    %3646 = vrot.lane.b32.xlu0 %v3546, 8
    %v3647 = vpop.permute.xlu0 %3646
    %3648 = vrot.lane.b32.xlu0 %v3565, 8
    %v3649 = vpop.permute.xlu0 %3648
    %3654 = vrot.lane.b32.xlu0 %v3584, 16
    %v3655 = vpop.permute.xlu0 %3654
    %3656 = vrot.lane.b32.xlu0 %v3603, 16
    %v3657 = vpop.permute.xlu0 %3656
    %3662 = vrot.lane.b32.xlu0 %v3622, 24
    %v3663 = vpop.permute.xlu0 %3662
    %3664 = vrot.lane.b32.xlu0 %v3641, 24
    %v3665 = vpop.permute.xlu0 %3664
    %v3668 = vsel %vm253, %v3508, %v3647
    %v3669 = vsel %vm253, %v3527, %v3649
    %v3670 = vsel %vm829, %v3668, %v3655
    %v3671 = vsel %vm829, %v3669, %v3657
    %v3672 = vsel %vm832, %v3670, %v3663
    %v3673 = vsel %vm832, %v3671, %v3665
    %v3674 = vunpack.c.l.b16 %v1020
    %v3675 = vpack.c.b16 %v3674, %v3674
    %3676 = vrot.lane.b32.xlu0 %v3675, 64
    %v3677 = vpop.permute.xlu0 %3676
    %v3679 = vsel %vm253, %v3677, 0
    %3681 = vmatpush.bf16.xpose.msra.mxu0 0
    %3682 = vmatpush.bf16.xpose.msra.mxu0 0
    %3683 = vmatpush.bf16.xpose.msra.mxu0 0
    %3684 = vmatpush.bf16.xpose.msra.mxu0 0
    %3685 = vmatpush.bf16.xpose.msra.mxu0 0
    %3686 = vmatpush.bf16.xpose.msra.mxu0 0
    %3687 = vmatpush.bf16.xpose.msra.mxu0 0
    %3688 = vmatpush.bf16.xpose.msra.mxu0 %v3679
    %3689 = vmatmul.bf16.gmra.mxu0 %v3127
    %v3690 = vpop.f32.mrf.mxu0
    %v3691 = vadd.f32 0.0, %v3690
    %v3692 = vpop.f32.mrf.mxu0
    %3693 = vdwg.mxu0
    %v3694 = vunpack.c.l.b16 %v1021
    %v3695 = vpack.c.b16 %v3694, %v3694
    %3696 = vrot.lane.b32.xlu0 %v3695, 64
    %v3697 = vpop.permute.xlu0 %3696
    %v3699 = vsel %vm253, %v3697, 0
    %3701 = vmatpush.bf16.xpose.msra.mxu0 0
    %3702 = vmatpush.bf16.xpose.msra.mxu0 0
    %3703 = vmatpush.bf16.xpose.msra.mxu0 0
    %3704 = vmatpush.bf16.xpose.msra.mxu0 0
    %3705 = vmatpush.bf16.xpose.msra.mxu0 0
    %3706 = vmatpush.bf16.xpose.msra.mxu0 0
    %3707 = vmatpush.bf16.xpose.msra.mxu0 0
    %3708 = vmatpush.bf16.xpose.msra.mxu0 %v3699
    %3709 = vmatmul.bf16.gmra.mxu0 %v3148
    %v3710 = vpop.f32.mrf.mxu0
    %v3711 = vadd.f32 0.0, %v3710
    %v3712 = vpop.f32.mrf.mxu0
    %3713 = vdwg.mxu0
    %v3714 = vunpack.c.l.b16 %v1025
    %v3715 = vpack.c.b16 %v3714, %v3714
    %3716 = vrot.lane.b32.xlu0 %v3715, 64
    %v3717 = vpop.permute.xlu0 %3716
    %v3719 = vsel %vm253, %v3717, 0
    %3721 = vmatpush.bf16.xpose.msra.mxu0 0
    %3722 = vmatpush.bf16.xpose.msra.mxu0 0
    %3723 = vmatpush.bf16.xpose.msra.mxu0 0
    %3724 = vmatpush.bf16.xpose.msra.mxu0 0
    %3725 = vmatpush.bf16.xpose.msra.mxu0 0
    %3726 = vmatpush.bf16.xpose.msra.mxu0 0
    %3727 = vmatpush.bf16.xpose.msra.mxu0 0
    %3728 = vmatpush.bf16.xpose.msra.mxu0 %v3719
    %3729 = vmatmul.bf16.gmra.mxu0 %v3169
    %v3730 = vpop.f32.mrf.mxu0
    %v3731 = vadd.f32 0.0, %v3730
    %v3732 = vpop.f32.mrf.mxu0
    %3733 = vdwg.mxu0
    %v3734 = vunpack.c.l.b16 %v1027
    %v3735 = vpack.c.b16 %v3734, %v3734
    %3736 = vrot.lane.b32.xlu0 %v3735, 64
    %v3737 = vpop.permute.xlu0 %3736
    %v3739 = vsel %vm253, %v3737, 0
    %3741 = vmatpush.bf16.xpose.msra.mxu0 0
    %3742 = vmatpush.bf16.xpose.msra.mxu0 0
    %3743 = vmatpush.bf16.xpose.msra.mxu0 0
    %3744 = vmatpush.bf16.xpose.msra.mxu0 0
    %3745 = vmatpush.bf16.xpose.msra.mxu0 0
    %3746 = vmatpush.bf16.xpose.msra.mxu0 0
    %3747 = vmatpush.bf16.xpose.msra.mxu0 0
    %3748 = vmatpush.bf16.xpose.msra.mxu0 %v3739
    %3749 = vmatmul.bf16.gmra.mxu0 %v3190
    %v3750 = vpop.f32.mrf.mxu0
    %v3751 = vadd.f32 0.0, %v3750
    %v3752 = vpop.f32.mrf.mxu0
    %3753 = vdwg.mxu0
    %v3754 = vunpack.c.l.b16 %v1029
    %v3755 = vpack.c.b16 %v3754, %v3754
    %3756 = vrot.lane.b32.xlu0 %v3755, 64
    %v3757 = vpop.permute.xlu0 %3756
    %v3759 = vsel %vm253, %v3757, 0
    %3761 = vmatpush.bf16.xpose.msra.mxu0 0
    %3762 = vmatpush.bf16.xpose.msra.mxu0 0
    %3763 = vmatpush.bf16.xpose.msra.mxu0 0
    %3764 = vmatpush.bf16.xpose.msra.mxu0 0
    %3765 = vmatpush.bf16.xpose.msra.mxu0 0
    %3766 = vmatpush.bf16.xpose.msra.mxu0 0
    %3767 = vmatpush.bf16.xpose.msra.mxu0 0
    %3768 = vmatpush.bf16.xpose.msra.mxu0 %v3759
    %3769 = vmatmul.bf16.gmra.mxu0 %v3211
    %v3770 = vpop.f32.mrf.mxu0
    %v3771 = vadd.f32 0.0, %v3770
    %v3772 = vpop.f32.mrf.mxu0
    %3773 = vdwg.mxu0
    %v3774 = vunpack.c.l.b16 %v1031
    %v3775 = vpack.c.b16 %v3774, %v3774
    %3776 = vrot.lane.b32.xlu0 %v3775, 64
    %v3777 = vpop.permute.xlu0 %3776
    %v3779 = vsel %vm253, %v3777, 0
    %3781 = vmatpush.bf16.xpose.msra.mxu0 0
    %3782 = vmatpush.bf16.xpose.msra.mxu0 0
    %3783 = vmatpush.bf16.xpose.msra.mxu0 0
    %3784 = vmatpush.bf16.xpose.msra.mxu0 0
    %3785 = vmatpush.bf16.xpose.msra.mxu0 0
    %3786 = vmatpush.bf16.xpose.msra.mxu0 0
    %3787 = vmatpush.bf16.xpose.msra.mxu0 0
    %3788 = vmatpush.bf16.xpose.msra.mxu0 %v3779
    %3789 = vmatmul.bf16.gmra.mxu0 %v3232
    %v3790 = vpop.f32.mrf.mxu0
    %v3791 = vadd.f32 0.0, %v3790
    %v3792 = vpop.f32.mrf.mxu0
    %3793 = vdwg.mxu0
    %v3794 = vunpack.c.l.b16 %v1033
    %v3795 = vpack.c.b16 %v3794, %v3794
    %3796 = vrot.lane.b32.xlu0 %v3795, 64
    %v3797 = vpop.permute.xlu0 %3796
    %v3799 = vsel %vm253, %v3797, 0
    %3801 = vmatpush.bf16.xpose.msra.mxu0 0
    %3802 = vmatpush.bf16.xpose.msra.mxu0 0
    %3803 = vmatpush.bf16.xpose.msra.mxu0 0
    %3804 = vmatpush.bf16.xpose.msra.mxu0 0
    %3805 = vmatpush.bf16.xpose.msra.mxu0 0
    %3806 = vmatpush.bf16.xpose.msra.mxu0 0
    %3807 = vmatpush.bf16.xpose.msra.mxu0 0
    %3808 = vmatpush.bf16.xpose.msra.mxu0 %v3799
    %3809 = vmatmul.bf16.gmra.mxu0 %v3253
    %v3810 = vpop.f32.mrf.mxu0
    %v3811 = vadd.f32 0.0, %v3810
    %v3812 = vpop.f32.mrf.mxu0
    %3813 = vdwg.mxu0
    %v3814 = vunpack.c.l.b16 %v1035
    %v3815 = vpack.c.b16 %v3814, %v3814
    %3816 = vrot.lane.b32.xlu0 %v3815, 64
    %v3817 = vpop.permute.xlu0 %3816
    %v3819 = vsel %vm253, %v3817, 0
    %3821 = vmatpush.bf16.xpose.msra.mxu0 0
    %3822 = vmatpush.bf16.xpose.msra.mxu0 0
    %3823 = vmatpush.bf16.xpose.msra.mxu0 0
    %3824 = vmatpush.bf16.xpose.msra.mxu0 0
    %3825 = vmatpush.bf16.xpose.msra.mxu0 0
    %3826 = vmatpush.bf16.xpose.msra.mxu0 0
    %3827 = vmatpush.bf16.xpose.msra.mxu0 0
    %3828 = vmatpush.bf16.xpose.msra.mxu0 %v3819
    %3829 = vmatmul.bf16.gmra.mxu0 %v3274
    %v3830 = vpop.f32.mrf.mxu0
    %v3831 = vadd.f32 0.0, %v3830
    %v3832 = vpop.f32.mrf.mxu0
    %3833 = vdwg.mxu0
    %v3834 = vxor.u32 %v3691, 2147483648
    %v3835 = vxor.u32 %v3711, 2147483648
    %v3836 = vxor.u32 %v3731, 2147483648
    %v3837 = vxor.u32 %v3751, 2147483648
    %v3838 = vxor.u32 %v3771, 2147483648
    %v3839 = vxor.u32 %v3791, 2147483648
    %v3840 = vxor.u32 %v3811, 2147483648
    %v3841 = vxor.u32 %v3831, 2147483648
    %v3842 = vmul.f32 %v3834, 1.442695
    %v3843 = vpow.pop %v3842
    %v3844 = vmul.f32 %v3835, 1.442695
    %v3845 = vpow.pop %v3844
    %v3846 = vmul.f32 %v3836, 1.442695
    %v3847 = vpow.pop %v3846
    %v3848 = vmul.f32 %v3837, 1.442695
    %v3849 = vpow.pop %v3848
    %v3850 = vmul.f32 %v3838, 1.442695
    %v3851 = vpow.pop %v3850
    %v3852 = vmul.f32 %v3839, 1.442695
    %v3853 = vpow.pop %v3852
    %v3854 = vmul.f32 %v3840, 1.442695
    %v3855 = vpow.pop %v3854
    %v3856 = vmul.f32 %v3841, 1.442695
    %v3857 = vpow.pop %v3856
    %v3858 = vadd.f32 %v3843, 1.0
    %v3859 = vadd.f32 %v3845, 1.0
    %v3860 = vadd.f32 %v3847, 1.0
    %v3861 = vadd.f32 %v3849, 1.0
    %v3862 = vadd.f32 %v3851, 1.0
    %v3863 = vadd.f32 %v3853, 1.0
    %v3864 = vadd.f32 %v3855, 1.0
    %v3865 = vadd.f32 %v3857, 1.0
    %v3866 = vrcp.pop %v3858
    %v3867 = vmul.f32 %v3858, %v3866
    %v3868 = vsub.f32 1.0, %v3867
    %v3869 = vmul.f32 %v3866, %v3868
    %v3870 = vadd.f32 %v3866, %v3869
    %vm3871 = vweird.f32 %v3858
    %vm3872 = vweird.f32 %v3866
    %vm3873 = vmor %vm3871, %vm3872
    %v3874 = vsel %vm3873, %v3866, %v3870
    %v3875 = vand.u32 2147483647, %v3858
    %vm3876 = vcmp.eq.f32.partialorder %v3875, 8.507059e+37
    %v3877 = vand.u32 %v3858, 2147483648
    %v3878 = vor.u32 1.1754944e-38, %v3877
    %v3879 = vsel %vm3876, %v3878, %v3874
    %v3880 = vmul.f32 1.0, %v3879
    %v3881 = vrcp.pop %v3859
    %v3882 = vmul.f32 %v3859, %v3881
    %v3883 = vsub.f32 1.0, %v3882
    %v3884 = vmul.f32 %v3881, %v3883
    %v3885 = vadd.f32 %v3881, %v3884
    %vm3886 = vweird.f32 %v3859
    %vm3887 = vweird.f32 %v3881
    %vm3888 = vmor %vm3886, %vm3887
    %v3889 = vsel %vm3888, %v3881, %v3885
    %v3890 = vand.u32 2147483647, %v3859
    %vm3891 = vcmp.eq.f32.partialorder %v3890, 8.507059e+37
    %v3892 = vand.u32 %v3859, 2147483648
    %v3893 = vor.u32 1.1754944e-38, %v3892
    %v3894 = vsel %vm3891, %v3893, %v3889
    %v3895 = vmul.f32 1.0, %v3894
    %v3896 = vrcp.pop %v3860
    %v3897 = vmul.f32 %v3860, %v3896
    %v3898 = vsub.f32 1.0, %v3897
    %v3899 = vmul.f32 %v3896, %v3898
    %v3900 = vadd.f32 %v3896, %v3899
    %vm3901 = vweird.f32 %v3860
    %vm3902 = vweird.f32 %v3896
    %vm3903 = vmor %vm3901, %vm3902
    %v3904 = vsel %vm3903, %v3896, %v3900
    %v3905 = vand.u32 2147483647, %v3860
    %vm3906 = vcmp.eq.f32.partialorder %v3905, 8.507059e+37
    %v3907 = vand.u32 %v3860, 2147483648
    %v3908 = vor.u32 1.1754944e-38, %v3907
    %v3909 = vsel %vm3906, %v3908, %v3904
    %v3910 = vmul.f32 1.0, %v3909
    %v3911 = vrcp.pop %v3861
    %v3912 = vmul.f32 %v3861, %v3911
    %v3913 = vsub.f32 1.0, %v3912
    %v3914 = vmul.f32 %v3911, %v3913
    %v3915 = vadd.f32 %v3911, %v3914
    %vm3916 = vweird.f32 %v3861
    %vm3917 = vweird.f32 %v3911
    %vm3918 = vmor %vm3916, %vm3917
    %v3919 = vsel %vm3918, %v3911, %v3915
    %v3920 = vand.u32 2147483647, %v3861
    %vm3921 = vcmp.eq.f32.partialorder %v3920, 8.507059e+37
    %v3922 = vand.u32 %v3861, 2147483648
    %v3923 = vor.u32 1.1754944e-38, %v3922
    %v3924 = vsel %vm3921, %v3923, %v3919
    %v3925 = vmul.f32 1.0, %v3924
    %v3926 = vrcp.pop %v3862
    %v3927 = vmul.f32 %v3862, %v3926
    %v3928 = vsub.f32 1.0, %v3927
    %v3929 = vmul.f32 %v3926, %v3928
    %v3930 = vadd.f32 %v3926, %v3929
    %vm3931 = vweird.f32 %v3862
    %vm3932 = vweird.f32 %v3926
    %vm3933 = vmor %vm3931, %vm3932
    %v3934 = vsel %vm3933, %v3926, %v3930
    %v3935 = vand.u32 2147483647, %v3862
    %vm3936 = vcmp.eq.f32.partialorder %v3935, 8.507059e+37
    %v3937 = vand.u32 %v3862, 2147483648
    %v3938 = vor.u32 1.1754944e-38, %v3937
    %v3939 = vsel %vm3936, %v3938, %v3934
    %v3940 = vmul.f32 1.0, %v3939
    %v3941 = vrcp.pop %v3863
    %v3942 = vmul.f32 %v3863, %v3941
    %v3943 = vsub.f32 1.0, %v3942
    %v3944 = vmul.f32 %v3941, %v3943
    %v3945 = vadd.f32 %v3941, %v3944
    %vm3946 = vweird.f32 %v3863
    %vm3947 = vweird.f32 %v3941
    %vm3948 = vmor %vm3946, %vm3947
    %v3949 = vsel %vm3948, %v3941, %v3945
    %v3950 = vand.u32 2147483647, %v3863
    %vm3951 = vcmp.eq.f32.partialorder %v3950, 8.507059e+37
    %v3952 = vand.u32 %v3863, 2147483648
    %v3953 = vor.u32 1.1754944e-38, %v3952
    %v3954 = vsel %vm3951, %v3953, %v3949
    %v3955 = vmul.f32 1.0, %v3954
    %v3956 = vrcp.pop %v3864
    %v3957 = vmul.f32 %v3864, %v3956
    %v3958 = vsub.f32 1.0, %v3957
    %v3959 = vmul.f32 %v3956, %v3958
    %v3960 = vadd.f32 %v3956, %v3959
    %vm3961 = vweird.f32 %v3864
    %vm3962 = vweird.f32 %v3956
    %vm3963 = vmor %vm3961, %vm3962
    %v3964 = vsel %vm3963, %v3956, %v3960
    %v3965 = vand.u32 2147483647, %v3864
    %vm3966 = vcmp.eq.f32.partialorder %v3965, 8.507059e+37
    %v3967 = vand.u32 %v3864, 2147483648
    %v3968 = vor.u32 1.1754944e-38, %v3967
    %v3969 = vsel %vm3966, %v3968, %v3964
    %v3970 = vmul.f32 1.0, %v3969
    %v3971 = vrcp.pop %v3865
    %v3972 = vmul.f32 %v3865, %v3971
    %v3973 = vsub.f32 1.0, %v3972
    %v3974 = vmul.f32 %v3971, %v3973
    %v3975 = vadd.f32 %v3971, %v3974
    %vm3976 = vweird.f32 %v3865
    %vm3977 = vweird.f32 %v3971
    %vm3978 = vmor %vm3976, %vm3977
    %v3979 = vsel %vm3978, %v3971, %v3975
    %v3980 = vand.u32 2147483647, %v3865
    %vm3981 = vcmp.eq.f32.partialorder %v3980, 8.507059e+37
    %v3982 = vand.u32 %v3865, 2147483648
    %v3983 = vor.u32 1.1754944e-38, %v3982
    %v3984 = vsel %vm3981, %v3983, %v3979
    %v3985 = vmul.f32 1.0, %v3984
    %v3986 = vrot.slane %v3940, 4
    %v3987 = vsel %vm1875, %v3986, %v3880
    %v3988 = vrot.slane %v3880, 4
    %v3989 = vsel %vm1875, %v3940, %v3988
    %v3991 = vunpack.c.l.s4 1983009808
    %v3992 = vunpack.c.0.s8 %v3991
    %v3993 = vperm.slane %v3987, %v3992
    %v3995 = vunpack.c.l.s4 1983009808
    %v3996 = vunpack.c.0.s8 %v3995
    %v3997 = vperm.slane %v3989, %v3996
    %v3998 = vrot.slane %v3970, 4
    %v3999 = vsel %vm1875, %v3998, %v3910
    %v4000 = vrot.slane %v3910, 4
    %v4001 = vsel %vm1875, %v3970, %v4000
    %v4003 = vunpack.c.l.s4 1983009808
    %v4004 = vunpack.c.0.s8 %v4003
    %v4005 = vperm.slane %v3999, %v4004
    %v4007 = vunpack.c.l.s4 1983009808
    %v4008 = vunpack.c.0.s8 %v4007
    %v4009 = vperm.slane %v4001, %v4008
    %v4010 = vrot.slane %v4005, 4
    %v4011 = vsel %vm1875, %v4010, %v3993
    %v4012 = vrot.slane %v3993, 4
    %v4013 = vsel %vm1875, %v4005, %v4012
    %v4015 = vunpack.c.l.s4 1934713408
    %v4016 = vunpack.c.0.s8 %v4015
    %v4017 = vperm.slane %v4011, %v4016
    %v4019 = vunpack.c.l.s4 1934713408
    %v4020 = vunpack.c.0.s8 %v4019
    %v4021 = vperm.slane %v4013, %v4020
    %v4022 = vrot.slane %v4009, 4
    %v4023 = vsel %vm1875, %v4022, %v3997
    %v4024 = vrot.slane %v3997, 4
    %v4025 = vsel %vm1875, %v4009, %v4024
    %v4027 = vunpack.c.l.s4 1934713408
    %v4028 = vunpack.c.0.s8 %v4027
    %v4029 = vperm.slane %v4023, %v4028
    %v4031 = vunpack.c.l.s4 1934713408
    %v4032 = vunpack.c.0.s8 %v4031
    %v4033 = vperm.slane %v4025, %v4032
    %v4034 = vrot.slane %v4017, 4
    %v4035 = vsel %vm1875, 0.0, %v4034
    %v4036 = vrot.slane %v4021, 4
    %v4037 = vsel %vm1875, 0.0, %v4036
    %v4038 = vrot.slane %v4029, 4
    %v4039 = vsel %vm1875, 0.0, %v4038
    %v4040 = vrot.slane %v4033, 4
    %v4041 = vsel %vm1875, 0.0, %v4040
    %v4042 = vrot.slane %v3955, 4
    %v4043 = vsel %vm1875, %v4042, %v3895
    %v4044 = vrot.slane %v3895, 4
    %v4045 = vsel %vm1875, %v3955, %v4044
    %v4047 = vunpack.c.l.s4 1983009808
    %v4048 = vunpack.c.0.s8 %v4047
    %v4049 = vperm.slane %v4043, %v4048
    %v4051 = vunpack.c.l.s4 1983009808
    %v4052 = vunpack.c.0.s8 %v4051
    %v4053 = vperm.slane %v4045, %v4052
    %v4054 = vrot.slane %v3985, 4
    %v4055 = vsel %vm1875, %v4054, %v3925
    %v4056 = vrot.slane %v3925, 4
    %v4057 = vsel %vm1875, %v3985, %v4056
    %v4059 = vunpack.c.l.s4 1983009808
    %v4060 = vunpack.c.0.s8 %v4059
    %v4061 = vperm.slane %v4055, %v4060
    %v4063 = vunpack.c.l.s4 1983009808
    %v4064 = vunpack.c.0.s8 %v4063
    %v4065 = vperm.slane %v4057, %v4064
    %v4066 = vrot.slane %v4061, 4
    %v4067 = vsel %vm1875, %v4066, %v4049
    %v4068 = vrot.slane %v4049, 4
    %v4069 = vsel %vm1875, %v4061, %v4068
    %v4071 = vunpack.c.l.s4 1934713408
    %v4072 = vunpack.c.0.s8 %v4071
    %v4073 = vperm.slane %v4067, %v4072
    %v4075 = vunpack.c.l.s4 1934713408
    %v4076 = vunpack.c.0.s8 %v4075
    %v4077 = vperm.slane %v4069, %v4076
    %v4078 = vrot.slane %v4065, 4
    %v4079 = vsel %vm1875, %v4078, %v4053
    %v4080 = vrot.slane %v4053, 4
    %v4081 = vsel %vm1875, %v4065, %v4080
    %v4083 = vunpack.c.l.s4 1934713408
    %v4084 = vunpack.c.0.s8 %v4083
    %v4085 = vperm.slane %v4079, %v4084
    %v4087 = vunpack.c.l.s4 1934713408
    %v4088 = vunpack.c.0.s8 %v4087
    %v4089 = vperm.slane %v4081, %v4088
    %v4090 = vrot.slane %v4073, 4
    %v4091 = vsel %vm1875, 0.0, %v4090
    %v4092 = vrot.slane %v4077, 4
    %v4093 = vsel %vm1875, 0.0, %v4092
    %v4094 = vrot.slane %v4085, 4
    %v4095 = vsel %vm1875, 0.0, %v4094
    %v4096 = vrot.slane %v4089, 4
    %v4097 = vsel %vm1875, 0.0, %v4096
    %4100 = vrot.lane.b32.xlu0 %v4035, 8
    %v4101 = vpop.permute.xlu0 %4100
    %4102 = vrot.lane.b32.xlu0 %v4091, 8
    %v4103 = vpop.permute.xlu0 %4102
    %4108 = vrot.lane.b32.xlu0 %v4021, 16
    %v4109 = vpop.permute.xlu0 %4108
    %4110 = vrot.lane.b32.xlu0 %v4077, 16
    %v4111 = vpop.permute.xlu0 %4110
    %4116 = vrot.lane.b32.xlu0 %v4037, 24
    %v4117 = vpop.permute.xlu0 %4116
    %4118 = vrot.lane.b32.xlu0 %v4093, 24
    %v4119 = vpop.permute.xlu0 %4118
    %4124 = vrot.lane.b32.xlu0 %v4029, 32
    %v4125 = vpop.permute.xlu0 %4124
    %4126 = vrot.lane.b32.xlu0 %v4085, 32
    %v4127 = vpop.permute.xlu0 %4126
    %4132 = vrot.lane.b32.xlu0 %v4039, 40
    %v4133 = vpop.permute.xlu0 %4132
    %4134 = vrot.lane.b32.xlu0 %v4095, 40
    %v4135 = vpop.permute.xlu0 %4134
    %4140 = vrot.lane.b32.xlu0 %v4033, 48
    %v4141 = vpop.permute.xlu0 %4140
    %4142 = vrot.lane.b32.xlu0 %v4089, 48
    %v4143 = vpop.permute.xlu0 %4142
    %4148 = vrot.lane.b32.xlu0 %v4041, 56
    %v4149 = vpop.permute.xlu0 %4148
    %4150 = vrot.lane.b32.xlu0 %v4097, 56
    %v4151 = vpop.permute.xlu0 %4150
    %v4154 = vsel %vm253, %v4017, %v4101
    %v4155 = vsel %vm253, %v4073, %v4103
    %v4156 = vsel %vm829, %v4154, %v4109
    %v4157 = vsel %vm829, %v4155, %v4111
    %v4158 = vsel %vm832, %v4156, %v4117
    %v4159 = vsel %vm832, %v4157, %v4119
    %v4160 = vsel %vm130, %v4158, %v4125
    %v4161 = vsel %vm130, %v4159, %v4127
    %v4162 = vsel %vm2051, %v4160, %v4133
    %v4163 = vsel %vm2051, %v4161, %v4135
    %v4164 = vsel %vm2054, %v4162, %v4141
    %v4165 = vsel %vm2054, %v4163, %v4143
    %v4166 = vsel %vm2057, %v4164, %v4149
    %v4167 = vsel %vm2057, %v4165, %v4151
    %s4168 = scalar_lea.vmem %s21, 8
    %4169 = vst.msk [vmem:[%s4168] sm:$0xf] %vm2060, %v4166
    %4170 = vst.msk [vmem:[%s4168 + $0x4] sm:$0xf] %vm2060, %v4167
    %v4171 = vpack.c.bf16 %v3673, %v3672
    %s4172 = scalar_lea.vmem %s13, 16
    %v4173 = vld [vmem:[%s4172] sm:$0xf]
    %v4174 = vld [vmem:[%s4172 + $0x4] sm:$0xf]
    %v4175 = vld [vmem:[%s4172 + $0x8] sm:$0xf]
    %v4176 = vld [vmem:[%s4172 + $0xc] sm:$0xf]
    %s4177 = scalar_lea.vmem %s14, 1
    %v4178 = vld [vmem:[%s4177] sm:$0x1]
    %v4180 = vperm.slane %v4178, 0
    %v4186 = vunpack.c.l.b16 %v4173
    %v4187 = vunpack.c.l.b16 %v4174
    %v4188 = vunpack.c.l.b16 %v4175
    %v4189 = vunpack.c.l.b16 %v4176
    %v4190 = vpack.c.b16 %v4187, %v4186
    %v4191 = vpack.c.b16 %v4189, %v4188
    %v4195 = vsel %vm130, %v4171, 0
    %4197 = vmatpush.bf16.msra.mxu0 0
    %4198 = vmatpush.bf16.msra.mxu0 0
    %4199 = vmatpush.bf16.msra.mxu0 0
    %4200 = vmatpush.bf16.msra.mxu0 0
    %4201 = vmatpush.bf16.msra.mxu0 0
    %4202 = vmatpush.bf16.msra.mxu0 0
    %4203 = vmatpush.bf16.msra.mxu0 %v4191
    %4204 = vmatpush.bf16.msra.mxu0 %v4190
    %4205 = vmatmul.bf16.gmra.mxu0 %v4195
    %v4206 = vpop.f32.mrf.mxu0
    %v4207 = vadd.f32 %v4180, %v4206
    %v4208 = vpop.f32.mrf.mxu0
    %v4209 = vadd.f32 %v4180, %v4208
    %4210 = vdwg.mxu0
    %v4211 = vadd.f32 %v3064, %v4207
    %v4212 = vadd.f32 %v3065, %v4209
    %v4213 = vsel %vm130, %v4211, 0.0
    %4214 = vadd.xlane.f32.xlu0 %v4213
    %v4215 = vpop.xlane.xlu0 %4214
    %v4216 = vsel %vm130, %v4212, 0.0
    %4217 = vadd.xlane.f32.xlu0 %v4216
    %v4218 = vpop.xlane.xlu0 %4217
    %v4219 = vmul.f32 %v4215, %v887
    %v4220 = vmul.f32 %v4218, %v887
    %v4221 = vsub.f32 %v4211, %v4219
    %v4222 = vsub.f32 %v4212, %v4220
    %v4223 = vmul.f32 %v4221, %v4221
    %v4224 = vmul.f32 %v4222, %v4222
    %v4225 = vsel %vm130, %v4223, 0.0
    %4226 = vadd.xlane.f32.xlu0 %v4225
    %v4227 = vpop.xlane.xlu0 %4226
    %v4228 = vsel %vm130, %v4224, 0.0
    %4229 = vadd.xlane.f32.xlu0 %v4228
    %v4230 = vpop.xlane.xlu0 %4229
    %v4231 = vmul.f32 %v4227, %v887
    %v4232 = vmul.f32 %v4230, %v887
    %v4233 = vadd.f32 %v4231, 1e-05
    %v4234 = vadd.f32 %v4232, 1e-05
    %v4235 = vrsqrt.pop %v4233
    %v4236 = vmul.f32 %v4235, %v4233
    %v4237 = vmul.f32 %v4236, %v4235
    %v4238 = vmul.f32 0.5, %v4237
    %v4239 = vsub.f32 1.5, %v4238
    %v4240 = vmul.f32 %v4235, %v4239
    %vm4241 = vweird.f32 %v4233
    %vm4242 = vweird.f32 %v4235
    %vm4243 = vmor %vm4241, %vm4242
    %v4244 = vsel %vm4243, %v4235, %v4240
    %v4245 = vrsqrt.pop %v4234
    %v4246 = vmul.f32 %v4245, %v4234
    %v4247 = vmul.f32 %v4246, %v4245
    %v4248 = vmul.f32 0.5, %v4247
    %v4249 = vsub.f32 1.5, %v4248
    %v4250 = vmul.f32 %v4245, %v4249
    %vm4251 = vweird.f32 %v4234
    %vm4252 = vweird.f32 %v4245
    %vm4253 = vmor %vm4251, %vm4252
    %v4254 = vsel %vm4253, %v4245, %v4250
    %v4255 = vmul.f32 %v4221, %v4244
    %v4256 = vmul.f32 %v4222, %v4254
    %v4257 = vperm.slane %v2317, 2
    %v4258 = vmul.f32 %v4255, %v4257
    %v4259 = vmul.f32 %v4256, %v4257
    %v4260 = vperm.slane %v2317, 3
    %v4261 = vadd.f32 %v4258, %v4260
    %v4262 = vadd.f32 %v4259, %v4260
    %v4263 = vpack.c.bf16 %v4262, %v4261
    %s4264 = scalar_lea.vmem %s15, 16
    %v4265 = vld [vmem:[%s4264] sm:$0xf]
    %v4266 = vld [vmem:[%s4264 + $0x4] sm:$0xf]
    %v4267 = vld [vmem:[%s4264 + $0x8] sm:$0xf]
    %v4268 = vld [vmem:[%s4264 + $0xc] sm:$0xf]
    %s4269 = scalar_lea.vmem %s16, 1
    %v4270 = vld [vmem:[%s4269] sm:$0x1]
    %v4272 = vperm.slane %v4270, 0
    %v4278 = vunpack.c.l.b16 %v4265
    %v4279 = vunpack.c.l.b16 %v4266
    %v4280 = vunpack.c.l.b16 %v4267
    %v4281 = vunpack.c.l.b16 %v4268
    %v4282 = vpack.c.b16 %v4279, %v4278
    %v4283 = vpack.c.b16 %v4281, %v4280
    %v4287 = vsel %vm130, %v4263, 0
    %4289 = vmatpush.bf16.msra.mxu0 0
    %4290 = vmatpush.bf16.msra.mxu0 0
    %4291 = vmatpush.bf16.msra.mxu0 0
    %4292 = vmatpush.bf16.msra.mxu0 0
    %4293 = vmatpush.bf16.msra.mxu0 0
    %4294 = vmatpush.bf16.msra.mxu0 0
    %4295 = vmatpush.bf16.msra.mxu0 %v4283
    %4296 = vmatpush.bf16.msra.mxu0 %v4282
    %4297 = vmatmul.bf16.gmra.mxu0 %v4287
    %v4298 = vpop.f32.mrf.mxu0
    %v4299 = vadd.f32 %v4272, %v4298
    %v4300 = vpop.f32.mrf.mxu0
    %v4301 = vadd.f32 %v4272, %v4300
    %4302 = vdwg.mxu0
    %v4303 = vmul.f32 %v4299, %v4299
    %v4304 = vmul.f32 %v4301, %v4301
    %v4305 = vmul.f32 %v4299, %v4303
    %v4306 = vmul.f32 %v4301, %v4304
    %v4307 = vmul.f32 %v4305, 0.044715
    %v4308 = vmul.f32 %v4306, 0.044715
    %v4309 = vadd.f32 %v4299, %v4307
    %v4310 = vadd.f32 %v4301, %v4308
    %v4311 = vmul.f32 %v4309, 0.7978846
    %v4312 = vmul.f32 %v4310, 0.7978846
    %v4313 = vtanh.pop %v4311
    %v4314 = vtanh.pop %v4312
    %v4315 = vadd.f32 %v4313, 1.0
    %v4316 = vadd.f32 %v4314, 1.0
    %v4317 = vmul.f32 %v4315, 0.5
    %v4318 = vmul.f32 %v4316, 0.5
    %v4319 = vmul.f32 %v4299, %v4317
    %v4320 = vmul.f32 %v4301, %v4318
    %v4321 = vpack.c.bf16 %v4320, %v4319
    %s4322 = scalar_lea.vmem %s17, 32
    %v4323 = vld [vmem:[%s4322] sm:$0xf]
    %v4324 = vld [vmem:[%s4322 + $0x4] sm:$0xf]
    %v4325 = vld [vmem:[%s4322 + $0x8] sm:$0xf]
    %v4326 = vld [vmem:[%s4322 + $0xc] sm:$0xf]
    %v4327 = vld [vmem:[%s4322 + $0x10] sm:$0xf]
    %v4328 = vld [vmem:[%s4322 + $0x14] sm:$0xf]
    %v4329 = vld [vmem:[%s4322 + $0x18] sm:$0xf]
    %v4330 = vld [vmem:[%s4322 + $0x1c] sm:$0xf]
    %s4331 = scalar_lea.vmem %s18, 1
    %v4332 = vld [vmem:[%s4331] sm:$0x1]
    %v4334 = vperm.slane %v4332, 0
    %v4344 = vunpack.c.l.b16 %v4323
    %v4345 = vunpack.c.l.b16 %v4324
    %v4346 = vunpack.c.l.b16 %v4325
    %v4347 = vunpack.c.l.b16 %v4326
    %v4348 = vunpack.c.l.b16 %v4327
    %v4349 = vunpack.c.l.b16 %v4328
    %v4350 = vunpack.c.l.b16 %v4329
    %v4351 = vunpack.c.l.b16 %v4330
    %v4352 = vpack.c.b16 %v4345, %v4344
    %v4353 = vpack.c.b16 %v4347, %v4346
    %v4354 = vpack.c.b16 %v4349, %v4348
    %v4355 = vpack.c.b16 %v4351, %v4350
    %v4361 = vsel %vm2246, %v4321, 0
    %4363 = vmatpush.bf16.msra.mxu0 0
    %4364 = vmatpush.bf16.msra.mxu0 0
    %4365 = vmatpush.bf16.msra.mxu0 0
    %4366 = vmatpush.bf16.msra.mxu0 0
    %4367 = vmatpush.bf16.msra.mxu0 %v4355
    %4368 = vmatpush.bf16.msra.mxu0 %v4354
    %4369 = vmatpush.bf16.msra.mxu0 %v4353
    %4370 = vmatpush.bf16.msra.mxu0 %v4352
    %4371 = vmatmul.bf16.gmra.mxu0 %v4361
    %v4372 = vpop.f32.mrf.mxu0
    %v4373 = vadd.f32 %v4334, %v4372
    %v4374 = vpop.f32.mrf.mxu0
    %v4375 = vadd.f32 %v4334, %v4374
    %4376 = vdwg.mxu0
    %v4377 = vadd.f32 %v4261, %v4373
    %v4378 = vadd.f32 %v4262, %v4375
    %v4379 = vsel %vm130, %v4377, 0.0
    %4380 = vadd.xlane.f32.xlu0 %v4379
    %v4381 = vpop.xlane.xlu0 %4380
    %v4382 = vsel %vm130, %v4378, 0.0
    %4383 = vadd.xlane.f32.xlu0 %v4382
    %v4384 = vpop.xlane.xlu0 %4383
    %v4385 = vmul.f32 %v4381, %v887
    %v4386 = vmul.f32 %v4384, %v887
    %v4387 = vsub.f32 %v4377, %v4385
    %v4388 = vsub.f32 %v4378, %v4386
    %v4389 = vmul.f32 %v4387, %v4387
    %v4390 = vmul.f32 %v4388, %v4388
    %v4391 = vsel %vm130, %v4389, 0.0
    %4392 = vadd.xlane.f32.xlu0 %v4391
    %v4393 = vpop.xlane.xlu0 %4392
    %v4394 = vsel %vm130, %v4390, 0.0
    %4395 = vadd.xlane.f32.xlu0 %v4394
    %v4396 = vpop.xlane.xlu0 %4395
    %v4397 = vmul.f32 %v4393, %v887
    %v4398 = vmul.f32 %v4396, %v887
    %v4399 = vadd.f32 %v4397, 1e-05
    %v4400 = vadd.f32 %v4398, 1e-05
    %v4401 = vrsqrt.pop %v4399
    %v4402 = vmul.f32 %v4401, %v4399
    %v4403 = vmul.f32 %v4402, %v4401
    %v4404 = vmul.f32 0.5, %v4403
    %v4405 = vsub.f32 1.5, %v4404
    %v4406 = vmul.f32 %v4401, %v4405
    %vm4407 = vweird.f32 %v4399
    %vm4408 = vweird.f32 %v4401
    %vm4409 = vmor %vm4407, %vm4408
    %v4410 = vsel %vm4409, %v4401, %v4406
    %v4411 = vrsqrt.pop %v4400
    %v4412 = vmul.f32 %v4411, %v4400
    %v4413 = vmul.f32 %v4412, %v4411
    %v4414 = vmul.f32 0.5, %v4413
    %v4415 = vsub.f32 1.5, %v4414
    %v4416 = vmul.f32 %v4411, %v4415
    %vm4417 = vweird.f32 %v4400
    %vm4418 = vweird.f32 %v4411
    %vm4419 = vmor %vm4417, %vm4418
    %v4420 = vsel %vm4419, %v4411, %v4416
    %v4421 = vmul.f32 %v4387, %v4410
    %v4422 = vmul.f32 %v4388, %v4420
    %v4423 = vperm.slane %v2317, 4
    %v4424 = vmul.f32 %v4421, %v4423
    %v4425 = vmul.f32 %v4422, %v4423
    %v4426 = vperm.slane %v2317, 5
    %v4427 = vadd.f32 %v4424, %v4426
    %v4428 = vadd.f32 %v4425, %v4426
    %4429 = vst.msk [vmem:[#allocation2] sm:$0xff] %vm130, %v4427
    %4430 = vst.msk [vmem:[#allocation2 + $0x8] sm:$0xff] %vm130, %v4428
    // Predicated region
    $region82: #{_lambda_.1} parent=1 // pred_check
      _
    $region83: #{_lambda_.1} parent=1 // pred_check_branch
      %4432 = sbr.rel (0) target = $region85
    $region84: #{_lambda_.1} parent=1 // pred_region
      %4434 = vsyncadd [#allocation3], 0
      %s4435 = sshll.u32 [#allocation2], 4
      %s4436 = int_to_ptr.vmem [resolvable:$true] %s4435
      %s4437 = sshll.u32 %s20, 4
      %s4438 = int_to_ptr.hbm [resolvable:$true] %s4437
      %4443 = dma.vmem_to_hbm [thread:$0]  %s4436, 256, %s4438, [#allocation3], 128, 128, 8
    $region85: #{_lambda_.1} parent=1 // pred_fallthru
      _
    // Predicated region
    $region86: #{_lambda_.1} parent=1 // pred_check
      _
    $region87: #{_lambda_.1} parent=1 // pred_check_branch
      %4445 = sbr.rel (0) target = $region89
    $region88: #{_lambda_.1} parent=1 // pred_region
      _
    $region89: #{_lambda_.1} parent=1 // pred_fallthru
      _
    // Predicated region
    $region90: #{_lambda_.1} parent=1 // pred_check
      _
    $region91: #{_lambda_.1} parent=1 // pred_check_branch
      %4447 = sbr.rel (0) target = $region93
    $region92: #{_lambda_.1} parent=1 // pred_region
      %4449 = dma.done [#allocation3], 256
    $region93: #{_lambda_.1} parent=1 // pred_fallthru
      _
    // Predicated region
    $region94: #{_lambda_.1} parent=1 // pred_check
      _
    $region95: #{_lambda_.1} parent=1 // pred_check_branch
      %4451 = sbr.rel (0) target = $region97
    $region96: #{_lambda_.1} parent=1 // pred_region
      _
    $region97: #{_lambda_.1} parent=1 // pred_fallthru
      _
    %4452 = vsyncpa [#allocation3], 1

</llo_original>
